<compile_context>
chip_gen: v7x
topology: tpu7x:2x2x1
jax: 0.10.0
libtpu: 0.0.40
codegen_flags: <defaults>
</compile_context>

<pallas_src>
import functools

import jax
import jax.numpy as jnp
from jax.experimental import pallas as pl
from jax.experimental.pallas import tpu as pltpu

DEGREE = 4
IN_DIM = 28 * 28        # 784
HID_DIM = 256
OUT_DIM = 10
OUT_PAD = 128           # lane-dense output store; sliced back to 10 in the wrapper


def _round_up(x, m):
    return ((x + m - 1) // m) * m


def _cdiv(a, b):
    return -(-a // b)


def _pick_compute_dtype():
    """bf16 VPU/EUP path on v6e/v7x, f32 elsewhere (v5e has no bf16 VALU/EUP)."""
    try:
        kind = jax.devices()[0].device_kind.lower()
    except Exception:  # pragma: no cover
        return jnp.float32
    if ("v6" in kind) or ("v7" in kind) or ("7x" in kind):
        return jnp.bfloat16
    return jnp.float32


def _kan_layer(t, w_ref, b_row, in_dim):
    """One LegendreKANLayer given t = tanh(x).

    t     : (TB, in_dim) in compute dtype (== P_1).
    w_ref : (DEGREE*in_dim, O) bf16 VMEM ref, degrees 1..DEGREE stacked along K.
    b_row : (1, O) f32 — the P_0 contribution (column-sum of W[0]).
    Returns (TB, O) f32.
    """
    # Degree 1 (P_1 = t).
    acc = jnp.dot(t.astype(jnp.bfloat16), w_ref[0:in_dim, :],
                  preferred_element_type=jnp.float32)
    p_prev = jnp.ones_like(t)   # P_0
    p_cur = t                   # P_1
    for n in range(2, DEGREE + 1):
        # n*P_n = (2n-1)*t*P_{n-1} - (n-1)*P_{n-2}
        p_next = ((2.0 * n - 1.0) / n) * t * p_cur - ((n - 1.0) / n) * p_prev
        acc += jnp.dot(p_next.astype(jnp.bfloat16),
                       w_ref[(n - 1) * in_dim:n * in_dim, :],
                       preferred_element_type=jnp.float32)
        p_prev, p_cur = p_cur, p_next
    return acc + b_row


def _fused_net_kernel(x_ref, w1_ref, b1_ref, w3_ref, b3_ref, o_ref, *, compute_dtype):
    # x_ref : (TB, 784) bf16          w1_ref: (4*784, 256) bf16
    # b1_ref: (1, 256) f32            w3_ref: (4*256, 128) bf16
    # b3_ref: (1, 128) f32            o_ref : (TB, 128) f32

    # ---- layer 1 ----
    t1 = jnp.tanh(x_ref[...].astype(compute_dtype))
    h = _kan_layer(t1, w1_ref, b1_ref[...], IN_DIM)          # (TB, 256) f32

    # ---- layer 2 (hidden activation stays in VMEM) ----
    t2 = jnp.tanh(h.astype(compute_dtype))
    y = _kan_layer(t2, w3_ref, b3_ref[...], HID_DIM)          # (TB, 128) f32

    o_ref[...] = y.astype(o_ref.dtype)


def init_params(key):
    """Matches torch nn.init.normal_(coeffs, mean=0, std=1/(input_dim*(degree+1)))."""
    k1, k2 = jax.random.split(key)
    w1 = jax.random.normal(k1, (DEGREE + 1, IN_DIM, HID_DIM), jnp.float32) \
        * (1.0 / (IN_DIM * (DEGREE + 1)))
    w3 = jax.random.normal(k2, (DEGREE + 1, HID_DIM, OUT_DIM), jnp.float32) \
        * (1.0 / (HID_DIM * (DEGREE + 1)))
    return w1, w3


def prepare_params(w1, w3):
    """Pack raw (deg+1, I, O) coefficients into kernel operands (done once)."""
    # P_0 contribution == column-sum of W[0]  (a bias).
    b1 = w1[0].sum(axis=0)[None, :].astype(jnp.float32)                       # (1, 256)
    b3 = jnp.zeros((1, OUT_PAD), jnp.float32).at[0, :OUT_DIM].set(w3[0].sum(axis=0))

    # Degrees 1..DEG stacked along K, cast to bf16 (no feature padding needed).
    w1_wide = w1[1:].reshape(DEGREE * IN_DIM, HID_DIM).astype(jnp.bfloat16)   # (3136, 256)

    w3p = jnp.zeros((DEGREE, HID_DIM, OUT_PAD), jnp.float32).at[:, :, :OUT_DIM].set(w3[1:])
    w3_wide = w3p.reshape(DEGREE * HID_DIM, OUT_PAD).astype(jnp.bfloat16)     # (1024, 128)
    return w1_wide, b1, w3_wide, b3


@functools.partial(jax.jit, static_argnames=("tb", "compute_dtype"))
def _net_forward_impl(x, w1_wide, b1, w3_wide, b3, *, tb, compute_dtype):
    xf = x.reshape(-1, IN_DIM).astype(jnp.bfloat16)      # == torch x.view(-1, 784)
    B = xf.shape[0]

    # Balanced batch tiling: round_up(cdiv(B, n_tiles), 8), and >=2 grid steps
    # whenever B >= 16 so both TensorCores on v7x (and v4 megacore) stay busy.
    num_tiles = max(1, _cdiv(B, tb))
    if B >= 16:
        num_tiles = max(num_tiles, 2)
    tb_eff = _round_up(_cdiv(B, num_tiles), 8)
    b_pad = tb_eff * num_tiles
    if b_pad != B:
        xf = jnp.pad(xf, ((0, b_pad - B), (0, 0)))       # padded rows: x = 0 (finite)
    grid = (num_tiles,)

    flops = 2 * b_pad * DEGREE * (IN_DIM * HID_DIM + HID_DIM * OUT_PAD)
    transcendentals = b_pad * (IN_DIM + HID_DIM)
    bytes_accessed = (xf.size * 2 + w1_wide.size * 2 + w3_wide.size * 2
                      + b1.size * 4 + b3.size * 4 + b_pad * OUT_PAD * 4)

    out = pl.pallas_call(
        functools.partial(_fused_net_kernel, compute_dtype=compute_dtype),
        out_shape=jax.ShapeDtypeStruct((b_pad, OUT_PAD), jnp.float32),
        grid_spec=pltpu.PrefetchScalarGridSpec(
            num_scalar_prefetch=0,
            grid=grid,
            in_specs=[
                pl.BlockSpec((tb_eff, IN_DIM), lambda b: (b, 0)),             # x tile
                pl.BlockSpec((DEGREE * IN_DIM, HID_DIM), lambda b: (0, 0)),   # W1 (resident)
                pl.BlockSpec((1, HID_DIM), lambda b: (0, 0)),                 # b1
                pl.BlockSpec((DEGREE * HID_DIM, OUT_PAD), lambda b: (0, 0)),  # W3 (resident)
                pl.BlockSpec((1, OUT_PAD), lambda b: (0, 0)),                 # b3
            ],
            out_specs=pl.BlockSpec((tb_eff, OUT_PAD), lambda b: (b, 0)),
        ),
        compiler_params=pltpu.CompilerParams(
            dimension_semantics=("parallel",),
            vmem_limit_bytes=48 * 1024 * 1024,
        ),
        cost_estimate=pl.CostEstimate(
            flops=flops,
            transcendentals=transcendentals,
            bytes_accessed=bytes_accessed,
        ),
    )(xf, w1_wide, b1, w3_wide, b3)

    return out[:B, :OUT_DIM]


def net_forward(x, packed, *, tb=1024, compute_dtype=None):
    """x: (B, 1, 28, 28) or (B, 784) -> (B, 10). `packed` = prepare_params(w1, w3)."""
    if compute_dtype is None:
        compute_dtype = _pick_compute_dtype()
    w1_wide, b1, w3_wide, b3 = packed
    return _net_forward_impl(x, w1_wide, b1, w3_wide, b3,
                             tb=tb, compute_dtype=compute_dtype)


def _layer_ref(x, w):
    """Pure-JAX f32 reference of one LegendreKANLayer (correctness check)."""
    x = jnp.tanh(x)
    polys = [jnp.ones_like(x), x]
    for n in range(2, DEGREE + 1):
        polys.append(((2.0 * n - 1.0) / n) * x * polys[-1]
                     - ((n - 1.0) / n) * polys[-2])
    p = jnp.stack(polys, axis=0)                    # (deg+1, B, I)
    return jnp.einsum("dbi,dio->bo", p, w)


if __name__ == "__main__":
    key = jax.random.PRNGKey(0)
    kx, kp = jax.random.split(key)

    # Small MNIST-like batch: NCHW (B=2, C=1, H=28, W=28)
    x = jax.random.normal(kx, (2, 1, 28, 28), jnp.float32)
    w1, w3 = init_params(kp)
    packed = prepare_params(w1, w3)

    y = net_forward(x, packed)
    y = jax.block_until_ready(y)

    # Sanity check vs. pure-f32 reference (kernel uses bf16 input + bf16 MXU
    # operands with f32 accumulation; on v6e/v7x the tanh/recurrence also run
    # in bf16, so the tolerance is slightly looser than pure f32).
    y_ref = _layer_ref(_layer_ref(x.reshape(-1, IN_DIM), w1), w3)
    assert y.shape == (2, OUT_DIM)
    assert jnp.allclose(y, y_ref, atol=3e-3, rtol=3e-2), "mismatch vs reference"

    print("KERNEL_OK")
</pallas_src>

<mosaic_0001>
module attributes {stable_mosaic.version = 11 : i64} {
  func.func @_fused_net_kernel(%arg0: i32, %arg1: memref<8x784xbf16, #tpu.memory_space<vmem>>, %arg2: memref<3136x256xbf16, #tpu.memory_space<vmem>>, %arg3: memref<1x256xf32, #tpu.memory_space<vmem>>, %arg4: memref<1024x128xbf16, #tpu.memory_space<vmem>>, %arg5: memref<1x128xf32, #tpu.memory_space<vmem>>, %arg6: memref<8x128xf32, #tpu.memory_space<vmem>>) attributes {dimension_semantics = [#tpu.dimension_semantics<parallel>], iteration_bounds = array<i64: 1>, scalar_prefetch = 0 : i64, scratch_operands = 0 : i64, tpu.core_type = #tpu.core_type<tc>, window_params = [{transform_indices = @transform_0, window_bounds = array<i64: 8, 784>}, {pipeline_mode = #tpu.pipeline_mode<synchronous>, transform_indices = @transform_1, window_bounds = array<i64: 3136, 256>}, {pipeline_mode = #tpu.pipeline_mode<synchronous>, transform_indices = @transform_2, window_bounds = array<i64: 1, 256>}, {pipeline_mode = #tpu.pipeline_mode<synchronous>, transform_indices = @transform_3, window_bounds = array<i64: 1024, 128>}, {pipeline_mode = #tpu.pipeline_mode<synchronous>, transform_indices = @transform_4, window_bounds = array<i64: 1, 128>}, {transform_indices = @transform_5, window_bounds = array<i64: 8, 128>}]} {
    %c0 = arith.constant 0 : index
    %c0_0 = arith.constant 0 : index
    %0 = vector.load %arg1[%c0, %c0_0] : memref<8x784xbf16, #tpu.memory_space<vmem>>, vector<8x784xbf16>
    %1 = arith.extf %0 : vector<8x784xbf16> to vector<8x784xf32>
    %2 = math.tanh %1 : vector<8x784xf32>
    %c0_1 = arith.constant 0 : index
    %c0_2 = arith.constant 0 : index
    %3 = vector.load %arg3[%c0_1, %c0_2] : memref<1x256xf32, #tpu.memory_space<vmem>>, vector<1x256xf32>
    %4 = arith.truncf %2 : vector<8x784xf32> to vector<8x784xbf16>
    %c0_3 = arith.constant 0 : index
    %c0_4 = arith.constant 0 : index
    %5 = vector.load %arg2[%c0_3, %c0_4] : memref<3136x256xbf16, #tpu.memory_space<vmem>>, vector<784x256xbf16>
    %cst = arith.constant dense<0.000000e+00> : vector<8x256xf32>
    %6 = tpu.matmul %4, %5, %cst {dimension_numbers = #tpu.dot_dimension_numbers<[1], [0], [0], [1], [0, 0, 1, 1], [], []>} : vector<8x784xbf16>, vector<784x256xbf16>, vector<8x256xf32> -> vector<8x256xf32>
    %cst_5 = arith.constant 1.000000e+00 : f32
    %7 = vector.broadcast %cst_5 : f32 to vector<8x784xf32>
    %cst_6 = arith.constant 1.500000e+00 : f32
    %8 = vector.broadcast %cst_6 : f32 to vector<8x784xf32>
    %9 = arith.mulf %8, %2 : vector<8x784xf32>
    %10 = arith.mulf %9, %2 : vector<8x784xf32>
    %cst_7 = arith.constant 5.000000e-01 : f32
    %11 = vector.broadcast %cst_7 : f32 to vector<8x784xf32>
    %12 = arith.mulf %11, %7 : vector<8x784xf32>
    %13 = arith.subf %10, %12 : vector<8x784xf32>
    %14 = arith.truncf %13 : vector<8x784xf32> to vector<8x784xbf16>
    %c784 = arith.constant 784 : index
    %c0_8 = arith.constant 0 : index
    %15 = vector.load %arg2[%c784, %c0_8] : memref<3136x256xbf16, #tpu.memory_space<vmem>>, vector<784x256xbf16>
    %cst_9 = arith.constant dense<0.000000e+00> : vector<8x256xf32>
    %16 = tpu.matmul %14, %15, %cst_9 {dimension_numbers = #tpu.dot_dimension_numbers<[1], [0], [0], [1], [0, 0, 1, 1], [], []>} : vector<8x784xbf16>, vector<784x256xbf16>, vector<8x256xf32> -> vector<8x256xf32>
    %17 = arith.addf %6, %16 : vector<8x256xf32>
    %cst_10 = arith.constant 1.66666663 : f32
    %18 = vector.broadcast %cst_10 : f32 to vector<8x784xf32>
    %19 = arith.mulf %18, %2 : vector<8x784xf32>
    %20 = arith.mulf %19, %13 : vector<8x784xf32>
    %cst_11 = arith.constant 0.666666686 : f32
    %21 = vector.broadcast %cst_11 : f32 to vector<8x784xf32>
    %22 = arith.mulf %21, %2 : vector<8x784xf32>
    %23 = arith.subf %20, %22 : vector<8x784xf32>
    %24 = arith.truncf %23 : vector<8x784xf32> to vector<8x784xbf16>
    %c1568 = arith.constant 1568 : index
    %c0_12 = arith.constant 0 : index
    %25 = vector.load %arg2[%c1568, %c0_12] : memref<3136x256xbf16, #tpu.memory_space<vmem>>, vector<784x256xbf16>
    %cst_13 = arith.constant dense<0.000000e+00> : vector<8x256xf32>
    %26 = tpu.matmul %24, %25, %cst_13 {dimension_numbers = #tpu.dot_dimension_numbers<[1], [0], [0], [1], [0, 0, 1, 1], [], []>} : vector<8x784xbf16>, vector<784x256xbf16>, vector<8x256xf32> -> vector<8x256xf32>
    %27 = arith.addf %17, %26 : vector<8x256xf32>
    %cst_14 = arith.constant 1.750000e+00 : f32
    %28 = vector.broadcast %cst_14 : f32 to vector<8x784xf32>
    %29 = arith.mulf %28, %2 : vector<8x784xf32>
    %30 = arith.mulf %29, %23 : vector<8x784xf32>
    %cst_15 = arith.constant 7.500000e-01 : f32
    %31 = vector.broadcast %cst_15 : f32 to vector<8x784xf32>
    %32 = arith.mulf %31, %13 : vector<8x784xf32>
    %33 = arith.subf %30, %32 : vector<8x784xf32>
    %34 = arith.truncf %33 : vector<8x784xf32> to vector<8x784xbf16>
    %c2352 = arith.constant 2352 : index
    %c0_16 = arith.constant 0 : index
    %35 = vector.load %arg2[%c2352, %c0_16] : memref<3136x256xbf16, #tpu.memory_space<vmem>>, vector<784x256xbf16>
    %cst_17 = arith.constant dense<0.000000e+00> : vector<8x256xf32>
    %36 = tpu.matmul %34, %35, %cst_17 {dimension_numbers = #tpu.dot_dimension_numbers<[1], [0], [0], [1], [0, 0, 1, 1], [], []>} : vector<8x784xbf16>, vector<784x256xbf16>, vector<8x256xf32> -> vector<8x256xf32>
    %37 = arith.addf %27, %36 : vector<8x256xf32>
    %38 = vector.broadcast %3 : vector<1x256xf32> to vector<8x256xf32>
    %39 = arith.addf %37, %38 : vector<8x256xf32>
    %40 = math.tanh %39 : vector<8x256xf32>
    %c0_18 = arith.constant 0 : index
    %c0_19 = arith.constant 0 : index
    %41 = vector.load %arg5[%c0_18, %c0_19] : memref<1x128xf32, #tpu.memory_space<vmem>>, vector<1x128xf32>
    %42 = arith.truncf %40 : vector<8x256xf32> to vector<8x256xbf16>
    %c0_20 = arith.constant 0 : index
    %c0_21 = arith.constant 0 : index
    %43 = vector.load %arg4[%c0_20, %c0_21] : memref<1024x128xbf16, #tpu.memory_space<vmem>>, vector<256x128xbf16>
    %cst_22 = arith.constant dense<0.000000e+00> : vector<8x128xf32>
    %44 = tpu.matmul %42, %43, %cst_22 {dimension_numbers = #tpu.dot_dimension_numbers<[1], [0], [0], [1], [0, 0, 1, 1], [], []>} : vector<8x256xbf16>, vector<256x128xbf16>, vector<8x128xf32> -> vector<8x128xf32>
    %cst_23 = arith.constant 1.000000e+00 : f32
    %45 = vector.broadcast %cst_23 : f32 to vector<8x256xf32>
    %cst_24 = arith.constant 1.500000e+00 : f32
    %46 = vector.broadcast %cst_24 : f32 to vector<8x256xf32>
    %47 = arith.mulf %46, %40 : vector<8x256xf32>
    %48 = arith.mulf %47, %40 : vector<8x256xf32>
    %cst_25 = arith.constant 5.000000e-01 : f32
    %49 = vector.broadcast %cst_25 : f32 to vector<8x256xf32>
    %50 = arith.mulf %49, %45 : vector<8x256xf32>
    %51 = arith.subf %48, %50 : vector<8x256xf32>
    %52 = arith.truncf %51 : vector<8x256xf32> to vector<8x256xbf16>
    %c256 = arith.constant 256 : index
    %c0_26 = arith.constant 0 : index
    %53 = vector.load %arg4[%c256, %c0_26] : memref<1024x128xbf16, #tpu.memory_space<vmem>>, vector<256x128xbf16>
    %cst_27 = arith.constant dense<0.000000e+00> : vector<8x128xf32>
    %54 = tpu.matmul %52, %53, %cst_27 {dimension_numbers = #tpu.dot_dimension_numbers<[1], [0], [0], [1], [0, 0, 1, 1], [], []>} : vector<8x256xbf16>, vector<256x128xbf16>, vector<8x128xf32> -> vector<8x128xf32>
    %55 = arith.addf %44, %54 : vector<8x128xf32>
    %cst_28 = arith.constant 1.66666663 : f32
    %56 = vector.broadcast %cst_28 : f32 to vector<8x256xf32>
    %57 = arith.mulf %56, %40 : vector<8x256xf32>
    %58 = arith.mulf %57, %51 : vector<8x256xf32>
    %cst_29 = arith.constant 0.666666686 : f32
    %59 = vector.broadcast %cst_29 : f32 to vector<8x256xf32>
    %60 = arith.mulf %59, %40 : vector<8x256xf32>
    %61 = arith.subf %58, %60 : vector<8x256xf32>
    %62 = arith.truncf %61 : vector<8x256xf32> to vector<8x256xbf16>
    %c512 = arith.constant 512 : index
    %c0_30 = arith.constant 0 : index
    %63 = vector.load %arg4[%c512, %c0_30] : memref<1024x128xbf16, #tpu.memory_space<vmem>>, vector<256x128xbf16>
    %cst_31 = arith.constant dense<0.000000e+00> : vector<8x128xf32>
    %64 = tpu.matmul %62, %63, %cst_31 {dimension_numbers = #tpu.dot_dimension_numbers<[1], [0], [0], [1], [0, 0, 1, 1], [], []>} : vector<8x256xbf16>, vector<256x128xbf16>, vector<8x128xf32> -> vector<8x128xf32>
    %65 = arith.addf %55, %64 : vector<8x128xf32>
    %cst_32 = arith.constant 1.750000e+00 : f32
    %66 = vector.broadcast %cst_32 : f32 to vector<8x256xf32>
    %67 = arith.mulf %66, %40 : vector<8x256xf32>
    %68 = arith.mulf %67, %61 : vector<8x256xf32>
    %cst_33 = arith.constant 7.500000e-01 : f32
    %69 = vector.broadcast %cst_33 : f32 to vector<8x256xf32>
    %70 = arith.mulf %69, %51 : vector<8x256xf32>
    %71 = arith.subf %68, %70 : vector<8x256xf32>
    %72 = arith.truncf %71 : vector<8x256xf32> to vector<8x256xbf16>
    %c768 = arith.constant 768 : index
    %c0_34 = arith.constant 0 : index
    %73 = vector.load %arg4[%c768, %c0_34] : memref<1024x128xbf16, #tpu.memory_space<vmem>>, vector<256x128xbf16>
    %cst_35 = arith.constant dense<0.000000e+00> : vector<8x128xf32>
    %74 = tpu.matmul %72, %73, %cst_35 {dimension_numbers = #tpu.dot_dimension_numbers<[1], [0], [0], [1], [0, 0, 1, 1], [], []>} : vector<8x256xbf16>, vector<256x128xbf16>, vector<8x128xf32> -> vector<8x128xf32>
    %75 = arith.addf %65, %74 : vector<8x128xf32>
    %76 = vector.broadcast %41 : vector<1x128xf32> to vector<8x128xf32>
    %77 = arith.addf %75, %76 : vector<8x128xf32>
    %c0_36 = arith.constant 0 : index
    %c0_37 = arith.constant 0 : index
    %78 = vector.load %arg6[%c0_36, %c0_37] : memref<8x128xf32, #tpu.memory_space<vmem>>, vector<8x128xf32>
    tpu.vector_store %arg6[%c0_36, %c0_37], %77 {strides = array<i32>} : memref<8x128xf32, #tpu.memory_space<vmem>>, vector<8x128xf32>,
    return
  }
  func.func @transform_0(%arg0: i32) -> (i32, i32) {
    %c0_i32 = arith.constant 0 : i32
    %c0_i32_0 = arith.constant 0 : i32
    return %arg0, %c0_i32 : i32, i32
  }
  func.func @transform_1(%arg0: i32) -> (i32, i32) {
    %c0_i32 = arith.constant 0 : i32
    %c0_i32_0 = arith.constant 0 : i32
    %c0_i32_1 = arith.constant 0 : i32
    return %c0_i32, %c0_i32_0 : i32, i32
  }
  func.func @transform_2(%arg0: i32) -> (i32, i32) {
    %c0_i32 = arith.constant 0 : i32
    %c0_i32_0 = arith.constant 0 : i32
    %c0_i32_1 = arith.constant 0 : i32
    return %c0_i32, %c0_i32_0 : i32, i32
  }
  func.func @transform_3(%arg0: i32) -> (i32, i32) {
    %c0_i32 = arith.constant 0 : i32
    %c0_i32_0 = arith.constant 0 : i32
    %c0_i32_1 = arith.constant 0 : i32
    return %c0_i32, %c0_i32_0 : i32, i32
  }
  func.func @transform_4(%arg0: i32) -> (i32, i32) {
    %c0_i32 = arith.constant 0 : i32
    %c0_i32_0 = arith.constant 0 : i32
    %c0_i32_1 = arith.constant 0 : i32
    return %c0_i32, %c0_i32_0 : i32, i32
  }
  func.func @transform_5(%arg0: i32) -> (i32, i32) {
    %c0_i32 = arith.constant 0 : i32
    %c0_i32_0 = arith.constant 0 : i32
    return %arg0, %c0_i32 : i32, i32
  }
}

</mosaic_0001>

<llo_original>
// kernel: _net_forward_impl.1
$region0: #{_net_forward_impl.1}
  #allocation0 [shape = 'u32[]', space=smem, size = 0x4, offset = 0x4, fixed_abs, tag = 'smem constant byte address 0x4 - core index']
  #allocation1 [shape = 'u32[144,128]{1,0:T(1,128)}', space=vmem, size = 0x12000, scoped, tag = 'internal scratch']
  %s0 = inlined_call_operand.vmem [shape: bf16[8,784], index: 0, kind: input, shape index: {}]
  %s1 = inlined_call_operand.hbm [shape: bf16[3136,256], index: 1, kind: input, shape index: {}]
  %s2 = inlined_call_operand.hbm [shape: f32[1,256], index: 2, kind: input, shape index: {}]
  %s3 = inlined_call_operand.hbm [shape: bf16[1024,128], index: 3, kind: input, shape index: {}]
  %s4 = inlined_call_operand.hbm [shape: f32[1,128], index: 4, kind: input, shape index: {}]
  %s5 = inlined_call_operand.vmem [shape: f32[8,128], index: 5, kind: output, shape index: {}]
  %s6 = sld [smem:[#allocation0]]
  $region46: #{_net_forward_impl.1} parent=0
    _
  %s8 = ssub.s32 1, %s6
  %s9 = scalar_select 0, %s8, %s6
  $region1: #{_net_forward_impl.1} parent=0
    #allocation2 [shape = 'u8[1605632]{0}', space=vmem, size = 0x188000, scoped, tag = 'input window, operand 1, single buffered']
    #allocation3 [shape = 's32[1]{0}', space=sflag, size = 0x4, scoped, tag = 'scoped memory for _net_forward_impl.1']
    #allocation4 [shape = 'u8[1024]{0}', space=vmem, size = 0x400, scoped, tag = 'input window, operand 2, single buffered']
    #allocation5 [shape = 's32[1]{0}', space=sflag, size = 0x4, scoped, tag = 'scoped memory for _net_forward_impl.1']
    #allocation6 [shape = 'u8[262144]{0}', space=vmem, size = 0x40000, scoped, tag = 'input window, operand 3, single buffered']
    #allocation7 [shape = 'u8[512]{0}', space=vmem, size = 0x400, scoped, tag = 'input window, operand 4, single buffered']
    #allocation8 [shape = 's32[1]{0}', space=sflag, size = 0x4, scoped, tag = 'scoped memory for _net_forward_impl.1']
    %10 = vsyncpa [#allocation3], 0
    %11 = vsyncpa [#allocation5], 0
    %12 = vsyncpa [#allocation8], 0
    // Predicated region
    $region2: #{_net_forward_impl.1} parent=1 // pred_check
      _
    $region3: #{_net_forward_impl.1} parent=1 // pred_check_branch
      %14 = sbr.rel (0) target = $region5
    $region4: #{_net_forward_impl.1} parent=1 // pred_region
      _
    $region5: #{_net_forward_impl.1} parent=1 // pred_fallthru
      _
    // Predicated region
    $region6: #{_net_forward_impl.1} parent=1 // pred_check
      _
    $region7: #{_net_forward_impl.1} parent=1 // pred_check_branch
      %16 = sbr.rel (0) target = $region9
    $region8: #{_net_forward_impl.1} parent=1 // pred_region
      %s18 = ssub.s32 50176, 50176
      %19 = vsyncadd [#allocation3], %s18
      %s20 = sshll.u32 [#allocation2], 4
      %s21 = int_to_ptr.vmem [resolvable:$true] %s20
      %26 = dma.hbm_to_vmem [thread:$0]  %s1, 50176, %s21, [#allocation3], 128, 128, 8
    $region9: #{_net_forward_impl.1} parent=1 // pred_fallthru
      _
    // Predicated region
    $region10: #{_net_forward_impl.1} parent=1 // pred_check
      _
    $region11: #{_net_forward_impl.1} parent=1 // pred_check_branch
      %28 = sbr.rel (0) target = $region13
    $region12: #{_net_forward_impl.1} parent=1 // pred_region
      %s30 = ssub.s32 32, 32
      %31 = vsyncadd [#allocation5], %s30
      %s33 = sshll.u32 [#allocation4], 4
      %s34 = int_to_ptr.vmem [resolvable:$true] %s33
      %36 = dma.hbm_to_vmem [thread:$0]  %s2, 32, %s34, [#allocation5]
    $region13: #{_net_forward_impl.1} parent=1 // pred_fallthru
      _
    // Predicated region
    $region14: #{_net_forward_impl.1} parent=1 // pred_check
      _
    $region15: #{_net_forward_impl.1} parent=1 // pred_check_branch
      %38 = sbr.rel (0) target = $region17
    $region16: #{_net_forward_impl.1} parent=1 // pred_region
      %s40 = ssub.s32 8192, 8192
      %41 = vsyncadd [#allocation5], %s40
      %s42 = sshll.u32 [#allocation6], 4
      %s43 = int_to_ptr.vmem [resolvable:$true] %s42
      %48 = dma.hbm_to_vmem [thread:$0]  %s3, 8192, %s43, [#allocation5], 64, 64, 4
    $region17: #{_net_forward_impl.1} parent=1 // pred_fallthru
      _
    // Predicated region
    $region18: #{_net_forward_impl.1} parent=1 // pred_check
      _
    $region19: #{_net_forward_impl.1} parent=1 // pred_check_branch
      %50 = sbr.rel (0) target = $region21
    $region20: #{_net_forward_impl.1} parent=1 // pred_region
      %s52 = ssub.s32 16, 16
      %53 = vsyncadd [#allocation8], %s52
      %s55 = sshll.u32 [#allocation7], 4
      %s56 = int_to_ptr.vmem [resolvable:$true] %s55
      %58 = dma.hbm_to_vmem [thread:$0]  %s4, 16, %s56, [#allocation8]
    $region21: #{_net_forward_impl.1} parent=1 // pred_fallthru
      _
    // Predicated region
    $region22: #{_net_forward_impl.1} parent=1 // pred_check
      _
    $region23: #{_net_forward_impl.1} parent=1 // pred_check_branch
      %60 = sbr.rel (0) target = $region25
    $region24: #{_net_forward_impl.1} parent=1 // pred_region
      %61 = dma.done [#allocation3], 50176
    $region25: #{_net_forward_impl.1} parent=1 // pred_fallthru
      _
    // Predicated region
    $region26: #{_net_forward_impl.1} parent=1 // pred_check
      _
    $region27: #{_net_forward_impl.1} parent=1 // pred_check_branch
      %63 = sbr.rel (0) target = $region29
    $region28: #{_net_forward_impl.1} parent=1 // pred_region
      %64 = dma.done [#allocation5], 32
    $region29: #{_net_forward_impl.1} parent=1 // pred_fallthru
      _
    // Predicated region
    $region30: #{_net_forward_impl.1} parent=1 // pred_check
      _
    $region31: #{_net_forward_impl.1} parent=1 // pred_check_branch
      %66 = sbr.rel (0) target = $region33
    $region32: #{_net_forward_impl.1} parent=1 // pred_region
      %67 = dma.done [#allocation5], 8192
    $region33: #{_net_forward_impl.1} parent=1 // pred_fallthru
      _
    // Predicated region
    $region34: #{_net_forward_impl.1} parent=1 // pred_check
      _
    $region35: #{_net_forward_impl.1} parent=1 // pred_check_branch
      %69 = sbr.rel (0) target = $region37
    $region36: #{_net_forward_impl.1} parent=1 // pred_region
      %70 = dma.done [#allocation8], 16
    $region37: #{_net_forward_impl.1} parent=1 // pred_fallthru
      _
    %v72 = vld [vmem:[%s0] sm:$0xff]
    %v73 = vld [vmem:[%s0 + $0x8] sm:$0xff]
    %v74 = vld [vmem:[%s0 + $0x10] sm:$0xff]
    %v75 = vld [vmem:[%s0 + $0x18] sm:$0xf]
    %v76 = vunpack.c.l.bf16 %v72
    %v77 = vunpack.c.h.bf16 %v72
    %v78 = vunpack.c.l.bf16 %v73
    %v79 = vunpack.c.h.bf16 %v73
    %v80 = vunpack.c.l.bf16 %v74
    %v81 = vunpack.c.h.bf16 %v74
    %v82 = vunpack.c.l.bf16 %v75
    %v83 = vtanh.pop %v76
    %v84 = vtanh.pop %v77
    %v85 = vtanh.pop %v78
    %v86 = vtanh.pop %v79
    %v87 = vtanh.pop %v80
    %v88 = vtanh.pop %v81
    %v89 = vtanh.pop %v82
    %v90 = vld [vmem:[#allocation4] sm:$0x3]
    %v91 = vpack.c.bf16 %v83, %v83
    %v92 = vpack.c.bf16 %v84, %v84
    %v93 = vpack.c.bf16 %v85, %v85
    %v94 = vpack.c.bf16 %v86, %v86
    %v95 = vpack.c.bf16 %v87, %v87
    %v96 = vpack.c.bf16 %v88, %v88
    %v97 = vpack.c.bf16 %v89, %v89
    %v98 = vld [vmem:[#allocation2] sm:$0xff]
    %v99 = vld [vmem:[#allocation2 + $0x8] sm:$0xff]
    %v100 = vld [vmem:[#allocation2 + $0x10] sm:$0xff]
    %v101 = vld [vmem:[#allocation2 + $0x18] sm:$0xff]
    %v102 = vld [vmem:[#allocation2 + $0x20] sm:$0xff]
    %v103 = vld [vmem:[#allocation2 + $0x28] sm:$0xff]
    %v104 = vld [vmem:[#allocation2 + $0x30] sm:$0xff]
    %v105 = vld [vmem:[#allocation2 + $0x38] sm:$0xff]
    %v106 = vld [vmem:[#allocation2 + $0x40] sm:$0xff]
    %v107 = vld [vmem:[#allocation2 + $0x48] sm:$0xff]
    %v108 = vld [vmem:[#allocation2 + $0x50] sm:$0xff]
    %v109 = vld [vmem:[#allocation2 + $0x58] sm:$0xff]
    %v110 = vld [vmem:[#allocation2 + $0x60] sm:$0xff]
    %v111 = vld [vmem:[#allocation2 + $0x68] sm:$0xff]
    %v112 = vld [vmem:[#allocation2 + $0x70] sm:$0xff]
    %v113 = vld [vmem:[#allocation2 + $0x78] sm:$0xff]
    %v114 = vld [vmem:[#allocation2 + $0x80] sm:$0xff]
    %v115 = vld [vmem:[#allocation2 + $0x88] sm:$0xff]
    %v116 = vld [vmem:[#allocation2 + $0x90] sm:$0xff]
    %v117 = vld [vmem:[#allocation2 + $0x98] sm:$0xff]
    %v118 = vld [vmem:[#allocation2 + $0xa0] sm:$0xff]
    %v119 = vld [vmem:[#allocation2 + $0xa8] sm:$0xff]
    %v120 = vld [vmem:[#allocation2 + $0xb0] sm:$0xff]
    %v121 = vld [vmem:[#allocation2 + $0xb8] sm:$0xff]
    %v122 = vld [vmem:[#allocation2 + $0xc0] sm:$0xff]
    %v123 = vld [vmem:[#allocation2 + $0xc8] sm:$0xff]
    %v124 = vld [vmem:[#allocation2 + $0xd0] sm:$0xff]
    %v125 = vld [vmem:[#allocation2 + $0xd8] sm:$0xff]
    %v126 = vld [vmem:[#allocation2 + $0xe0] sm:$0xff]
    %v127 = vld [vmem:[#allocation2 + $0xe8] sm:$0xff]
    %v128 = vld [vmem:[#allocation2 + $0xf0] sm:$0xff]
    %v129 = vld [vmem:[#allocation2 + $0xf8] sm:$0xff]
    %v130 = vld [vmem:[#allocation2 + $0x100] sm:$0xff]
    %v131 = vld [vmem:[#allocation2 + $0x108] sm:$0xff]
    %v132 = vld [vmem:[#allocation2 + $0x110] sm:$0xff]
    %v133 = vld [vmem:[#allocation2 + $0x118] sm:$0xff]
    %v134 = vld [vmem:[#allocation2 + $0x120] sm:$0xff]
    %v135 = vld [vmem:[#allocation2 + $0x128] sm:$0xff]
    %v136 = vld [vmem:[#allocation2 + $0x130] sm:$0xff]
    %v137 = vld [vmem:[#allocation2 + $0x138] sm:$0xff]
    %v138 = vld [vmem:[#allocation2 + $0x140] sm:$0xff]
    %v139 = vld [vmem:[#allocation2 + $0x148] sm:$0xff]
    %v140 = vld [vmem:[#allocation2 + $0x150] sm:$0xff]
    %v141 = vld [vmem:[#allocation2 + $0x158] sm:$0xff]
    %v142 = vld [vmem:[#allocation2 + $0x160] sm:$0xff]
    %v143 = vld [vmem:[#allocation2 + $0x168] sm:$0xff]
    %v144 = vld [vmem:[#allocation2 + $0x170] sm:$0xff]
    %v145 = vld [vmem:[#allocation2 + $0x178] sm:$0xff]
    %v146 = vld [vmem:[#allocation2 + $0x180] sm:$0xff]
    %v147 = vld [vmem:[#allocation2 + $0x188] sm:$0xff]
    %v148 = vld [vmem:[#allocation2 + $0x190] sm:$0xff]
    %v149 = vld [vmem:[#allocation2 + $0x198] sm:$0xff]
    %v150 = vld [vmem:[#allocation2 + $0x1a0] sm:$0xff]
    %v151 = vld [vmem:[#allocation2 + $0x1a8] sm:$0xff]
    %v152 = vld [vmem:[#allocation2 + $0x1b0] sm:$0xff]
    %v153 = vld [vmem:[#allocation2 + $0x1b8] sm:$0xff]
    %v154 = vld [vmem:[#allocation2 + $0x1c0] sm:$0xff]
    %v155 = vld [vmem:[#allocation2 + $0x1c8] sm:$0xff]
    %v156 = vld [vmem:[#allocation2 + $0x1d0] sm:$0xff]
    %v157 = vld [vmem:[#allocation2 + $0x1d8] sm:$0xff]
    %v158 = vld [vmem:[#allocation2 + $0x1e0] sm:$0xff]
    %v159 = vld [vmem:[#allocation2 + $0x1e8] sm:$0xff]
    %v160 = vld [vmem:[#allocation2 + $0x1f0] sm:$0xff]
    %v161 = vld [vmem:[#allocation2 + $0x1f8] sm:$0xff]
    %v162 = vld [vmem:[#allocation2 + $0x200] sm:$0xff]
    %v163 = vld [vmem:[#allocation2 + $0x208] sm:$0xff]
    %v164 = vld [vmem:[#allocation2 + $0x210] sm:$0xff]
    %v165 = vld [vmem:[#allocation2 + $0x218] sm:$0xff]
    %v166 = vld [vmem:[#allocation2 + $0x220] sm:$0xff]
    %v167 = vld [vmem:[#allocation2 + $0x228] sm:$0xff]
    %v168 = vld [vmem:[#allocation2 + $0x230] sm:$0xff]
    %v169 = vld [vmem:[#allocation2 + $0x238] sm:$0xff]
    %v170 = vld [vmem:[#allocation2 + $0x240] sm:$0xff]
    %v171 = vld [vmem:[#allocation2 + $0x248] sm:$0xff]
    %v172 = vld [vmem:[#allocation2 + $0x250] sm:$0xff]
    %v173 = vld [vmem:[#allocation2 + $0x258] sm:$0xff]
    %v174 = vld [vmem:[#allocation2 + $0x260] sm:$0xff]
    %v175 = vld [vmem:[#allocation2 + $0x268] sm:$0xff]
    %v176 = vld [vmem:[#allocation2 + $0x270] sm:$0xff]
    %v177 = vld [vmem:[#allocation2 + $0x278] sm:$0xff]
    %v178 = vld [vmem:[#allocation2 + $0x280] sm:$0xff]
    %v179 = vld [vmem:[#allocation2 + $0x288] sm:$0xff]
    %v180 = vld [vmem:[#allocation2 + $0x290] sm:$0xff]
    %v181 = vld [vmem:[#allocation2 + $0x298] sm:$0xff]
    %v182 = vld [vmem:[#allocation2 + $0x2a0] sm:$0xff]
    %v183 = vld [vmem:[#allocation2 + $0x2a8] sm:$0xff]
    %v184 = vld [vmem:[#allocation2 + $0x2b0] sm:$0xff]
    %v185 = vld [vmem:[#allocation2 + $0x2b8] sm:$0xff]
    %v186 = vld [vmem:[#allocation2 + $0x2c0] sm:$0xff]
    %v187 = vld [vmem:[#allocation2 + $0x2c8] sm:$0xff]
    %v188 = vld [vmem:[#allocation2 + $0x2d0] sm:$0xff]
    %v189 = vld [vmem:[#allocation2 + $0x2d8] sm:$0xff]
    %v190 = vld [vmem:[#allocation2 + $0x2e0] sm:$0xff]
    %v191 = vld [vmem:[#allocation2 + $0x2e8] sm:$0xff]
    %v192 = vld [vmem:[#allocation2 + $0x2f0] sm:$0xff]
    %v193 = vld [vmem:[#allocation2 + $0x2f8] sm:$0xff]
    %v194 = vld [vmem:[#allocation2 + $0x300] sm:$0xff]
    %v195 = vld [vmem:[#allocation2 + $0x308] sm:$0xff]
    %v196 = vmul.f32 %v83, 1.5
    %v197 = vmul.f32 %v84, 1.5
    %v198 = vmul.f32 %v85, 1.5
    %v199 = vmul.f32 %v86, 1.5
    %v200 = vmul.f32 %v87, 1.5
    %v201 = vmul.f32 %v88, 1.5
    %v202 = vmul.f32 %v89, 1.5
    %v203 = vmul.f32 %v196, %v83
    %v204 = vmul.f32 %v197, %v84
    %v205 = vmul.f32 %v198, %v85
    %v206 = vmul.f32 %v199, %v86
    %v207 = vmul.f32 %v200, %v87
    %v208 = vmul.f32 %v201, %v88
    %v209 = vmul.f32 %v202, %v89
    %v210 = vsub.f32 %v203, 0.5
    %v211 = vsub.f32 %v204, 0.5
    %v212 = vsub.f32 %v205, 0.5
    %v213 = vsub.f32 %v206, 0.5
    %v214 = vsub.f32 %v207, 0.5
    %v215 = vsub.f32 %v208, 0.5
    %v216 = vsub.f32 %v209, 0.5
    %v217 = vpack.c.bf16 %v210, %v210
    %v218 = vpack.c.bf16 %v211, %v211
    %v219 = vpack.c.bf16 %v212, %v212
    %v220 = vpack.c.bf16 %v213, %v213
    %v221 = vpack.c.bf16 %v214, %v214
    %v222 = vpack.c.bf16 %v215, %v215
    %v223 = vpack.c.bf16 %v216, %v216
    %v224 = vld [vmem:[#allocation2 + $0x310] sm:$0xff]
    %v225 = vld [vmem:[#allocation2 + $0x318] sm:$0xff]
    %v226 = vld [vmem:[#allocation2 + $0x320] sm:$0xff]
    %v227 = vld [vmem:[#allocation2 + $0x328] sm:$0xff]
    %v228 = vld [vmem:[#allocation2 + $0x330] sm:$0xff]
    %v229 = vld [vmem:[#allocation2 + $0x338] sm:$0xff]
    %v230 = vld [vmem:[#allocation2 + $0x340] sm:$0xff]
    %v231 = vld [vmem:[#allocation2 + $0x348] sm:$0xff]
    %v232 = vld [vmem:[#allocation2 + $0x350] sm:$0xff]
    %v233 = vld [vmem:[#allocation2 + $0x358] sm:$0xff]
    %v234 = vld [vmem:[#allocation2 + $0x360] sm:$0xff]
    %v235 = vld [vmem:[#allocation2 + $0x368] sm:$0xff]
    %v236 = vld [vmem:[#allocation2 + $0x370] sm:$0xff]
    %v237 = vld [vmem:[#allocation2 + $0x378] sm:$0xff]
    %v238 = vld [vmem:[#allocation2 + $0x380] sm:$0xff]
    %v239 = vld [vmem:[#allocation2 + $0x388] sm:$0xff]
    %v240 = vld [vmem:[#allocation2 + $0x390] sm:$0xff]
    %v241 = vld [vmem:[#allocation2 + $0x398] sm:$0xff]
    %v242 = vld [vmem:[#allocation2 + $0x3a0] sm:$0xff]
    %v243 = vld [vmem:[#allocation2 + $0x3a8] sm:$0xff]
    %v244 = vld [vmem:[#allocation2 + $0x3b0] sm:$0xff]
    %v245 = vld [vmem:[#allocation2 + $0x3b8] sm:$0xff]
    %v246 = vld [vmem:[#allocation2 + $0x3c0] sm:$0xff]
    %v247 = vld [vmem:[#allocation2 + $0x3c8] sm:$0xff]
    %v248 = vld [vmem:[#allocation2 + $0x3d0] sm:$0xff]
    %v249 = vld [vmem:[#allocation2 + $0x3d8] sm:$0xff]
    %v250 = vld [vmem:[#allocation2 + $0x3e0] sm:$0xff]
    %v251 = vld [vmem:[#allocation2 + $0x3e8] sm:$0xff]
    %v252 = vld [vmem:[#allocation2 + $0x3f0] sm:$0xff]
    %v253 = vld [vmem:[#allocation2 + $0x3f8] sm:$0xff]
    %v254 = vld [vmem:[#allocation2 + $0x400] sm:$0xff]
    %v255 = vld [vmem:[#allocation2 + $0x408] sm:$0xff]
    %v256 = vld [vmem:[#allocation2 + $0x410] sm:$0xff]
    %v257 = vld [vmem:[#allocation2 + $0x418] sm:$0xff]
    %v258 = vld [vmem:[#allocation2 + $0x420] sm:$0xff]
    %v259 = vld [vmem:[#allocation2 + $0x428] sm:$0xff]
    %v260 = vld [vmem:[#allocation2 + $0x430] sm:$0xff]
    %v261 = vld [vmem:[#allocation2 + $0x438] sm:$0xff]
    %v262 = vld [vmem:[#allocation2 + $0x440] sm:$0xff]
    %v263 = vld [vmem:[#allocation2 + $0x448] sm:$0xff]
    %v264 = vld [vmem:[#allocation2 + $0x450] sm:$0xff]
    %v265 = vld [vmem:[#allocation2 + $0x458] sm:$0xff]
    %v266 = vld [vmem:[#allocation2 + $0x460] sm:$0xff]
    %v267 = vld [vmem:[#allocation2 + $0x468] sm:$0xff]
    %v268 = vld [vmem:[#allocation2 + $0x470] sm:$0xff]
    %v269 = vld [vmem:[#allocation2 + $0x478] sm:$0xff]
    %v270 = vld [vmem:[#allocation2 + $0x480] sm:$0xff]
    %v271 = vld [vmem:[#allocation2 + $0x488] sm:$0xff]
    %v272 = vld [vmem:[#allocation2 + $0x490] sm:$0xff]
    %v273 = vld [vmem:[#allocation2 + $0x498] sm:$0xff]
    %v274 = vld [vmem:[#allocation2 + $0x4a0] sm:$0xff]
    %v275 = vld [vmem:[#allocation2 + $0x4a8] sm:$0xff]
    %v276 = vld [vmem:[#allocation2 + $0x4b0] sm:$0xff]
    %v277 = vld [vmem:[#allocation2 + $0x4b8] sm:$0xff]
    %v278 = vld [vmem:[#allocation2 + $0x4c0] sm:$0xff]
    %v279 = vld [vmem:[#allocation2 + $0x4c8] sm:$0xff]
    %v280 = vld [vmem:[#allocation2 + $0x4d0] sm:$0xff]
    %v281 = vld [vmem:[#allocation2 + $0x4d8] sm:$0xff]
    %v282 = vld [vmem:[#allocation2 + $0x4e0] sm:$0xff]
    %v283 = vld [vmem:[#allocation2 + $0x4e8] sm:$0xff]
    %v284 = vld [vmem:[#allocation2 + $0x4f0] sm:$0xff]
    %v285 = vld [vmem:[#allocation2 + $0x4f8] sm:$0xff]
    %v286 = vld [vmem:[#allocation2 + $0x500] sm:$0xff]
    %v287 = vld [vmem:[#allocation2 + $0x508] sm:$0xff]
    %v288 = vld [vmem:[#allocation2 + $0x510] sm:$0xff]
    %v289 = vld [vmem:[#allocation2 + $0x518] sm:$0xff]
    %v290 = vld [vmem:[#allocation2 + $0x520] sm:$0xff]
    %v291 = vld [vmem:[#allocation2 + $0x528] sm:$0xff]
    %v292 = vld [vmem:[#allocation2 + $0x530] sm:$0xff]
    %v293 = vld [vmem:[#allocation2 + $0x538] sm:$0xff]
    %v294 = vld [vmem:[#allocation2 + $0x540] sm:$0xff]
    %v295 = vld [vmem:[#allocation2 + $0x548] sm:$0xff]
    %v296 = vld [vmem:[#allocation2 + $0x550] sm:$0xff]
    %v297 = vld [vmem:[#allocation2 + $0x558] sm:$0xff]
    %v298 = vld [vmem:[#allocation2 + $0x560] sm:$0xff]
    %v299 = vld [vmem:[#allocation2 + $0x568] sm:$0xff]
    %v300 = vld [vmem:[#allocation2 + $0x570] sm:$0xff]
    %v301 = vld [vmem:[#allocation2 + $0x578] sm:$0xff]
    %v302 = vld [vmem:[#allocation2 + $0x580] sm:$0xff]
    %v303 = vld [vmem:[#allocation2 + $0x588] sm:$0xff]
    %v304 = vld [vmem:[#allocation2 + $0x590] sm:$0xff]
    %v305 = vld [vmem:[#allocation2 + $0x598] sm:$0xff]
    %v306 = vld [vmem:[#allocation2 + $0x5a0] sm:$0xff]
    %v307 = vld [vmem:[#allocation2 + $0x5a8] sm:$0xff]
    %v308 = vld [vmem:[#allocation2 + $0x5b0] sm:$0xff]
    %v309 = vld [vmem:[#allocation2 + $0x5b8] sm:$0xff]
    %v310 = vld [vmem:[#allocation2 + $0x5c0] sm:$0xff]
    %v311 = vld [vmem:[#allocation2 + $0x5c8] sm:$0xff]
    %v312 = vld [vmem:[#allocation2 + $0x5d0] sm:$0xff]
    %v313 = vld [vmem:[#allocation2 + $0x5d8] sm:$0xff]
    %v314 = vld [vmem:[#allocation2 + $0x5e0] sm:$0xff]
    %v315 = vld [vmem:[#allocation2 + $0x5e8] sm:$0xff]
    %v316 = vld [vmem:[#allocation2 + $0x5f0] sm:$0xff]
    %v317 = vld [vmem:[#allocation2 + $0x5f8] sm:$0xff]
    %v318 = vld [vmem:[#allocation2 + $0x600] sm:$0xff]
    %v319 = vld [vmem:[#allocation2 + $0x608] sm:$0xff]
    %v320 = vld [vmem:[#allocation2 + $0x610] sm:$0xff]
    %v321 = vld [vmem:[#allocation2 + $0x618] sm:$0xff]
    %v420 = vunpack.c.l.b16 %v224
    %v421 = vunpack.c.h.b16 %v224
    %v422 = vunpack.c.l.b16 %v225
    %v423 = vunpack.c.h.b16 %v225
    %v424 = vunpack.c.l.b16 %v226
    %v425 = vunpack.c.h.b16 %v226
    %v426 = vunpack.c.l.b16 %v227
    %v427 = vunpack.c.h.b16 %v227
    %v428 = vunpack.c.l.b16 %v228
    %v429 = vunpack.c.h.b16 %v228
    %v430 = vunpack.c.l.b16 %v229
    %v431 = vunpack.c.h.b16 %v229
    %v432 = vunpack.c.l.b16 %v230
    %v433 = vunpack.c.h.b16 %v230
    %v434 = vunpack.c.l.b16 %v231
    %v435 = vunpack.c.h.b16 %v231
    %v436 = vunpack.c.l.b16 %v232
    %v437 = vunpack.c.h.b16 %v232
    %v438 = vunpack.c.l.b16 %v233
    %v439 = vunpack.c.h.b16 %v233
    %v440 = vunpack.c.l.b16 %v234
    %v441 = vunpack.c.h.b16 %v234
    %v442 = vunpack.c.l.b16 %v235
    %v443 = vunpack.c.h.b16 %v235
    %v444 = vunpack.c.l.b16 %v236
    %v445 = vunpack.c.h.b16 %v236
    %v446 = vunpack.c.l.b16 %v237
    %v447 = vunpack.c.h.b16 %v237
    %v448 = vunpack.c.l.b16 %v238
    %v449 = vunpack.c.h.b16 %v238
    %v450 = vunpack.c.l.b16 %v239
    %v451 = vunpack.c.h.b16 %v239
    %v452 = vunpack.c.l.b16 %v240
    %v453 = vunpack.c.h.b16 %v240
    %v454 = vunpack.c.l.b16 %v241
    %v455 = vunpack.c.h.b16 %v241
    %v456 = vunpack.c.l.b16 %v242
    %v457 = vunpack.c.h.b16 %v242
    %v458 = vunpack.c.l.b16 %v243
    %v459 = vunpack.c.h.b16 %v243
    %v460 = vunpack.c.l.b16 %v244
    %v461 = vunpack.c.h.b16 %v244
    %v462 = vunpack.c.l.b16 %v245
    %v463 = vunpack.c.h.b16 %v245
    %v464 = vunpack.c.l.b16 %v246
    %v465 = vunpack.c.h.b16 %v246
    %v466 = vunpack.c.l.b16 %v247
    %v467 = vunpack.c.h.b16 %v247
    %v468 = vunpack.c.l.b16 %v248
    %v469 = vunpack.c.h.b16 %v248
    %v470 = vunpack.c.l.b16 %v249
    %v471 = vunpack.c.h.b16 %v249
    %v472 = vunpack.c.l.b16 %v250
    %v473 = vunpack.c.h.b16 %v250
    %v474 = vunpack.c.l.b16 %v251
    %v475 = vunpack.c.h.b16 %v251
    %v476 = vunpack.c.l.b16 %v252
    %v477 = vunpack.c.h.b16 %v252
    %v478 = vunpack.c.l.b16 %v253
    %v479 = vunpack.c.h.b16 %v253
    %v480 = vunpack.c.l.b16 %v254
    %v481 = vunpack.c.h.b16 %v254
    %v482 = vunpack.c.l.b16 %v255
    %v483 = vunpack.c.h.b16 %v255
    %v484 = vunpack.c.l.b16 %v256
    %v485 = vunpack.c.h.b16 %v256
    %v486 = vunpack.c.l.b16 %v257
    %v487 = vunpack.c.h.b16 %v257
    %v488 = vunpack.c.l.b16 %v258
    %v489 = vunpack.c.h.b16 %v258
    %v490 = vunpack.c.l.b16 %v259
    %v491 = vunpack.c.h.b16 %v259
    %v492 = vunpack.c.l.b16 %v260
    %v493 = vunpack.c.h.b16 %v260
    %v494 = vunpack.c.l.b16 %v261
    %v495 = vunpack.c.h.b16 %v261
    %v496 = vunpack.c.l.b16 %v262
    %v497 = vunpack.c.h.b16 %v262
    %v498 = vunpack.c.l.b16 %v263
    %v499 = vunpack.c.h.b16 %v263
    %v500 = vunpack.c.l.b16 %v264
    %v501 = vunpack.c.h.b16 %v264
    %v502 = vunpack.c.l.b16 %v265
    %v503 = vunpack.c.h.b16 %v265
    %v504 = vunpack.c.l.b16 %v266
    %v505 = vunpack.c.h.b16 %v266
    %v506 = vunpack.c.l.b16 %v267
    %v507 = vunpack.c.h.b16 %v267
    %v508 = vunpack.c.l.b16 %v268
    %v509 = vunpack.c.h.b16 %v268
    %v510 = vunpack.c.l.b16 %v269
    %v511 = vunpack.c.h.b16 %v269
    %v512 = vunpack.c.l.b16 %v270
    %v513 = vunpack.c.h.b16 %v270
    %v514 = vunpack.c.l.b16 %v271
    %v515 = vunpack.c.h.b16 %v271
    %v516 = vunpack.c.l.b16 %v272
    %v517 = vunpack.c.h.b16 %v272
    %v518 = vunpack.c.l.b16 %v273
    %v519 = vunpack.c.h.b16 %v273
    %v520 = vunpack.c.l.b16 %v274
    %v521 = vunpack.c.h.b16 %v274
    %v522 = vunpack.c.l.b16 %v275
    %v523 = vunpack.c.h.b16 %v275
    %v524 = vunpack.c.l.b16 %v276
    %v525 = vunpack.c.h.b16 %v276
    %v526 = vunpack.c.l.b16 %v277
    %v527 = vunpack.c.h.b16 %v277
    %v528 = vunpack.c.l.b16 %v278
    %v529 = vunpack.c.h.b16 %v278
    %v530 = vunpack.c.l.b16 %v279
    %v531 = vunpack.c.h.b16 %v279
    %v532 = vunpack.c.l.b16 %v280
    %v533 = vunpack.c.h.b16 %v280
    %v534 = vunpack.c.l.b16 %v281
    %v535 = vunpack.c.h.b16 %v281
    %v536 = vunpack.c.l.b16 %v282
    %v537 = vunpack.c.h.b16 %v282
    %v538 = vunpack.c.l.b16 %v283
    %v539 = vunpack.c.h.b16 %v283
    %v540 = vunpack.c.l.b16 %v284
    %v541 = vunpack.c.h.b16 %v284
    %v542 = vunpack.c.l.b16 %v285
    %v543 = vunpack.c.h.b16 %v285
    %v544 = vunpack.c.l.b16 %v286
    %v545 = vunpack.c.h.b16 %v286
    %v546 = vunpack.c.l.b16 %v287
    %v547 = vunpack.c.h.b16 %v287
    %v548 = vunpack.c.l.b16 %v288
    %v549 = vunpack.c.h.b16 %v288
    %v550 = vunpack.c.l.b16 %v289
    %v551 = vunpack.c.h.b16 %v289
    %v552 = vunpack.c.l.b16 %v290
    %v553 = vunpack.c.h.b16 %v290
    %v554 = vunpack.c.l.b16 %v291
    %v555 = vunpack.c.h.b16 %v291
    %v556 = vunpack.c.l.b16 %v292
    %v557 = vunpack.c.h.b16 %v292
    %v558 = vunpack.c.l.b16 %v293
    %v559 = vunpack.c.h.b16 %v293
    %v560 = vunpack.c.l.b16 %v294
    %v561 = vunpack.c.h.b16 %v294
    %v562 = vunpack.c.l.b16 %v295
    %v563 = vunpack.c.h.b16 %v295
    %v564 = vunpack.c.l.b16 %v296
    %v565 = vunpack.c.h.b16 %v296
    %v566 = vunpack.c.l.b16 %v297
    %v567 = vunpack.c.h.b16 %v297
    %v568 = vunpack.c.l.b16 %v298
    %v569 = vunpack.c.h.b16 %v298
    %v570 = vunpack.c.l.b16 %v299
    %v571 = vunpack.c.h.b16 %v299
    %v572 = vunpack.c.l.b16 %v300
    %v573 = vunpack.c.h.b16 %v300
    %v574 = vunpack.c.l.b16 %v301
    %v575 = vunpack.c.h.b16 %v301
    %v576 = vunpack.c.l.b16 %v302
    %v577 = vunpack.c.h.b16 %v302
    %v578 = vunpack.c.l.b16 %v303
    %v579 = vunpack.c.h.b16 %v303
    %v580 = vunpack.c.l.b16 %v304
    %v581 = vunpack.c.h.b16 %v304
    %v582 = vunpack.c.l.b16 %v305
    %v583 = vunpack.c.h.b16 %v305
    %v584 = vunpack.c.l.b16 %v306
    %v585 = vunpack.c.h.b16 %v306
    %v586 = vunpack.c.l.b16 %v307
    %v587 = vunpack.c.h.b16 %v307
    %v588 = vunpack.c.l.b16 %v308
    %v589 = vunpack.c.h.b16 %v308
    %v590 = vunpack.c.l.b16 %v309
    %v591 = vunpack.c.h.b16 %v309
    %v592 = vunpack.c.l.b16 %v310
    %v593 = vunpack.c.h.b16 %v310
    %v594 = vunpack.c.l.b16 %v311
    %v595 = vunpack.c.h.b16 %v311
    %v596 = vunpack.c.l.b16 %v312
    %v597 = vunpack.c.h.b16 %v312
    %v598 = vunpack.c.l.b16 %v313
    %v599 = vunpack.c.h.b16 %v313
    %v600 = vunpack.c.l.b16 %v314
    %v601 = vunpack.c.h.b16 %v314
    %v602 = vunpack.c.l.b16 %v315
    %v603 = vunpack.c.h.b16 %v315
    %v604 = vunpack.c.l.b16 %v316
    %v605 = vunpack.c.h.b16 %v316
    %v606 = vunpack.c.l.b16 %v317
    %v607 = vunpack.c.h.b16 %v317
    %v608 = vunpack.c.l.b16 %v318
    %v609 = vunpack.c.h.b16 %v318
    %v610 = vunpack.c.l.b16 %v319
    %v611 = vunpack.c.h.b16 %v319
    %v612 = vunpack.c.l.b16 %v320
    %v613 = vunpack.c.h.b16 %v320
    %v614 = vunpack.c.l.b16 %v321
    %v615 = vunpack.c.h.b16 %v321
    %v616 = vpack.c.b16 %v422, %v420
    %v617 = vpack.c.b16 %v423, %v421
    %v618 = vpack.c.b16 %v426, %v424
    %v619 = vpack.c.b16 %v427, %v425
    %v620 = vpack.c.b16 %v430, %v428
    %v621 = vpack.c.b16 %v431, %v429
    %v622 = vpack.c.b16 %v434, %v432
    %v623 = vpack.c.b16 %v435, %v433
    %v624 = vpack.c.b16 %v438, %v436
    %v625 = vpack.c.b16 %v439, %v437
    %v626 = vpack.c.b16 %v442, %v440
    %v627 = vpack.c.b16 %v443, %v441
    %v628 = vpack.c.b16 %v446, %v444
    %v629 = vpack.c.b16 %v447, %v445
    %v630 = vpack.c.b16 %v450, %v448
    %v631 = vpack.c.b16 %v451, %v449
    %v632 = vpack.c.b16 %v454, %v452
    %v633 = vpack.c.b16 %v455, %v453
    %v634 = vpack.c.b16 %v458, %v456
    %v635 = vpack.c.b16 %v459, %v457
    %v636 = vpack.c.b16 %v462, %v460
    %v637 = vpack.c.b16 %v463, %v461
    %v638 = vpack.c.b16 %v466, %v464
    %v639 = vpack.c.b16 %v467, %v465
    %v640 = vpack.c.b16 %v470, %v468
    %v641 = vpack.c.b16 %v471, %v469
    %v642 = vpack.c.b16 %v474, %v472
    %v643 = vpack.c.b16 %v475, %v473
    %v644 = vpack.c.b16 %v478, %v476
    %v645 = vpack.c.b16 %v479, %v477
    %v646 = vpack.c.b16 %v482, %v480
    %v647 = vpack.c.b16 %v483, %v481
    %v648 = vpack.c.b16 %v486, %v484
    %v649 = vpack.c.b16 %v487, %v485
    %v650 = vpack.c.b16 %v490, %v488
    %v651 = vpack.c.b16 %v491, %v489
    %v652 = vpack.c.b16 %v494, %v492
    %v653 = vpack.c.b16 %v495, %v493
    %v654 = vpack.c.b16 %v498, %v496
    %v655 = vpack.c.b16 %v499, %v497
    %v656 = vpack.c.b16 %v502, %v500
    %v657 = vpack.c.b16 %v503, %v501
    %v658 = vpack.c.b16 %v506, %v504
    %v659 = vpack.c.b16 %v507, %v505
    %v660 = vpack.c.b16 %v510, %v508
    %v661 = vpack.c.b16 %v511, %v509
    %v662 = vpack.c.b16 %v514, %v512
    %v663 = vpack.c.b16 %v515, %v513
    %v664 = vpack.c.b16 %v518, %v516
    %v665 = vpack.c.b16 %v519, %v517
    %v666 = vpack.c.b16 %v522, %v520
    %v667 = vpack.c.b16 %v523, %v521
    %v668 = vpack.c.b16 %v526, %v524
    %v669 = vpack.c.b16 %v527, %v525
    %v670 = vpack.c.b16 %v530, %v528
    %v671 = vpack.c.b16 %v531, %v529
    %v672 = vpack.c.b16 %v534, %v532
    %v673 = vpack.c.b16 %v535, %v533
    %v674 = vpack.c.b16 %v538, %v536
    %v675 = vpack.c.b16 %v539, %v537
    %v676 = vpack.c.b16 %v542, %v540
    %v677 = vpack.c.b16 %v543, %v541
    %v678 = vpack.c.b16 %v546, %v544
    %v679 = vpack.c.b16 %v547, %v545
    %v680 = vpack.c.b16 %v550, %v548
    %v681 = vpack.c.b16 %v551, %v549
    %v682 = vpack.c.b16 %v554, %v552
    %v683 = vpack.c.b16 %v555, %v553
    %v684 = vpack.c.b16 %v558, %v556
    %v685 = vpack.c.b16 %v559, %v557
    %v686 = vpack.c.b16 %v562, %v560
    %v687 = vpack.c.b16 %v563, %v561
    %v688 = vpack.c.b16 %v566, %v564
    %v689 = vpack.c.b16 %v567, %v565
    %v690 = vpack.c.b16 %v570, %v568
    %v691 = vpack.c.b16 %v571, %v569
    %v692 = vpack.c.b16 %v574, %v572
    %v693 = vpack.c.b16 %v575, %v573
    %v694 = vpack.c.b16 %v578, %v576
    %v695 = vpack.c.b16 %v579, %v577
    %v696 = vpack.c.b16 %v582, %v580
    %v697 = vpack.c.b16 %v583, %v581
    %v698 = vpack.c.b16 %v586, %v584
    %v699 = vpack.c.b16 %v587, %v585
    %v700 = vpack.c.b16 %v590, %v588
    %v701 = vpack.c.b16 %v591, %v589
    %v702 = vpack.c.b16 %v594, %v592
    %v703 = vpack.c.b16 %v595, %v593
    %v704 = vpack.c.b16 %v598, %v596
    %v705 = vpack.c.b16 %v599, %v597
    %v706 = vpack.c.b16 %v602, %v600
    %v707 = vpack.c.b16 %v603, %v601
    %v708 = vpack.c.b16 %v606, %v604
    %v709 = vpack.c.b16 %v607, %v605
    %v710 = vpack.c.b16 %v610, %v608
    %v711 = vpack.c.b16 %v611, %v609
    %v712 = vpack.c.b16 %v614, %v612
    %v713 = vpack.c.b16 %v615, %v613
    %vm812 = vcmask 130048
    %v814 = vsel %vm812, %v223, 0
    %816 = vmatprep.subr.bf16.mxu0 %v617
    %817 = vmatpush1.bf16.msra.mxu0 %v616
    %818 = vmatprep.subr.bf16.mxu0 %v619
    %819 = vmatpush1.bf16.msra.mxu0 %v618
    %820 = vmatprep.subr.bf16.mxu0 %v621
    %821 = vmatpush1.bf16.msra.mxu0 %v620
    %822 = vmatprep.subr.bf16.mxu0 %v623
    %823 = vmatpush1.bf16.msra.mxu0 %v622
    %824 = vmatprep.subr.bf16.mxu0 %v625
    %825 = vmatpush1.bf16.msra.mxu0 %v624
    %826 = vmatprep.subr.bf16.mxu0 %v627
    %827 = vmatpush1.bf16.msra.mxu0 %v626
    %828 = vmatprep.subr.bf16.mxu0 %v629
    %829 = vmatpush1.bf16.msra.mxu0 %v628
    %830 = vmatprep.subr.bf16.mxu0 %v631
    %831 = vmatpush1.bf16.msra.mxu0 %v630
    %832 = vmatprep.subr.bf16.mxu0 %v633
    %833 = vmatpush1.bf16.msra.mxu0 %v632
    %834 = vmatprep.subr.bf16.mxu0 %v635
    %835 = vmatpush1.bf16.msra.mxu0 %v634
    %836 = vmatprep.subr.bf16.mxu0 %v637
    %837 = vmatpush1.bf16.msra.mxu0 %v636
    %838 = vmatprep.subr.bf16.mxu0 %v639
    %839 = vmatpush1.bf16.msra.mxu0 %v638
    %840 = vmatprep.subr.bf16.mxu0 %v641
    %841 = vmatpush1.bf16.msra.mxu0 %v640
    %842 = vmatprep.subr.bf16.mxu0 %v643
    %843 = vmatpush1.bf16.msra.mxu0 %v642
    %844 = vmatprep.subr.bf16.mxu0 %v645
    %845 = vmatpush1.bf16.msra.mxu0 %v644
    %846 = vmatprep.subr.bf16.mxu0 %v647
    %847 = vmatpush1.bf16.msra.mxu0 %v646
    %848 = vmatprep.mubr.bf16.mxu0 %v218
    %849 = vmatmul.mubr.bf16.gmra.mrb[0].mxu0 %v217
    %v850 = vpop.f32.mrb[0].mxu0
    %v851 = vadd.f32 0.0, %v850
    %v852 = vpop.f32.mrb[0].mxu0
    %v853 = vadd.f32 0.0, %v852
    %v854 = vpop.f32.mrb[0].mxu0
    %v855 = vpop.f32.mrb[0].mxu0
    %856 = vdwg.mxu0
    %857 = vmatprep.subr.bf16.mxu0 %v649
    %858 = vmatpush1.bf16.msra.mxu0 %v648
    %859 = vmatprep.subr.bf16.mxu0 %v651
    %860 = vmatpush1.bf16.msra.mxu0 %v650
    %861 = vmatprep.subr.bf16.mxu0 %v653
    %862 = vmatpush1.bf16.msra.mxu0 %v652
    %863 = vmatprep.subr.bf16.mxu0 %v655
    %864 = vmatpush1.bf16.msra.mxu0 %v654
    %865 = vmatprep.subr.bf16.mxu0 %v657
    %866 = vmatpush1.bf16.msra.mxu0 %v656
    %867 = vmatprep.subr.bf16.mxu0 %v659
    %868 = vmatpush1.bf16.msra.mxu0 %v658
    %869 = vmatprep.subr.bf16.mxu0 %v661
    %870 = vmatpush1.bf16.msra.mxu0 %v660
    %871 = vmatprep.subr.bf16.mxu0 %v663
    %872 = vmatpush1.bf16.msra.mxu0 %v662
    %873 = vmatprep.subr.bf16.mxu0 %v665
    %874 = vmatpush1.bf16.msra.mxu0 %v664
    %875 = vmatprep.subr.bf16.mxu0 %v667
    %876 = vmatpush1.bf16.msra.mxu0 %v666
    %877 = vmatprep.subr.bf16.mxu0 %v669
    %878 = vmatpush1.bf16.msra.mxu0 %v668
    %879 = vmatprep.subr.bf16.mxu0 %v671
    %880 = vmatpush1.bf16.msra.mxu0 %v670
    %881 = vmatprep.subr.bf16.mxu0 %v673
    %882 = vmatpush1.bf16.msra.mxu0 %v672
    %883 = vmatprep.subr.bf16.mxu0 %v675
    %884 = vmatpush1.bf16.msra.mxu0 %v674
    %885 = vmatprep.subr.bf16.mxu0 %v677
    %886 = vmatpush1.bf16.msra.mxu0 %v676
    %887 = vmatprep.subr.bf16.mxu0 %v679
    %888 = vmatpush1.bf16.msra.mxu0 %v678
    %889 = vmatprep.mubr.bf16.mxu0 %v220
    %890 = vmatmul.mubr.bf16.gmra.mrb[0].mxu0 %v219
    %v891 = vpop.f32.mrb[0].mxu0
    %v892 = vadd.f32 %v851, %v891
    %v893 = vpop.f32.mrb[0].mxu0
    %v894 = vadd.f32 %v853, %v893
    %v895 = vpop.f32.mrb[0].mxu0
    %v896 = vpop.f32.mrb[0].mxu0
    %897 = vdwg.mxu0
    %898 = vmatprep.subr.bf16.mxu0 %v681
    %899 = vmatpush1.bf16.msra.mxu0 %v680
    %900 = vmatprep.subr.bf16.mxu0 %v683
    %901 = vmatpush1.bf16.msra.mxu0 %v682
    %902 = vmatprep.subr.bf16.mxu0 %v685
    %903 = vmatpush1.bf16.msra.mxu0 %v684
    %904 = vmatprep.subr.bf16.mxu0 %v687
    %905 = vmatpush1.bf16.msra.mxu0 %v686
    %906 = vmatprep.subr.bf16.mxu0 %v689
    %907 = vmatpush1.bf16.msra.mxu0 %v688
    %908 = vmatprep.subr.bf16.mxu0 %v691
    %909 = vmatpush1.bf16.msra.mxu0 %v690
    %910 = vmatprep.subr.bf16.mxu0 %v693
    %911 = vmatpush1.bf16.msra.mxu0 %v692
    %912 = vmatprep.subr.bf16.mxu0 %v695
    %913 = vmatpush1.bf16.msra.mxu0 %v694
    %914 = vmatprep.subr.bf16.mxu0 %v697
    %915 = vmatpush1.bf16.msra.mxu0 %v696
    %916 = vmatprep.subr.bf16.mxu0 %v699
    %917 = vmatpush1.bf16.msra.mxu0 %v698
    %918 = vmatprep.subr.bf16.mxu0 %v701
    %919 = vmatpush1.bf16.msra.mxu0 %v700
    %920 = vmatprep.subr.bf16.mxu0 %v703
    %921 = vmatpush1.bf16.msra.mxu0 %v702
    %922 = vmatprep.subr.bf16.mxu0 %v705
    %923 = vmatpush1.bf16.msra.mxu0 %v704
    %924 = vmatprep.subr.bf16.mxu0 %v707
    %925 = vmatpush1.bf16.msra.mxu0 %v706
    %926 = vmatprep.subr.bf16.mxu0 %v709
    %927 = vmatpush1.bf16.msra.mxu0 %v708
    %928 = vmatprep.subr.bf16.mxu0 %v711
    %929 = vmatpush1.bf16.msra.mxu0 %v710
    %930 = vmatprep.mubr.bf16.mxu0 %v222
    %931 = vmatmul.mubr.bf16.gmra.mrb[0].mxu0 %v221
    %v932 = vpop.f32.mrb[0].mxu0
    %v933 = vadd.f32 %v892, %v932
    %v934 = vpop.f32.mrb[0].mxu0
    %v935 = vadd.f32 %v894, %v934
    %v936 = vpop.f32.mrb[0].mxu0
    %v937 = vpop.f32.mrb[0].mxu0
    %938 = vdwg.mxu0
    %939 = vmatprep.subr.bf16.mxu0 %v713
    %940 = vmatpush1.bf16.msra.mxu0 %v712
    %941 = vmatprep.subr.bf16.mxu0 0
    %942 = vmatpush1.bf16.msra.mxu0 0
    %943 = vmatprep.subr.bf16.mxu0 0
    %944 = vmatpush1.bf16.msra.mxu0 0
    %945 = vmatprep.subr.bf16.mxu0 0
    %946 = vmatpush1.bf16.msra.mxu0 0
    %947 = vmatprep.subr.bf16.mxu0 0
    %948 = vmatpush1.bf16.msra.mxu0 0
    %949 = vmatprep.subr.bf16.mxu0 0
    %950 = vmatpush1.bf16.msra.mxu0 0
    %951 = vmatprep.subr.bf16.mxu0 0
    %952 = vmatpush1.bf16.msra.mxu0 0
    %953 = vmatprep.subr.bf16.mxu0 0
    %954 = vmatpush1.bf16.msra.mxu0 0
    %955 = vmatprep.subr.bf16.mxu0 0
    %956 = vmatpush1.bf16.msra.mxu0 0
    %957 = vmatprep.subr.bf16.mxu0 0
    %958 = vmatpush1.bf16.msra.mxu0 0
    %959 = vmatprep.subr.bf16.mxu0 0
    %960 = vmatpush1.bf16.msra.mxu0 0
    %961 = vmatprep.subr.bf16.mxu0 0
    %962 = vmatpush1.bf16.msra.mxu0 0
    %963 = vmatprep.subr.bf16.mxu0 0
    %964 = vmatpush1.bf16.msra.mxu0 0
    %965 = vmatprep.subr.bf16.mxu0 0
    %966 = vmatpush1.bf16.msra.mxu0 0
    %967 = vmatprep.subr.bf16.mxu0 0
    %968 = vmatpush1.bf16.msra.mxu0 0
    %969 = vmatprep.subr.bf16.mxu0 0
    %970 = vmatpush1.bf16.msra.mxu0 0
    %971 = vmatprep.mubr.bf16.mxu0 0
    %972 = vmatmul.mubr.bf16.gmra.mrb[0].mxu0 %v814
    %v973 = vpop.f32.mrb[0].mxu0
    %v974 = vadd.f32 %v933, %v973
    %v975 = vpop.f32.mrb[0].mxu0
    %v976 = vadd.f32 %v935, %v975
    %v977 = vpop.f32.mrb[0].mxu0
    %v978 = vpop.f32.mrb[0].mxu0
    %979 = vdwg.mxu0
    %v1078 = vunpack.c.l.b16 %v98
    %v1079 = vunpack.c.h.b16 %v98
    %v1080 = vunpack.c.l.b16 %v99
    %v1081 = vunpack.c.h.b16 %v99
    %v1082 = vunpack.c.l.b16 %v100
    %v1083 = vunpack.c.h.b16 %v100
    %v1084 = vunpack.c.l.b16 %v101
    %v1085 = vunpack.c.h.b16 %v101
    %v1086 = vunpack.c.l.b16 %v102
    %v1087 = vunpack.c.h.b16 %v102
    %v1088 = vunpack.c.l.b16 %v103
    %v1089 = vunpack.c.h.b16 %v103
    %v1090 = vunpack.c.l.b16 %v104
    %v1091 = vunpack.c.h.b16 %v104
    %v1092 = vunpack.c.l.b16 %v105
    %v1093 = vunpack.c.h.b16 %v105
    %v1094 = vunpack.c.l.b16 %v106
    %v1095 = vunpack.c.h.b16 %v106
    %v1096 = vunpack.c.l.b16 %v107
    %v1097 = vunpack.c.h.b16 %v107
    %v1098 = vunpack.c.l.b16 %v108
    %v1099 = vunpack.c.h.b16 %v108
    %v1100 = vunpack.c.l.b16 %v109
    %v1101 = vunpack.c.h.b16 %v109
    %v1102 = vunpack.c.l.b16 %v110
    %v1103 = vunpack.c.h.b16 %v110
    %v1104 = vunpack.c.l.b16 %v111
    %v1105 = vunpack.c.h.b16 %v111
    %v1106 = vunpack.c.l.b16 %v112
    %v1107 = vunpack.c.h.b16 %v112
    %v1108 = vunpack.c.l.b16 %v113
    %v1109 = vunpack.c.h.b16 %v113
    %v1110 = vunpack.c.l.b16 %v114
    %v1111 = vunpack.c.h.b16 %v114
    %v1112 = vunpack.c.l.b16 %v115
    %v1113 = vunpack.c.h.b16 %v115
    %v1114 = vunpack.c.l.b16 %v116
    %v1115 = vunpack.c.h.b16 %v116
    %v1116 = vunpack.c.l.b16 %v117
    %v1117 = vunpack.c.h.b16 %v117
    %v1118 = vunpack.c.l.b16 %v118
    %v1119 = vunpack.c.h.b16 %v118
    %v1120 = vunpack.c.l.b16 %v119
    %v1121 = vunpack.c.h.b16 %v119
    %v1122 = vunpack.c.l.b16 %v120
    %v1123 = vunpack.c.h.b16 %v120
    %v1124 = vunpack.c.l.b16 %v121
    %v1125 = vunpack.c.h.b16 %v121
    %v1126 = vunpack.c.l.b16 %v122
    %v1127 = vunpack.c.h.b16 %v122
    %v1128 = vunpack.c.l.b16 %v123
    %v1129 = vunpack.c.h.b16 %v123
    %v1130 = vunpack.c.l.b16 %v124
    %v1131 = vunpack.c.h.b16 %v124
    %v1132 = vunpack.c.l.b16 %v125
    %v1133 = vunpack.c.h.b16 %v125
    %v1134 = vunpack.c.l.b16 %v126
    %v1135 = vunpack.c.h.b16 %v126
    %v1136 = vunpack.c.l.b16 %v127
    %v1137 = vunpack.c.h.b16 %v127
    %v1138 = vunpack.c.l.b16 %v128
    %v1139 = vunpack.c.h.b16 %v128
    %v1140 = vunpack.c.l.b16 %v129
    %v1141 = vunpack.c.h.b16 %v129
    %v1142 = vunpack.c.l.b16 %v130
    %v1143 = vunpack.c.h.b16 %v130
    %v1144 = vunpack.c.l.b16 %v131
    %v1145 = vunpack.c.h.b16 %v131
    %v1146 = vunpack.c.l.b16 %v132
    %v1147 = vunpack.c.h.b16 %v132
    %v1148 = vunpack.c.l.b16 %v133
    %v1149 = vunpack.c.h.b16 %v133
    %v1150 = vunpack.c.l.b16 %v134
    %v1151 = vunpack.c.h.b16 %v134
    %v1152 = vunpack.c.l.b16 %v135
    %v1153 = vunpack.c.h.b16 %v135
    %v1154 = vunpack.c.l.b16 %v136
    %v1155 = vunpack.c.h.b16 %v136
    %v1156 = vunpack.c.l.b16 %v137
    %v1157 = vunpack.c.h.b16 %v137
    %v1158 = vunpack.c.l.b16 %v138
    %v1159 = vunpack.c.h.b16 %v138
    %v1160 = vunpack.c.l.b16 %v139
    %v1161 = vunpack.c.h.b16 %v139
    %v1162 = vunpack.c.l.b16 %v140
    %v1163 = vunpack.c.h.b16 %v140
    %v1164 = vunpack.c.l.b16 %v141
    %v1165 = vunpack.c.h.b16 %v141
    %v1166 = vunpack.c.l.b16 %v142
    %v1167 = vunpack.c.h.b16 %v142
    %v1168 = vunpack.c.l.b16 %v143
    %v1169 = vunpack.c.h.b16 %v143
    %v1170 = vunpack.c.l.b16 %v144
    %v1171 = vunpack.c.h.b16 %v144
    %v1172 = vunpack.c.l.b16 %v145
    %v1173 = vunpack.c.h.b16 %v145
    %v1174 = vunpack.c.l.b16 %v146
    %v1175 = vunpack.c.h.b16 %v146
    %v1176 = vunpack.c.l.b16 %v147
    %v1177 = vunpack.c.h.b16 %v147
    %v1178 = vunpack.c.l.b16 %v148
    %v1179 = vunpack.c.h.b16 %v148
    %v1180 = vunpack.c.l.b16 %v149
    %v1181 = vunpack.c.h.b16 %v149
    %v1182 = vunpack.c.l.b16 %v150
    %v1183 = vunpack.c.h.b16 %v150
    %v1184 = vunpack.c.l.b16 %v151
    %v1185 = vunpack.c.h.b16 %v151
    %v1186 = vunpack.c.l.b16 %v152
    %v1187 = vunpack.c.h.b16 %v152
    %v1188 = vunpack.c.l.b16 %v153
    %v1189 = vunpack.c.h.b16 %v153
    %v1190 = vunpack.c.l.b16 %v154
    %v1191 = vunpack.c.h.b16 %v154
    %v1192 = vunpack.c.l.b16 %v155
    %v1193 = vunpack.c.h.b16 %v155
    %v1194 = vunpack.c.l.b16 %v156
    %v1195 = vunpack.c.h.b16 %v156
    %v1196 = vunpack.c.l.b16 %v157
    %v1197 = vunpack.c.h.b16 %v157
    %v1198 = vunpack.c.l.b16 %v158
    %v1199 = vunpack.c.h.b16 %v158
    %v1200 = vunpack.c.l.b16 %v159
    %v1201 = vunpack.c.h.b16 %v159
    %v1202 = vunpack.c.l.b16 %v160
    %v1203 = vunpack.c.h.b16 %v160
    %v1204 = vunpack.c.l.b16 %v161
    %v1205 = vunpack.c.h.b16 %v161
    %v1206 = vunpack.c.l.b16 %v162
    %v1207 = vunpack.c.h.b16 %v162
    %v1208 = vunpack.c.l.b16 %v163
    %v1209 = vunpack.c.h.b16 %v163
    %v1210 = vunpack.c.l.b16 %v164
    %v1211 = vunpack.c.h.b16 %v164
    %v1212 = vunpack.c.l.b16 %v165
    %v1213 = vunpack.c.h.b16 %v165
    %v1214 = vunpack.c.l.b16 %v166
    %v1215 = vunpack.c.h.b16 %v166
    %v1216 = vunpack.c.l.b16 %v167
    %v1217 = vunpack.c.h.b16 %v167
    %v1218 = vunpack.c.l.b16 %v168
    %v1219 = vunpack.c.h.b16 %v168
    %v1220 = vunpack.c.l.b16 %v169
    %v1221 = vunpack.c.h.b16 %v169
    %v1222 = vunpack.c.l.b16 %v170
    %v1223 = vunpack.c.h.b16 %v170
    %v1224 = vunpack.c.l.b16 %v171
    %v1225 = vunpack.c.h.b16 %v171
    %v1226 = vunpack.c.l.b16 %v172
    %v1227 = vunpack.c.h.b16 %v172
    %v1228 = vunpack.c.l.b16 %v173
    %v1229 = vunpack.c.h.b16 %v173
    %v1230 = vunpack.c.l.b16 %v174
    %v1231 = vunpack.c.h.b16 %v174
    %v1232 = vunpack.c.l.b16 %v175
    %v1233 = vunpack.c.h.b16 %v175
    %v1234 = vunpack.c.l.b16 %v176
    %v1235 = vunpack.c.h.b16 %v176
    %v1236 = vunpack.c.l.b16 %v177
    %v1237 = vunpack.c.h.b16 %v177
    %v1238 = vunpack.c.l.b16 %v178
    %v1239 = vunpack.c.h.b16 %v178
    %v1240 = vunpack.c.l.b16 %v179
    %v1241 = vunpack.c.h.b16 %v179
    %v1242 = vunpack.c.l.b16 %v180
    %v1243 = vunpack.c.h.b16 %v180
    %v1244 = vunpack.c.l.b16 %v181
    %v1245 = vunpack.c.h.b16 %v181
    %v1246 = vunpack.c.l.b16 %v182
    %v1247 = vunpack.c.h.b16 %v182
    %v1248 = vunpack.c.l.b16 %v183
    %v1249 = vunpack.c.h.b16 %v183
    %v1250 = vunpack.c.l.b16 %v184
    %v1251 = vunpack.c.h.b16 %v184
    %v1252 = vunpack.c.l.b16 %v185
    %v1253 = vunpack.c.h.b16 %v185
    %v1254 = vunpack.c.l.b16 %v186
    %v1255 = vunpack.c.h.b16 %v186
    %v1256 = vunpack.c.l.b16 %v187
    %v1257 = vunpack.c.h.b16 %v187
    %v1258 = vunpack.c.l.b16 %v188
    %v1259 = vunpack.c.h.b16 %v188
    %v1260 = vunpack.c.l.b16 %v189
    %v1261 = vunpack.c.h.b16 %v189
    %v1262 = vunpack.c.l.b16 %v190
    %v1263 = vunpack.c.h.b16 %v190
    %v1264 = vunpack.c.l.b16 %v191
    %v1265 = vunpack.c.h.b16 %v191
    %v1266 = vunpack.c.l.b16 %v192
    %v1267 = vunpack.c.h.b16 %v192
    %v1268 = vunpack.c.l.b16 %v193
    %v1269 = vunpack.c.h.b16 %v193
    %v1270 = vunpack.c.l.b16 %v194
    %v1271 = vunpack.c.h.b16 %v194
    %v1272 = vunpack.c.l.b16 %v195
    %v1273 = vunpack.c.h.b16 %v195
    %v1274 = vpack.c.b16 %v1080, %v1078
    %v1275 = vpack.c.b16 %v1081, %v1079
    %v1276 = vpack.c.b16 %v1084, %v1082
    %v1277 = vpack.c.b16 %v1085, %v1083
    %v1278 = vpack.c.b16 %v1088, %v1086
    %v1279 = vpack.c.b16 %v1089, %v1087
    %v1280 = vpack.c.b16 %v1092, %v1090
    %v1281 = vpack.c.b16 %v1093, %v1091
    %v1282 = vpack.c.b16 %v1096, %v1094
    %v1283 = vpack.c.b16 %v1097, %v1095
    %v1284 = vpack.c.b16 %v1100, %v1098
    %v1285 = vpack.c.b16 %v1101, %v1099
    %v1286 = vpack.c.b16 %v1104, %v1102
    %v1287 = vpack.c.b16 %v1105, %v1103
    %v1288 = vpack.c.b16 %v1108, %v1106
    %v1289 = vpack.c.b16 %v1109, %v1107
    %v1290 = vpack.c.b16 %v1112, %v1110
    %v1291 = vpack.c.b16 %v1113, %v1111
    %v1292 = vpack.c.b16 %v1116, %v1114
    %v1293 = vpack.c.b16 %v1117, %v1115
    %v1294 = vpack.c.b16 %v1120, %v1118
    %v1295 = vpack.c.b16 %v1121, %v1119
    %v1296 = vpack.c.b16 %v1124, %v1122
    %v1297 = vpack.c.b16 %v1125, %v1123
    %v1298 = vpack.c.b16 %v1128, %v1126
    %v1299 = vpack.c.b16 %v1129, %v1127
    %v1300 = vpack.c.b16 %v1132, %v1130
    %v1301 = vpack.c.b16 %v1133, %v1131
    %v1302 = vpack.c.b16 %v1136, %v1134
    %v1303 = vpack.c.b16 %v1137, %v1135
    %v1304 = vpack.c.b16 %v1140, %v1138
    %v1305 = vpack.c.b16 %v1141, %v1139
    %v1306 = vpack.c.b16 %v1144, %v1142
    %v1307 = vpack.c.b16 %v1145, %v1143
    %v1308 = vpack.c.b16 %v1148, %v1146
    %v1309 = vpack.c.b16 %v1149, %v1147
    %v1310 = vpack.c.b16 %v1152, %v1150
    %v1311 = vpack.c.b16 %v1153, %v1151
    %v1312 = vpack.c.b16 %v1156, %v1154
    %v1313 = vpack.c.b16 %v1157, %v1155
    %v1314 = vpack.c.b16 %v1160, %v1158
    %v1315 = vpack.c.b16 %v1161, %v1159
    %v1316 = vpack.c.b16 %v1164, %v1162
    %v1317 = vpack.c.b16 %v1165, %v1163
    %v1318 = vpack.c.b16 %v1168, %v1166
    %v1319 = vpack.c.b16 %v1169, %v1167
    %v1320 = vpack.c.b16 %v1172, %v1170
    %v1321 = vpack.c.b16 %v1173, %v1171
    %v1322 = vpack.c.b16 %v1176, %v1174
    %v1323 = vpack.c.b16 %v1177, %v1175
    %v1324 = vpack.c.b16 %v1180, %v1178
    %v1325 = vpack.c.b16 %v1181, %v1179
    %v1326 = vpack.c.b16 %v1184, %v1182
    %v1327 = vpack.c.b16 %v1185, %v1183
    %v1328 = vpack.c.b16 %v1188, %v1186
    %v1329 = vpack.c.b16 %v1189, %v1187
    %v1330 = vpack.c.b16 %v1192, %v1190
    %v1331 = vpack.c.b16 %v1193, %v1191
    %v1332 = vpack.c.b16 %v1196, %v1194
    %v1333 = vpack.c.b16 %v1197, %v1195
    %v1334 = vpack.c.b16 %v1200, %v1198
    %v1335 = vpack.c.b16 %v1201, %v1199
    %v1336 = vpack.c.b16 %v1204, %v1202
    %v1337 = vpack.c.b16 %v1205, %v1203
    %v1338 = vpack.c.b16 %v1208, %v1206
    %v1339 = vpack.c.b16 %v1209, %v1207
    %v1340 = vpack.c.b16 %v1212, %v1210
    %v1341 = vpack.c.b16 %v1213, %v1211
    %v1342 = vpack.c.b16 %v1216, %v1214
    %v1343 = vpack.c.b16 %v1217, %v1215
    %v1344 = vpack.c.b16 %v1220, %v1218
    %v1345 = vpack.c.b16 %v1221, %v1219
    %v1346 = vpack.c.b16 %v1224, %v1222
    %v1347 = vpack.c.b16 %v1225, %v1223
    %v1348 = vpack.c.b16 %v1228, %v1226
    %v1349 = vpack.c.b16 %v1229, %v1227
    %v1350 = vpack.c.b16 %v1232, %v1230
    %v1351 = vpack.c.b16 %v1233, %v1231
    %v1352 = vpack.c.b16 %v1236, %v1234
    %v1353 = vpack.c.b16 %v1237, %v1235
    %v1354 = vpack.c.b16 %v1240, %v1238
    %v1355 = vpack.c.b16 %v1241, %v1239
    %v1356 = vpack.c.b16 %v1244, %v1242
    %v1357 = vpack.c.b16 %v1245, %v1243
    %v1358 = vpack.c.b16 %v1248, %v1246
    %v1359 = vpack.c.b16 %v1249, %v1247
    %v1360 = vpack.c.b16 %v1252, %v1250
    %v1361 = vpack.c.b16 %v1253, %v1251
    %v1362 = vpack.c.b16 %v1256, %v1254
    %v1363 = vpack.c.b16 %v1257, %v1255
    %v1364 = vpack.c.b16 %v1260, %v1258
    %v1365 = vpack.c.b16 %v1261, %v1259
    %v1366 = vpack.c.b16 %v1264, %v1262
    %v1367 = vpack.c.b16 %v1265, %v1263
    %v1368 = vpack.c.b16 %v1268, %v1266
    %v1369 = vpack.c.b16 %v1269, %v1267
    %v1370 = vpack.c.b16 %v1272, %v1270
    %v1371 = vpack.c.b16 %v1273, %v1271
    %v1471 = vsel %vm812, %v97, 0
    %1473 = vmatprep.subr.bf16.mxu0 %v1275
    %1474 = vmatpush1.bf16.msra.mxu0 %v1274
    %1475 = vmatprep.subr.bf16.mxu0 %v1277
    %1476 = vmatpush1.bf16.msra.mxu0 %v1276
    %1477 = vmatprep.subr.bf16.mxu0 %v1279
    %1478 = vmatpush1.bf16.msra.mxu0 %v1278
    %1479 = vmatprep.subr.bf16.mxu0 %v1281
    %1480 = vmatpush1.bf16.msra.mxu0 %v1280
    %1481 = vmatprep.subr.bf16.mxu0 %v1283
    %1482 = vmatpush1.bf16.msra.mxu0 %v1282
    %1483 = vmatprep.subr.bf16.mxu0 %v1285
    %1484 = vmatpush1.bf16.msra.mxu0 %v1284
    %1485 = vmatprep.subr.bf16.mxu0 %v1287
    %1486 = vmatpush1.bf16.msra.mxu0 %v1286
    %1487 = vmatprep.subr.bf16.mxu0 %v1289
    %1488 = vmatpush1.bf16.msra.mxu0 %v1288
    %1489 = vmatprep.subr.bf16.mxu0 %v1291
    %1490 = vmatpush1.bf16.msra.mxu0 %v1290
    %1491 = vmatprep.subr.bf16.mxu0 %v1293
    %1492 = vmatpush1.bf16.msra.mxu0 %v1292
    %1493 = vmatprep.subr.bf16.mxu0 %v1295
    %1494 = vmatpush1.bf16.msra.mxu0 %v1294
    %1495 = vmatprep.subr.bf16.mxu0 %v1297
    %1496 = vmatpush1.bf16.msra.mxu0 %v1296
    %1497 = vmatprep.subr.bf16.mxu0 %v1299
    %1498 = vmatpush1.bf16.msra.mxu0 %v1298
    %1499 = vmatprep.subr.bf16.mxu0 %v1301
    %1500 = vmatpush1.bf16.msra.mxu0 %v1300
    %1501 = vmatprep.subr.bf16.mxu0 %v1303
    %1502 = vmatpush1.bf16.msra.mxu0 %v1302
    %1503 = vmatprep.subr.bf16.mxu0 %v1305
    %1504 = vmatpush1.bf16.msra.mxu0 %v1304
    %1505 = vmatprep.mubr.bf16.mxu0 %v92
    %1506 = vmatmul.mubr.bf16.gmra.mrb[0].mxu0 %v91
    %v1507 = vpop.f32.mrb[0].mxu0
    %v1508 = vadd.f32 %v974, %v1507
    %v1509 = vpop.f32.mrb[0].mxu0
    %v1510 = vadd.f32 %v976, %v1509
    %v1511 = vpop.f32.mrb[0].mxu0
    %v1512 = vpop.f32.mrb[0].mxu0
    %1513 = vdwg.mxu0
    %1514 = vmatprep.subr.bf16.mxu0 %v1307
    %1515 = vmatpush1.bf16.msra.mxu0 %v1306
    %1516 = vmatprep.subr.bf16.mxu0 %v1309
    %1517 = vmatpush1.bf16.msra.mxu0 %v1308
    %1518 = vmatprep.subr.bf16.mxu0 %v1311
    %1519 = vmatpush1.bf16.msra.mxu0 %v1310
    %1520 = vmatprep.subr.bf16.mxu0 %v1313
    %1521 = vmatpush1.bf16.msra.mxu0 %v1312
    %1522 = vmatprep.subr.bf16.mxu0 %v1315
    %1523 = vmatpush1.bf16.msra.mxu0 %v1314
    %1524 = vmatprep.subr.bf16.mxu0 %v1317
    %1525 = vmatpush1.bf16.msra.mxu0 %v1316
    %1526 = vmatprep.subr.bf16.mxu0 %v1319
    %1527 = vmatpush1.bf16.msra.mxu0 %v1318
    %1528 = vmatprep.subr.bf16.mxu0 %v1321
    %1529 = vmatpush1.bf16.msra.mxu0 %v1320
    %1530 = vmatprep.subr.bf16.mxu0 %v1323
    %1531 = vmatpush1.bf16.msra.mxu0 %v1322
    %1532 = vmatprep.subr.bf16.mxu0 %v1325
    %1533 = vmatpush1.bf16.msra.mxu0 %v1324
    %1534 = vmatprep.subr.bf16.mxu0 %v1327
    %1535 = vmatpush1.bf16.msra.mxu0 %v1326
    %1536 = vmatprep.subr.bf16.mxu0 %v1329
    %1537 = vmatpush1.bf16.msra.mxu0 %v1328
    %1538 = vmatprep.subr.bf16.mxu0 %v1331
    %1539 = vmatpush1.bf16.msra.mxu0 %v1330
    %1540 = vmatprep.subr.bf16.mxu0 %v1333
    %1541 = vmatpush1.bf16.msra.mxu0 %v1332
    %1542 = vmatprep.subr.bf16.mxu0 %v1335
    %1543 = vmatpush1.bf16.msra.mxu0 %v1334
    %1544 = vmatprep.subr.bf16.mxu0 %v1337
    %1545 = vmatpush1.bf16.msra.mxu0 %v1336
    %1546 = vmatprep.mubr.bf16.mxu0 %v94
    %1547 = vmatmul.mubr.bf16.gmra.mrb[0].mxu0 %v93
    %v1548 = vpop.f32.mrb[0].mxu0
    %v1549 = vadd.f32 %v1508, %v1548
    %v1550 = vpop.f32.mrb[0].mxu0
    %v1551 = vadd.f32 %v1510, %v1550
    %v1552 = vpop.f32.mrb[0].mxu0
    %v1553 = vpop.f32.mrb[0].mxu0
    %1554 = vdwg.mxu0
    %1555 = vmatprep.subr.bf16.mxu0 %v1339
    %1556 = vmatpush1.bf16.msra.mxu0 %v1338
    %1557 = vmatprep.subr.bf16.mxu0 %v1341
    %1558 = vmatpush1.bf16.msra.mxu0 %v1340
    %1559 = vmatprep.subr.bf16.mxu0 %v1343
    %1560 = vmatpush1.bf16.msra.mxu0 %v1342
    %1561 = vmatprep.subr.bf16.mxu0 %v1345
    %1562 = vmatpush1.bf16.msra.mxu0 %v1344
    %1563 = vmatprep.subr.bf16.mxu0 %v1347
    %1564 = vmatpush1.bf16.msra.mxu0 %v1346
    %1565 = vmatprep.subr.bf16.mxu0 %v1349
    %1566 = vmatpush1.bf16.msra.mxu0 %v1348
    %1567 = vmatprep.subr.bf16.mxu0 %v1351
    %1568 = vmatpush1.bf16.msra.mxu0 %v1350
    %1569 = vmatprep.subr.bf16.mxu0 %v1353
    %1570 = vmatpush1.bf16.msra.mxu0 %v1352
    %1571 = vmatprep.subr.bf16.mxu0 %v1355
    %1572 = vmatpush1.bf16.msra.mxu0 %v1354
    %1573 = vmatprep.subr.bf16.mxu0 %v1357
    %1574 = vmatpush1.bf16.msra.mxu0 %v1356
    %1575 = vmatprep.subr.bf16.mxu0 %v1359
    %1576 = vmatpush1.bf16.msra.mxu0 %v1358
    %1577 = vmatprep.subr.bf16.mxu0 %v1361
    %1578 = vmatpush1.bf16.msra.mxu0 %v1360
    %1579 = vmatprep.subr.bf16.mxu0 %v1363
    %1580 = vmatpush1.bf16.msra.mxu0 %v1362
    %1581 = vmatprep.subr.bf16.mxu0 %v1365
    %1582 = vmatpush1.bf16.msra.mxu0 %v1364
    %1583 = vmatprep.subr.bf16.mxu0 %v1367
    %1584 = vmatpush1.bf16.msra.mxu0 %v1366
    %1585 = vmatprep.subr.bf16.mxu0 %v1369
    %1586 = vmatpush1.bf16.msra.mxu0 %v1368
    %1587 = vmatprep.mubr.bf16.mxu0 %v96
    %1588 = vmatmul.mubr.bf16.gmra.mrb[0].mxu0 %v95
    %v1589 = vpop.f32.mrb[0].mxu0
    %v1590 = vadd.f32 %v1549, %v1589
    %v1591 = vpop.f32.mrb[0].mxu0
    %v1592 = vadd.f32 %v1551, %v1591
    %v1593 = vpop.f32.mrb[0].mxu0
    %v1594 = vpop.f32.mrb[0].mxu0
    %1595 = vdwg.mxu0
    %1596 = vmatprep.subr.bf16.mxu0 %v1371
    %1597 = vmatpush1.bf16.msra.mxu0 %v1370
    %1598 = vmatprep.subr.bf16.mxu0 0
    %1599 = vmatpush1.bf16.msra.mxu0 0
    %1600 = vmatprep.subr.bf16.mxu0 0
    %1601 = vmatpush1.bf16.msra.mxu0 0
    %1602 = vmatprep.subr.bf16.mxu0 0
    %1603 = vmatpush1.bf16.msra.mxu0 0
    %1604 = vmatprep.subr.bf16.mxu0 0
    %1605 = vmatpush1.bf16.msra.mxu0 0
    %1606 = vmatprep.subr.bf16.mxu0 0
    %1607 = vmatpush1.bf16.msra.mxu0 0
    %1608 = vmatprep.subr.bf16.mxu0 0
    %1609 = vmatpush1.bf16.msra.mxu0 0
    %1610 = vmatprep.subr.bf16.mxu0 0
    %1611 = vmatpush1.bf16.msra.mxu0 0
    %1612 = vmatprep.subr.bf16.mxu0 0
    %1613 = vmatpush1.bf16.msra.mxu0 0
    %1614 = vmatprep.subr.bf16.mxu0 0
    %1615 = vmatpush1.bf16.msra.mxu0 0
    %1616 = vmatprep.subr.bf16.mxu0 0
    %1617 = vmatpush1.bf16.msra.mxu0 0
    %1618 = vmatprep.subr.bf16.mxu0 0
    %1619 = vmatpush1.bf16.msra.mxu0 0
    %1620 = vmatprep.subr.bf16.mxu0 0
    %1621 = vmatpush1.bf16.msra.mxu0 0
    %1622 = vmatprep.subr.bf16.mxu0 0
    %1623 = vmatpush1.bf16.msra.mxu0 0
    %1624 = vmatprep.subr.bf16.mxu0 0
    %1625 = vmatpush1.bf16.msra.mxu0 0
    %1626 = vmatprep.subr.bf16.mxu0 0
    %1627 = vmatpush1.bf16.msra.mxu0 0
    %1628 = vmatprep.mubr.bf16.mxu0 0
    %1629 = vmatmul.mubr.bf16.gmra.mrb[0].mxu0 %v1471
    %v1630 = vpop.f32.mrb[0].mxu0
    %v1631 = vadd.f32 %v1590, %v1630
    %v1632 = vpop.f32.mrb[0].mxu0
    %v1633 = vadd.f32 %v1592, %v1632
    %v1634 = vpop.f32.mrb[0].mxu0
    %v1635 = vpop.f32.mrb[0].mxu0
    %1636 = vdwg.mxu0
    %v1637 = vmul.f32 %v83, 1.6666666
    %v1638 = vmul.f32 %v84, 1.6666666
    %v1639 = vmul.f32 %v85, 1.6666666
    %v1640 = vmul.f32 %v86, 1.6666666
    %v1641 = vmul.f32 %v87, 1.6666666
    %v1642 = vmul.f32 %v88, 1.6666666
    %v1643 = vmul.f32 %v89, 1.6666666
    %v1644 = vmul.f32 %v1637, %v210
    %v1645 = vmul.f32 %v1638, %v211
    %v1646 = vmul.f32 %v1639, %v212
    %v1647 = vmul.f32 %v1640, %v213
    %v1648 = vmul.f32 %v1641, %v214
    %v1649 = vmul.f32 %v1642, %v215
    %v1650 = vmul.f32 %v1643, %v216
    %v1651 = vmul.f32 %v83, 0.6666667
    %v1652 = vmul.f32 %v84, 0.6666667
    %v1653 = vmul.f32 %v85, 0.6666667
    %v1654 = vmul.f32 %v86, 0.6666667
    %v1655 = vmul.f32 %v87, 0.6666667
    %v1656 = vmul.f32 %v88, 0.6666667
    %v1657 = vmul.f32 %v89, 0.6666667
    %v1658 = vsub.f32 %v1644, %v1651
    %v1659 = vsub.f32 %v1645, %v1652
    %v1660 = vsub.f32 %v1646, %v1653
    %v1661 = vsub.f32 %v1647, %v1654
    %v1662 = vsub.f32 %v1648, %v1655
    %v1663 = vsub.f32 %v1649, %v1656
    %v1664 = vsub.f32 %v1650, %v1657
    %v1665 = vpack.c.bf16 %v1658, %v1658
    %v1666 = vpack.c.bf16 %v1659, %v1659
    %v1667 = vpack.c.bf16 %v1660, %v1660
    %v1668 = vpack.c.bf16 %v1661, %v1661
    %v1669 = vpack.c.bf16 %v1662, %v1662
    %v1670 = vpack.c.bf16 %v1663, %v1663
    %v1671 = vpack.c.bf16 %v1664, %v1664
    %v1672 = vld [vmem:[#allocation2 + $0x620] sm:$0xff]
    %v1673 = vld [vmem:[#allocation2 + $0x628] sm:$0xff]
    %v1674 = vld [vmem:[#allocation2 + $0x630] sm:$0xff]
    %v1675 = vld [vmem:[#allocation2 + $0x638] sm:$0xff]
    %v1676 = vld [vmem:[#allocation2 + $0x640] sm:$0xff]
    %v1677 = vld [vmem:[#allocation2 + $0x648] sm:$0xff]
    %v1678 = vld [vmem:[#allocation2 + $0x650] sm:$0xff]
    %v1679 = vld [vmem:[#allocation2 + $0x658] sm:$0xff]
    %v1680 = vld [vmem:[#allocation2 + $0x660] sm:$0xff]
    %v1681 = vld [vmem:[#allocation2 + $0x668] sm:$0xff]
    %v1682 = vld [vmem:[#allocation2 + $0x670] sm:$0xff]
    %v1683 = vld [vmem:[#allocation2 + $0x678] sm:$0xff]
    %v1684 = vld [vmem:[#allocation2 + $0x680] sm:$0xff]
    %v1685 = vld [vmem:[#allocation2 + $0x688] sm:$0xff]
    %v1686 = vld [vmem:[#allocation2 + $0x690] sm:$0xff]
    %v1687 = vld [vmem:[#allocation2 + $0x698] sm:$0xff]
    %v1688 = vld [vmem:[#allocation2 + $0x6a0] sm:$0xff]
    %v1689 = vld [vmem:[#allocation2 + $0x6a8] sm:$0xff]
    %v1690 = vld [vmem:[#allocation2 + $0x6b0] sm:$0xff]
    %v1691 = vld [vmem:[#allocation2 + $0x6b8] sm:$0xff]
    %v1692 = vld [vmem:[#allocation2 + $0x6c0] sm:$0xff]
    %v1693 = vld [vmem:[#allocation2 + $0x6c8] sm:$0xff]
    %v1694 = vld [vmem:[#allocation2 + $0x6d0] sm:$0xff]
    %v1695 = vld [vmem:[#allocation2 + $0x6d8] sm:$0xff]
    %v1696 = vld [vmem:[#allocation2 + $0x6e0] sm:$0xff]
    %v1697 = vld [vmem:[#allocation2 + $0x6e8] sm:$0xff]
    %v1698 = vld [vmem:[#allocation2 + $0x6f0] sm:$0xff]
    %v1699 = vld [vmem:[#allocation2 + $0x6f8] sm:$0xff]
    %v1700 = vld [vmem:[#allocation2 + $0x700] sm:$0xff]
    %v1701 = vld [vmem:[#allocation2 + $0x708] sm:$0xff]
    %v1702 = vld [vmem:[#allocation2 + $0x710] sm:$0xff]
    %v1703 = vld [vmem:[#allocation2 + $0x718] sm:$0xff]
    %v1704 = vld [vmem:[#allocation2 + $0x720] sm:$0xff]
    %v1705 = vld [vmem:[#allocation2 + $0x728] sm:$0xff]
    %v1706 = vld [vmem:[#allocation2 + $0x730] sm:$0xff]
    %v1707 = vld [vmem:[#allocation2 + $0x738] sm:$0xff]
    %v1708 = vld [vmem:[#allocation2 + $0x740] sm:$0xff]
    %v1709 = vld [vmem:[#allocation2 + $0x748] sm:$0xff]
    %v1710 = vld [vmem:[#allocation2 + $0x750] sm:$0xff]
    %v1711 = vld [vmem:[#allocation2 + $0x758] sm:$0xff]
    %v1712 = vld [vmem:[#allocation2 + $0x760] sm:$0xff]
    %v1713 = vld [vmem:[#allocation2 + $0x768] sm:$0xff]
    %v1714 = vld [vmem:[#allocation2 + $0x770] sm:$0xff]
    %v1715 = vld [vmem:[#allocation2 + $0x778] sm:$0xff]
    %v1716 = vld [vmem:[#allocation2 + $0x780] sm:$0xff]
    %v1717 = vld [vmem:[#allocation2 + $0x788] sm:$0xff]
    %v1718 = vld [vmem:[#allocation2 + $0x790] sm:$0xff]
    %v1719 = vld [vmem:[#allocation2 + $0x798] sm:$0xff]
    %v1720 = vld [vmem:[#allocation2 + $0x7a0] sm:$0xff]
    %v1721 = vld [vmem:[#allocation2 + $0x7a8] sm:$0xff]
    %v1722 = vld [vmem:[#allocation2 + $0x7b0] sm:$0xff]
    %v1723 = vld [vmem:[#allocation2 + $0x7b8] sm:$0xff]
    %v1724 = vld [vmem:[#allocation2 + $0x7c0] sm:$0xff]
    %v1725 = vld [vmem:[#allocation2 + $0x7c8] sm:$0xff]
    %v1726 = vld [vmem:[#allocation2 + $0x7d0] sm:$0xff]
    %v1727 = vld [vmem:[#allocation2 + $0x7d8] sm:$0xff]
    %v1728 = vld [vmem:[#allocation2 + $0x7e0] sm:$0xff]
    %v1729 = vld [vmem:[#allocation2 + $0x7e8] sm:$0xff]
    %v1730 = vld [vmem:[#allocation2 + $0x7f0] sm:$0xff]
    %v1731 = vld [vmem:[#allocation2 + $0x7f8] sm:$0xff]
    %v1732 = vld [vmem:[#allocation2 + $0x800] sm:$0xff]
    %v1733 = vld [vmem:[#allocation2 + $0x808] sm:$0xff]
    %v1734 = vld [vmem:[#allocation2 + $0x810] sm:$0xff]
    %v1735 = vld [vmem:[#allocation2 + $0x818] sm:$0xff]
    %v1736 = vld [vmem:[#allocation2 + $0x820] sm:$0xff]
    %v1737 = vld [vmem:[#allocation2 + $0x828] sm:$0xff]
    %v1738 = vld [vmem:[#allocation2 + $0x830] sm:$0xff]
    %v1739 = vld [vmem:[#allocation2 + $0x838] sm:$0xff]
    %v1740 = vld [vmem:[#allocation2 + $0x840] sm:$0xff]
    %v1741 = vld [vmem:[#allocation2 + $0x848] sm:$0xff]
    %v1742 = vld [vmem:[#allocation2 + $0x850] sm:$0xff]
    %v1743 = vld [vmem:[#allocation2 + $0x858] sm:$0xff]
    %v1744 = vld [vmem:[#allocation2 + $0x860] sm:$0xff]
    %v1745 = vld [vmem:[#allocation2 + $0x868] sm:$0xff]
    %v1746 = vld [vmem:[#allocation2 + $0x870] sm:$0xff]
    %v1747 = vld [vmem:[#allocation2 + $0x878] sm:$0xff]
    %v1748 = vld [vmem:[#allocation2 + $0x880] sm:$0xff]
    %v1749 = vld [vmem:[#allocation2 + $0x888] sm:$0xff]
    %v1750 = vld [vmem:[#allocation2 + $0x890] sm:$0xff]
    %v1751 = vld [vmem:[#allocation2 + $0x898] sm:$0xff]
    %v1752 = vld [vmem:[#allocation2 + $0x8a0] sm:$0xff]
    %v1753 = vld [vmem:[#allocation2 + $0x8a8] sm:$0xff]
    %v1754 = vld [vmem:[#allocation2 + $0x8b0] sm:$0xff]
    %v1755 = vld [vmem:[#allocation2 + $0x8b8] sm:$0xff]
    %v1756 = vld [vmem:[#allocation2 + $0x8c0] sm:$0xff]
    %v1757 = vld [vmem:[#allocation2 + $0x8c8] sm:$0xff]
    %v1758 = vld [vmem:[#allocation2 + $0x8d0] sm:$0xff]
    %v1759 = vld [vmem:[#allocation2 + $0x8d8] sm:$0xff]
    %v1760 = vld [vmem:[#allocation2 + $0x8e0] sm:$0xff]
    %v1761 = vld [vmem:[#allocation2 + $0x8e8] sm:$0xff]
    %v1762 = vld [vmem:[#allocation2 + $0x8f0] sm:$0xff]
    %v1763 = vld [vmem:[#allocation2 + $0x8f8] sm:$0xff]
    %v1764 = vld [vmem:[#allocation2 + $0x900] sm:$0xff]
    %v1765 = vld [vmem:[#allocation2 + $0x908] sm:$0xff]
    %v1766 = vld [vmem:[#allocation2 + $0x910] sm:$0xff]
    %v1767 = vld [vmem:[#allocation2 + $0x918] sm:$0xff]
    %v1768 = vld [vmem:[#allocation2 + $0x920] sm:$0xff]
    %v1769 = vld [vmem:[#allocation2 + $0x928] sm:$0xff]
    %v1868 = vunpack.c.l.b16 %v1672
    %v1869 = vunpack.c.h.b16 %v1672
    %v1870 = vunpack.c.l.b16 %v1673
    %v1871 = vunpack.c.h.b16 %v1673
    %v1872 = vunpack.c.l.b16 %v1674
    %v1873 = vunpack.c.h.b16 %v1674
    %v1874 = vunpack.c.l.b16 %v1675
    %v1875 = vunpack.c.h.b16 %v1675
    %v1876 = vunpack.c.l.b16 %v1676
    %v1877 = vunpack.c.h.b16 %v1676
    %v1878 = vunpack.c.l.b16 %v1677
    %v1879 = vunpack.c.h.b16 %v1677
    %v1880 = vunpack.c.l.b16 %v1678
    %v1881 = vunpack.c.h.b16 %v1678
    %v1882 = vunpack.c.l.b16 %v1679
    %v1883 = vunpack.c.h.b16 %v1679
    %v1884 = vunpack.c.l.b16 %v1680
    %v1885 = vunpack.c.h.b16 %v1680
    %v1886 = vunpack.c.l.b16 %v1681
    %v1887 = vunpack.c.h.b16 %v1681
    %v1888 = vunpack.c.l.b16 %v1682
    %v1889 = vunpack.c.h.b16 %v1682
    %v1890 = vunpack.c.l.b16 %v1683
    %v1891 = vunpack.c.h.b16 %v1683
    %v1892 = vunpack.c.l.b16 %v1684
    %v1893 = vunpack.c.h.b16 %v1684
    %v1894 = vunpack.c.l.b16 %v1685
    %v1895 = vunpack.c.h.b16 %v1685
    %v1896 = vunpack.c.l.b16 %v1686
    %v1897 = vunpack.c.h.b16 %v1686
    %v1898 = vunpack.c.l.b16 %v1687
    %v1899 = vunpack.c.h.b16 %v1687
    %v1900 = vunpack.c.l.b16 %v1688
    %v1901 = vunpack.c.h.b16 %v1688
    %v1902 = vunpack.c.l.b16 %v1689
    %v1903 = vunpack.c.h.b16 %v1689
    %v1904 = vunpack.c.l.b16 %v1690
    %v1905 = vunpack.c.h.b16 %v1690
    %v1906 = vunpack.c.l.b16 %v1691
    %v1907 = vunpack.c.h.b16 %v1691
    %v1908 = vunpack.c.l.b16 %v1692
    %v1909 = vunpack.c.h.b16 %v1692
    %v1910 = vunpack.c.l.b16 %v1693
    %v1911 = vunpack.c.h.b16 %v1693
    %v1912 = vunpack.c.l.b16 %v1694
    %v1913 = vunpack.c.h.b16 %v1694
    %v1914 = vunpack.c.l.b16 %v1695
    %v1915 = vunpack.c.h.b16 %v1695
    %v1916 = vunpack.c.l.b16 %v1696
    %v1917 = vunpack.c.h.b16 %v1696
    %v1918 = vunpack.c.l.b16 %v1697
    %v1919 = vunpack.c.h.b16 %v1697
    %v1920 = vunpack.c.l.b16 %v1698
    %v1921 = vunpack.c.h.b16 %v1698
    %v1922 = vunpack.c.l.b16 %v1699
    %v1923 = vunpack.c.h.b16 %v1699
    %v1924 = vunpack.c.l.b16 %v1700
    %v1925 = vunpack.c.h.b16 %v1700
    %v1926 = vunpack.c.l.b16 %v1701
    %v1927 = vunpack.c.h.b16 %v1701
    %v1928 = vunpack.c.l.b16 %v1702
    %v1929 = vunpack.c.h.b16 %v1702
    %v1930 = vunpack.c.l.b16 %v1703
    %v1931 = vunpack.c.h.b16 %v1703
    %v1932 = vunpack.c.l.b16 %v1704
    %v1933 = vunpack.c.h.b16 %v1704
    %v1934 = vunpack.c.l.b16 %v1705
    %v1935 = vunpack.c.h.b16 %v1705
    %v1936 = vunpack.c.l.b16 %v1706
    %v1937 = vunpack.c.h.b16 %v1706
    %v1938 = vunpack.c.l.b16 %v1707
    %v1939 = vunpack.c.h.b16 %v1707
    %v1940 = vunpack.c.l.b16 %v1708
    %v1941 = vunpack.c.h.b16 %v1708
    %v1942 = vunpack.c.l.b16 %v1709
    %v1943 = vunpack.c.h.b16 %v1709
    %v1944 = vunpack.c.l.b16 %v1710
    %v1945 = vunpack.c.h.b16 %v1710
    %v1946 = vunpack.c.l.b16 %v1711
    %v1947 = vunpack.c.h.b16 %v1711
    %v1948 = vunpack.c.l.b16 %v1712
    %v1949 = vunpack.c.h.b16 %v1712
    %v1950 = vunpack.c.l.b16 %v1713
    %v1951 = vunpack.c.h.b16 %v1713
    %v1952 = vunpack.c.l.b16 %v1714
    %v1953 = vunpack.c.h.b16 %v1714
    %v1954 = vunpack.c.l.b16 %v1715
    %v1955 = vunpack.c.h.b16 %v1715
    %v1956 = vunpack.c.l.b16 %v1716
    %v1957 = vunpack.c.h.b16 %v1716
    %v1958 = vunpack.c.l.b16 %v1717
    %v1959 = vunpack.c.h.b16 %v1717
    %v1960 = vunpack.c.l.b16 %v1718
    %v1961 = vunpack.c.h.b16 %v1718
    %v1962 = vunpack.c.l.b16 %v1719
    %v1963 = vunpack.c.h.b16 %v1719
    %v1964 = vunpack.c.l.b16 %v1720
    %v1965 = vunpack.c.h.b16 %v1720
    %v1966 = vunpack.c.l.b16 %v1721
    %v1967 = vunpack.c.h.b16 %v1721
    %v1968 = vunpack.c.l.b16 %v1722
    %v1969 = vunpack.c.h.b16 %v1722
    %v1970 = vunpack.c.l.b16 %v1723
    %v1971 = vunpack.c.h.b16 %v1723
    %v1972 = vunpack.c.l.b16 %v1724
    %v1973 = vunpack.c.h.b16 %v1724
    %v1974 = vunpack.c.l.b16 %v1725
    %v1975 = vunpack.c.h.b16 %v1725
    %v1976 = vunpack.c.l.b16 %v1726
    %v1977 = vunpack.c.h.b16 %v1726
    %v1978 = vunpack.c.l.b16 %v1727
    %v1979 = vunpack.c.h.b16 %v1727
    %v1980 = vunpack.c.l.b16 %v1728
    %v1981 = vunpack.c.h.b16 %v1728
    %v1982 = vunpack.c.l.b16 %v1729
    %v1983 = vunpack.c.h.b16 %v1729
    %v1984 = vunpack.c.l.b16 %v1730
    %v1985 = vunpack.c.h.b16 %v1730
    %v1986 = vunpack.c.l.b16 %v1731
    %v1987 = vunpack.c.h.b16 %v1731
    %v1988 = vunpack.c.l.b16 %v1732
    %v1989 = vunpack.c.h.b16 %v1732
    %v1990 = vunpack.c.l.b16 %v1733
    %v1991 = vunpack.c.h.b16 %v1733
    %v1992 = vunpack.c.l.b16 %v1734
    %v1993 = vunpack.c.h.b16 %v1734
    %v1994 = vunpack.c.l.b16 %v1735
    %v1995 = vunpack.c.h.b16 %v1735
    %v1996 = vunpack.c.l.b16 %v1736
    %v1997 = vunpack.c.h.b16 %v1736
    %v1998 = vunpack.c.l.b16 %v1737
    %v1999 = vunpack.c.h.b16 %v1737
    %v2000 = vunpack.c.l.b16 %v1738
    %v2001 = vunpack.c.h.b16 %v1738
    %v2002 = vunpack.c.l.b16 %v1739
    %v2003 = vunpack.c.h.b16 %v1739
    %v2004 = vunpack.c.l.b16 %v1740
    %v2005 = vunpack.c.h.b16 %v1740
    %v2006 = vunpack.c.l.b16 %v1741
    %v2007 = vunpack.c.h.b16 %v1741
    %v2008 = vunpack.c.l.b16 %v1742
    %v2009 = vunpack.c.h.b16 %v1742
    %v2010 = vunpack.c.l.b16 %v1743
    %v2011 = vunpack.c.h.b16 %v1743
    %v2012 = vunpack.c.l.b16 %v1744
    %v2013 = vunpack.c.h.b16 %v1744
    %v2014 = vunpack.c.l.b16 %v1745
    %v2015 = vunpack.c.h.b16 %v1745
    %v2016 = vunpack.c.l.b16 %v1746
    %v2017 = vunpack.c.h.b16 %v1746
    %v2018 = vunpack.c.l.b16 %v1747
    %v2019 = vunpack.c.h.b16 %v1747
    %v2020 = vunpack.c.l.b16 %v1748
    %v2021 = vunpack.c.h.b16 %v1748
    %v2022 = vunpack.c.l.b16 %v1749
    %v2023 = vunpack.c.h.b16 %v1749
    %v2024 = vunpack.c.l.b16 %v1750
    %v2025 = vunpack.c.h.b16 %v1750
    %v2026 = vunpack.c.l.b16 %v1751
    %v2027 = vunpack.c.h.b16 %v1751
    %v2028 = vunpack.c.l.b16 %v1752
    %v2029 = vunpack.c.h.b16 %v1752
    %v2030 = vunpack.c.l.b16 %v1753
    %v2031 = vunpack.c.h.b16 %v1753
    %v2032 = vunpack.c.l.b16 %v1754
    %v2033 = vunpack.c.h.b16 %v1754
    %v2034 = vunpack.c.l.b16 %v1755
    %v2035 = vunpack.c.h.b16 %v1755
    %v2036 = vunpack.c.l.b16 %v1756
    %v2037 = vunpack.c.h.b16 %v1756
    %v2038 = vunpack.c.l.b16 %v1757
    %v2039 = vunpack.c.h.b16 %v1757
    %v2040 = vunpack.c.l.b16 %v1758
    %v2041 = vunpack.c.h.b16 %v1758
    %v2042 = vunpack.c.l.b16 %v1759
    %v2043 = vunpack.c.h.b16 %v1759
    %v2044 = vunpack.c.l.b16 %v1760
    %v2045 = vunpack.c.h.b16 %v1760
    %v2046 = vunpack.c.l.b16 %v1761
    %v2047 = vunpack.c.h.b16 %v1761
    %v2048 = vunpack.c.l.b16 %v1762
    %v2049 = vunpack.c.h.b16 %v1762
    %v2050 = vunpack.c.l.b16 %v1763
    %v2051 = vunpack.c.h.b16 %v1763
    %v2052 = vunpack.c.l.b16 %v1764
    %v2053 = vunpack.c.h.b16 %v1764
    %v2054 = vunpack.c.l.b16 %v1765
    %v2055 = vunpack.c.h.b16 %v1765
    %v2056 = vunpack.c.l.b16 %v1766
    %v2057 = vunpack.c.h.b16 %v1766
    %v2058 = vunpack.c.l.b16 %v1767
    %v2059 = vunpack.c.h.b16 %v1767
    %v2060 = vunpack.c.l.b16 %v1768
    %v2061 = vunpack.c.h.b16 %v1768
    %v2062 = vunpack.c.l.b16 %v1769
    %v2063 = vunpack.c.h.b16 %v1769
    %v2064 = vpack.c.b16 %v1870, %v1868
    %v2065 = vpack.c.b16 %v1871, %v1869
    %v2066 = vpack.c.b16 %v1874, %v1872
    %v2067 = vpack.c.b16 %v1875, %v1873
    %v2068 = vpack.c.b16 %v1878, %v1876
    %v2069 = vpack.c.b16 %v1879, %v1877
    %v2070 = vpack.c.b16 %v1882, %v1880
    %v2071 = vpack.c.b16 %v1883, %v1881
    %v2072 = vpack.c.b16 %v1886, %v1884
    %v2073 = vpack.c.b16 %v1887, %v1885
    %v2074 = vpack.c.b16 %v1890, %v1888
    %v2075 = vpack.c.b16 %v1891, %v1889
    %v2076 = vpack.c.b16 %v1894, %v1892
    %v2077 = vpack.c.b16 %v1895, %v1893
    %v2078 = vpack.c.b16 %v1898, %v1896
    %v2079 = vpack.c.b16 %v1899, %v1897
    %v2080 = vpack.c.b16 %v1902, %v1900
    %v2081 = vpack.c.b16 %v1903, %v1901
    %v2082 = vpack.c.b16 %v1906, %v1904
    %v2083 = vpack.c.b16 %v1907, %v1905
    %v2084 = vpack.c.b16 %v1910, %v1908
    %v2085 = vpack.c.b16 %v1911, %v1909
    %v2086 = vpack.c.b16 %v1914, %v1912
    %v2087 = vpack.c.b16 %v1915, %v1913
    %v2088 = vpack.c.b16 %v1918, %v1916
    %v2089 = vpack.c.b16 %v1919, %v1917
    %v2090 = vpack.c.b16 %v1922, %v1920
    %v2091 = vpack.c.b16 %v1923, %v1921
    %v2092 = vpack.c.b16 %v1926, %v1924
    %v2093 = vpack.c.b16 %v1927, %v1925
    %v2094 = vpack.c.b16 %v1930, %v1928
    %v2095 = vpack.c.b16 %v1931, %v1929
    %v2096 = vpack.c.b16 %v1934, %v1932
    %v2097 = vpack.c.b16 %v1935, %v1933
    %v2098 = vpack.c.b16 %v1938, %v1936
    %v2099 = vpack.c.b16 %v1939, %v1937
    %v2100 = vpack.c.b16 %v1942, %v1940
    %v2101 = vpack.c.b16 %v1943, %v1941
    %v2102 = vpack.c.b16 %v1946, %v1944
    %v2103 = vpack.c.b16 %v1947, %v1945
    %v2104 = vpack.c.b16 %v1950, %v1948
    %v2105 = vpack.c.b16 %v1951, %v1949
    %v2106 = vpack.c.b16 %v1954, %v1952
    %v2107 = vpack.c.b16 %v1955, %v1953
    %v2108 = vpack.c.b16 %v1958, %v1956
    %v2109 = vpack.c.b16 %v1959, %v1957
    %v2110 = vpack.c.b16 %v1962, %v1960
    %v2111 = vpack.c.b16 %v1963, %v1961
    %v2112 = vpack.c.b16 %v1966, %v1964
    %v2113 = vpack.c.b16 %v1967, %v1965
    %v2114 = vpack.c.b16 %v1970, %v1968
    %v2115 = vpack.c.b16 %v1971, %v1969
    %v2116 = vpack.c.b16 %v1974, %v1972
    %v2117 = vpack.c.b16 %v1975, %v1973
    %v2118 = vpack.c.b16 %v1978, %v1976
    %v2119 = vpack.c.b16 %v1979, %v1977
    %v2120 = vpack.c.b16 %v1982, %v1980
    %v2121 = vpack.c.b16 %v1983, %v1981
    %v2122 = vpack.c.b16 %v1986, %v1984
    %v2123 = vpack.c.b16 %v1987, %v1985
    %v2124 = vpack.c.b16 %v1990, %v1988
    %v2125 = vpack.c.b16 %v1991, %v1989
    %v2126 = vpack.c.b16 %v1994, %v1992
    %v2127 = vpack.c.b16 %v1995, %v1993
    %v2128 = vpack.c.b16 %v1998, %v1996
    %v2129 = vpack.c.b16 %v1999, %v1997
    %v2130 = vpack.c.b16 %v2002, %v2000
    %v2131 = vpack.c.b16 %v2003, %v2001
    %v2132 = vpack.c.b16 %v2006, %v2004
    %v2133 = vpack.c.b16 %v2007, %v2005
    %v2134 = vpack.c.b16 %v2010, %v2008
    %v2135 = vpack.c.b16 %v2011, %v2009
    %v2136 = vpack.c.b16 %v2014, %v2012
    %v2137 = vpack.c.b16 %v2015, %v2013
    %v2138 = vpack.c.b16 %v2018, %v2016
    %v2139 = vpack.c.b16 %v2019, %v2017
    %v2140 = vpack.c.b16 %v2022, %v2020
    %v2141 = vpack.c.b16 %v2023, %v2021
    %v2142 = vpack.c.b16 %v2026, %v2024
    %v2143 = vpack.c.b16 %v2027, %v2025
    %v2144 = vpack.c.b16 %v2030, %v2028
    %v2145 = vpack.c.b16 %v2031, %v2029
    %v2146 = vpack.c.b16 %v2034, %v2032
    %v2147 = vpack.c.b16 %v2035, %v2033
    %v2148 = vpack.c.b16 %v2038, %v2036
    %v2149 = vpack.c.b16 %v2039, %v2037
    %v2150 = vpack.c.b16 %v2042, %v2040
    %v2151 = vpack.c.b16 %v2043, %v2041
    %v2152 = vpack.c.b16 %v2046, %v2044
    %v2153 = vpack.c.b16 %v2047, %v2045
    %v2154 = vpack.c.b16 %v2050, %v2048
    %v2155 = vpack.c.b16 %v2051, %v2049
    %v2156 = vpack.c.b16 %v2054, %v2052
    %v2157 = vpack.c.b16 %v2055, %v2053
    %v2158 = vpack.c.b16 %v2058, %v2056
    %v2159 = vpack.c.b16 %v2059, %v2057
    %v2160 = vpack.c.b16 %v2062, %v2060
    %v2161 = vpack.c.b16 %v2063, %v2061
    %v2261 = vsel %vm812, %v1671, 0
    %2263 = vmatprep.subr.bf16.mxu0 %v2065
    %2264 = vmatpush1.bf16.msra.mxu0 %v2064
    %2265 = vmatprep.subr.bf16.mxu0 %v2067
    %2266 = vmatpush1.bf16.msra.mxu0 %v2066
    %2267 = vmatprep.subr.bf16.mxu0 %v2069
    %2268 = vmatpush1.bf16.msra.mxu0 %v2068
    %2269 = vmatprep.subr.bf16.mxu0 %v2071
    %2270 = vmatpush1.bf16.msra.mxu0 %v2070
    %2271 = vmatprep.subr.bf16.mxu0 %v2073
    %2272 = vmatpush1.bf16.msra.mxu0 %v2072
    %2273 = vmatprep.subr.bf16.mxu0 %v2075
    %2274 = vmatpush1.bf16.msra.mxu0 %v2074
    %2275 = vmatprep.subr.bf16.mxu0 %v2077
    %2276 = vmatpush1.bf16.msra.mxu0 %v2076
    %2277 = vmatprep.subr.bf16.mxu0 %v2079
    %2278 = vmatpush1.bf16.msra.mxu0 %v2078
    %2279 = vmatprep.subr.bf16.mxu0 %v2081
    %2280 = vmatpush1.bf16.msra.mxu0 %v2080
    %2281 = vmatprep.subr.bf16.mxu0 %v2083
    %2282 = vmatpush1.bf16.msra.mxu0 %v2082
    %2283 = vmatprep.subr.bf16.mxu0 %v2085
    %2284 = vmatpush1.bf16.msra.mxu0 %v2084
    %2285 = vmatprep.subr.bf16.mxu0 %v2087
    %2286 = vmatpush1.bf16.msra.mxu0 %v2086
    %2287 = vmatprep.subr.bf16.mxu0 %v2089
    %2288 = vmatpush1.bf16.msra.mxu0 %v2088
    %2289 = vmatprep.subr.bf16.mxu0 %v2091
    %2290 = vmatpush1.bf16.msra.mxu0 %v2090
    %2291 = vmatprep.subr.bf16.mxu0 %v2093
    %2292 = vmatpush1.bf16.msra.mxu0 %v2092
    %2293 = vmatprep.subr.bf16.mxu0 %v2095
    %2294 = vmatpush1.bf16.msra.mxu0 %v2094
    %2295 = vmatprep.mubr.bf16.mxu0 %v1666
    %2296 = vmatmul.mubr.bf16.gmra.mrb[0].mxu0 %v1665
    %v2297 = vpop.f32.mrb[0].mxu0
    %v2298 = vadd.f32 0.0, %v2297
    %v2299 = vpop.f32.mrb[0].mxu0
    %v2300 = vadd.f32 0.0, %v2299
    %v2301 = vpop.f32.mrb[0].mxu0
    %v2302 = vpop.f32.mrb[0].mxu0
    %2303 = vdwg.mxu0
    %2304 = vmatprep.subr.bf16.mxu0 %v2097
    %2305 = vmatpush1.bf16.msra.mxu0 %v2096
    %2306 = vmatprep.subr.bf16.mxu0 %v2099
    %2307 = vmatpush1.bf16.msra.mxu0 %v2098
    %2308 = vmatprep.subr.bf16.mxu0 %v2101
    %2309 = vmatpush1.bf16.msra.mxu0 %v2100
    %2310 = vmatprep.subr.bf16.mxu0 %v2103
    %2311 = vmatpush1.bf16.msra.mxu0 %v2102
    %2312 = vmatprep.subr.bf16.mxu0 %v2105
    %2313 = vmatpush1.bf16.msra.mxu0 %v2104
    %2314 = vmatprep.subr.bf16.mxu0 %v2107
    %2315 = vmatpush1.bf16.msra.mxu0 %v2106
    %2316 = vmatprep.subr.bf16.mxu0 %v2109
    %2317 = vmatpush1.bf16.msra.mxu0 %v2108
    %2318 = vmatprep.subr.bf16.mxu0 %v2111
    %2319 = vmatpush1.bf16.msra.mxu0 %v2110
    %2320 = vmatprep.subr.bf16.mxu0 %v2113
    %2321 = vmatpush1.bf16.msra.mxu0 %v2112
    %2322 = vmatprep.subr.bf16.mxu0 %v2115
    %2323 = vmatpush1.bf16.msra.mxu0 %v2114
    %2324 = vmatprep.subr.bf16.mxu0 %v2117
    %2325 = vmatpush1.bf16.msra.mxu0 %v2116
    %2326 = vmatprep.subr.bf16.mxu0 %v2119
    %2327 = vmatpush1.bf16.msra.mxu0 %v2118
    %2328 = vmatprep.subr.bf16.mxu0 %v2121
    %2329 = vmatpush1.bf16.msra.mxu0 %v2120
    %2330 = vmatprep.subr.bf16.mxu0 %v2123
    %2331 = vmatpush1.bf16.msra.mxu0 %v2122
    %2332 = vmatprep.subr.bf16.mxu0 %v2125
    %2333 = vmatpush1.bf16.msra.mxu0 %v2124
    %2334 = vmatprep.subr.bf16.mxu0 %v2127
    %2335 = vmatpush1.bf16.msra.mxu0 %v2126
    %2336 = vmatprep.mubr.bf16.mxu0 %v1668
    %2337 = vmatmul.mubr.bf16.gmra.mrb[0].mxu0 %v1667
    %v2338 = vpop.f32.mrb[0].mxu0
    %v2339 = vadd.f32 %v2298, %v2338
    %v2340 = vpop.f32.mrb[0].mxu0
    %v2341 = vadd.f32 %v2300, %v2340
    %v2342 = vpop.f32.mrb[0].mxu0
    %v2343 = vpop.f32.mrb[0].mxu0
    %2344 = vdwg.mxu0
    %2345 = vmatprep.subr.bf16.mxu0 %v2129
    %2346 = vmatpush1.bf16.msra.mxu0 %v2128
    %2347 = vmatprep.subr.bf16.mxu0 %v2131
    %2348 = vmatpush1.bf16.msra.mxu0 %v2130
    %2349 = vmatprep.subr.bf16.mxu0 %v2133
    %2350 = vmatpush1.bf16.msra.mxu0 %v2132
    %2351 = vmatprep.subr.bf16.mxu0 %v2135
    %2352 = vmatpush1.bf16.msra.mxu0 %v2134
    %2353 = vmatprep.subr.bf16.mxu0 %v2137
    %2354 = vmatpush1.bf16.msra.mxu0 %v2136
    %2355 = vmatprep.subr.bf16.mxu0 %v2139
    %2356 = vmatpush1.bf16.msra.mxu0 %v2138
    %2357 = vmatprep.subr.bf16.mxu0 %v2141
    %2358 = vmatpush1.bf16.msra.mxu0 %v2140
    %2359 = vmatprep.subr.bf16.mxu0 %v2143
    %2360 = vmatpush1.bf16.msra.mxu0 %v2142
    %2361 = vmatprep.subr.bf16.mxu0 %v2145
    %2362 = vmatpush1.bf16.msra.mxu0 %v2144
    %2363 = vmatprep.subr.bf16.mxu0 %v2147
    %2364 = vmatpush1.bf16.msra.mxu0 %v2146
    %2365 = vmatprep.subr.bf16.mxu0 %v2149
    %2366 = vmatpush1.bf16.msra.mxu0 %v2148
    %2367 = vmatprep.subr.bf16.mxu0 %v2151
    %2368 = vmatpush1.bf16.msra.mxu0 %v2150
    %2369 = vmatprep.subr.bf16.mxu0 %v2153
    %2370 = vmatpush1.bf16.msra.mxu0 %v2152
    %2371 = vmatprep.subr.bf16.mxu0 %v2155
    %2372 = vmatpush1.bf16.msra.mxu0 %v2154
    %2373 = vmatprep.subr.bf16.mxu0 %v2157
    %2374 = vmatpush1.bf16.msra.mxu0 %v2156
    %2375 = vmatprep.subr.bf16.mxu0 %v2159
    %2376 = vmatpush1.bf16.msra.mxu0 %v2158
    %2377 = vmatprep.mubr.bf16.mxu0 %v1670
    %2378 = vmatmul.mubr.bf16.gmra.mrb[0].mxu0 %v1669
    %v2379 = vpop.f32.mrb[0].mxu0
    %v2380 = vadd.f32 %v2339, %v2379
    %v2381 = vpop.f32.mrb[0].mxu0
    %v2382 = vadd.f32 %v2341, %v2381
    %v2383 = vpop.f32.mrb[0].mxu0
    %v2384 = vpop.f32.mrb[0].mxu0
    %2385 = vdwg.mxu0
    %2386 = vmatprep.subr.bf16.mxu0 %v2161
    %2387 = vmatpush1.bf16.msra.mxu0 %v2160
    %2388 = vmatprep.subr.bf16.mxu0 0
    %2389 = vmatpush1.bf16.msra.mxu0 0
    %2390 = vmatprep.subr.bf16.mxu0 0
    %2391 = vmatpush1.bf16.msra.mxu0 0
    %2392 = vmatprep.subr.bf16.mxu0 0
    %2393 = vmatpush1.bf16.msra.mxu0 0
    %2394 = vmatprep.subr.bf16.mxu0 0
    %2395 = vmatpush1.bf16.msra.mxu0 0
    %2396 = vmatprep.subr.bf16.mxu0 0
    %2397 = vmatpush1.bf16.msra.mxu0 0
    %2398 = vmatprep.subr.bf16.mxu0 0
    %2399 = vmatpush1.bf16.msra.mxu0 0
    %2400 = vmatprep.subr.bf16.mxu0 0
    %2401 = vmatpush1.bf16.msra.mxu0 0
    %2402 = vmatprep.subr.bf16.mxu0 0
    %2403 = vmatpush1.bf16.msra.mxu0 0
    %2404 = vmatprep.subr.bf16.mxu0 0
    %2405 = vmatpush1.bf16.msra.mxu0 0
    %2406 = vmatprep.subr.bf16.mxu0 0
    %2407 = vmatpush1.bf16.msra.mxu0 0
    %2408 = vmatprep.subr.bf16.mxu0 0
    %2409 = vmatpush1.bf16.msra.mxu0 0
    %2410 = vmatprep.subr.bf16.mxu0 0
    %2411 = vmatpush1.bf16.msra.mxu0 0
    %2412 = vmatprep.subr.bf16.mxu0 0
    %2413 = vmatpush1.bf16.msra.mxu0 0
    %2414 = vmatprep.subr.bf16.mxu0 0
    %2415 = vmatpush1.bf16.msra.mxu0 0
    %2416 = vmatprep.subr.bf16.mxu0 0
    %2417 = vmatpush1.bf16.msra.mxu0 0
    %2418 = vmatprep.mubr.bf16.mxu0 0
    %2419 = vmatmul.mubr.bf16.gmra.mrb[0].mxu0 %v2261
    %v2420 = vpop.f32.mrb[0].mxu0
    %v2421 = vadd.f32 %v2380, %v2420
    %v2422 = vpop.f32.mrb[0].mxu0
    %v2423 = vadd.f32 %v2382, %v2422
    %v2424 = vpop.f32.mrb[0].mxu0
    %v2425 = vpop.f32.mrb[0].mxu0
    %2426 = vdwg.mxu0
    %v2427 = vadd.f32 %v1631, %v2421
    %v2428 = vadd.f32 %v1633, %v2423
    %v2429 = vmul.f32 %v83, 1.75
    %v2430 = vmul.f32 %v84, 1.75
    %v2431 = vmul.f32 %v85, 1.75
    %v2432 = vmul.f32 %v86, 1.75
    %v2433 = vmul.f32 %v87, 1.75
    %v2434 = vmul.f32 %v88, 1.75
    %v2435 = vmul.f32 %v89, 1.75
    %v2436 = vmul.f32 %v2429, %v1658
    %v2437 = vmul.f32 %v2430, %v1659
    %v2438 = vmul.f32 %v2431, %v1660
    %v2439 = vmul.f32 %v2432, %v1661
    %v2440 = vmul.f32 %v2433, %v1662
    %v2441 = vmul.f32 %v2434, %v1663
    %v2442 = vmul.f32 %v2435, %v1664
    %v2443 = vmul.f32 %v210, 0.75
    %v2444 = vmul.f32 %v211, 0.75
    %v2445 = vmul.f32 %v212, 0.75
    %v2446 = vmul.f32 %v213, 0.75
    %v2447 = vmul.f32 %v214, 0.75
    %v2448 = vmul.f32 %v215, 0.75
    %v2449 = vmul.f32 %v216, 0.75
    %v2450 = vsub.f32 %v2436, %v2443
    %v2451 = vsub.f32 %v2437, %v2444
    %v2452 = vsub.f32 %v2438, %v2445
    %v2453 = vsub.f32 %v2439, %v2446
    %v2454 = vsub.f32 %v2440, %v2447
    %v2455 = vsub.f32 %v2441, %v2448
    %v2456 = vsub.f32 %v2442, %v2449
    %v2457 = vpack.c.bf16 %v2450, %v2450
    %v2458 = vpack.c.bf16 %v2451, %v2451
    %v2459 = vpack.c.bf16 %v2452, %v2452
    %v2460 = vpack.c.bf16 %v2453, %v2453
    %v2461 = vpack.c.bf16 %v2454, %v2454
    %v2462 = vpack.c.bf16 %v2455, %v2455
    %v2463 = vpack.c.bf16 %v2456, %v2456
    %v2464 = vld [vmem:[#allocation2 + $0x930] sm:$0xff]
    %v2465 = vld [vmem:[#allocation2 + $0x938] sm:$0xff]
    %v2466 = vld [vmem:[#allocation2 + $0x940] sm:$0xff]
    %v2467 = vld [vmem:[#allocation2 + $0x948] sm:$0xff]
    %v2468 = vld [vmem:[#allocation2 + $0x950] sm:$0xff]
    %v2469 = vld [vmem:[#allocation2 + $0x958] sm:$0xff]
    %v2470 = vld [vmem:[#allocation2 + $0x960] sm:$0xff]
    %v2471 = vld [vmem:[#allocation2 + $0x968] sm:$0xff]
    %v2472 = vld [vmem:[#allocation2 + $0x970] sm:$0xff]
    %v2473 = vld [vmem:[#allocation2 + $0x978] sm:$0xff]
    %v2474 = vld [vmem:[#allocation2 + $0x980] sm:$0xff]
    %v2475 = vld [vmem:[#allocation2 + $0x988] sm:$0xff]
    %v2476 = vld [vmem:[#allocation2 + $0x990] sm:$0xff]
    %v2477 = vld [vmem:[#allocation2 + $0x998] sm:$0xff]
    %v2478 = vld [vmem:[#allocation2 + $0x9a0] sm:$0xff]
    %v2479 = vld [vmem:[#allocation2 + $0x9a8] sm:$0xff]
    %v2480 = vld [vmem:[#allocation2 + $0x9b0] sm:$0xff]
    %v2481 = vld [vmem:[#allocation2 + $0x9b8] sm:$0xff]
    %v2482 = vld [vmem:[#allocation2 + $0x9c0] sm:$0xff]
    %v2483 = vld [vmem:[#allocation2 + $0x9c8] sm:$0xff]
    %v2484 = vld [vmem:[#allocation2 + $0x9d0] sm:$0xff]
    %v2485 = vld [vmem:[#allocation2 + $0x9d8] sm:$0xff]
    %v2486 = vld [vmem:[#allocation2 + $0x9e0] sm:$0xff]
    %v2487 = vld [vmem:[#allocation2 + $0x9e8] sm:$0xff]
    %v2488 = vld [vmem:[#allocation2 + $0x9f0] sm:$0xff]
    %v2489 = vld [vmem:[#allocation2 + $0x9f8] sm:$0xff]
    %v2490 = vld [vmem:[#allocation2 + $0xa00] sm:$0xff]
    %v2491 = vld [vmem:[#allocation2 + $0xa08] sm:$0xff]
    %v2492 = vld [vmem:[#allocation2 + $0xa10] sm:$0xff]
    %v2493 = vld [vmem:[#allocation2 + $0xa18] sm:$0xff]
    %v2494 = vld [vmem:[#allocation2 + $0xa20] sm:$0xff]
    %v2495 = vld [vmem:[#allocation2 + $0xa28] sm:$0xff]
    %v2496 = vld [vmem:[#allocation2 + $0xa30] sm:$0xff]
    %v2497 = vld [vmem:[#allocation2 + $0xa38] sm:$0xff]
    %v2498 = vld [vmem:[#allocation2 + $0xa40] sm:$0xff]
    %v2499 = vld [vmem:[#allocation2 + $0xa48] sm:$0xff]
    %v2500 = vld [vmem:[#allocation2 + $0xa50] sm:$0xff]
    %v2501 = vld [vmem:[#allocation2 + $0xa58] sm:$0xff]
    %v2502 = vld [vmem:[#allocation2 + $0xa60] sm:$0xff]
    %v2503 = vld [vmem:[#allocation2 + $0xa68] sm:$0xff]
    %v2504 = vld [vmem:[#allocation2 + $0xa70] sm:$0xff]
    %v2505 = vld [vmem:[#allocation2 + $0xa78] sm:$0xff]
    %v2506 = vld [vmem:[#allocation2 + $0xa80] sm:$0xff]
    %v2507 = vld [vmem:[#allocation2 + $0xa88] sm:$0xff]
    %v2508 = vld [vmem:[#allocation2 + $0xa90] sm:$0xff]
    %v2509 = vld [vmem:[#allocation2 + $0xa98] sm:$0xff]
    %v2510 = vld [vmem:[#allocation2 + $0xaa0] sm:$0xff]
    %v2511 = vld [vmem:[#allocation2 + $0xaa8] sm:$0xff]
    %v2512 = vld [vmem:[#allocation2 + $0xab0] sm:$0xff]
    %v2513 = vld [vmem:[#allocation2 + $0xab8] sm:$0xff]
    %v2514 = vld [vmem:[#allocation2 + $0xac0] sm:$0xff]
    %v2515 = vld [vmem:[#allocation2 + $0xac8] sm:$0xff]
    %v2516 = vld [vmem:[#allocation2 + $0xad0] sm:$0xff]
    %v2517 = vld [vmem:[#allocation2 + $0xad8] sm:$0xff]
    %v2518 = vld [vmem:[#allocation2 + $0xae0] sm:$0xff]
    %v2519 = vld [vmem:[#allocation2 + $0xae8] sm:$0xff]
    %v2520 = vld [vmem:[#allocation2 + $0xaf0] sm:$0xff]
    %v2521 = vld [vmem:[#allocation2 + $0xaf8] sm:$0xff]
    %v2522 = vld [vmem:[#allocation2 + $0xb00] sm:$0xff]
    %v2523 = vld [vmem:[#allocation2 + $0xb08] sm:$0xff]
    %v2524 = vld [vmem:[#allocation2 + $0xb10] sm:$0xff]
    %v2525 = vld [vmem:[#allocation2 + $0xb18] sm:$0xff]
    %v2526 = vld [vmem:[#allocation2 + $0xb20] sm:$0xff]
    %v2527 = vld [vmem:[#allocation2 + $0xb28] sm:$0xff]
    %v2528 = vld [vmem:[#allocation2 + $0xb30] sm:$0xff]
    %v2529 = vld [vmem:[#allocation2 + $0xb38] sm:$0xff]
    %v2530 = vld [vmem:[#allocation2 + $0xb40] sm:$0xff]
    %v2531 = vld [vmem:[#allocation2 + $0xb48] sm:$0xff]
    %v2532 = vld [vmem:[#allocation2 + $0xb50] sm:$0xff]
    %v2533 = vld [vmem:[#allocation2 + $0xb58] sm:$0xff]
    %v2534 = vld [vmem:[#allocation2 + $0xb60] sm:$0xff]
    %v2535 = vld [vmem:[#allocation2 + $0xb68] sm:$0xff]
    %v2536 = vld [vmem:[#allocation2 + $0xb70] sm:$0xff]
    %v2537 = vld [vmem:[#allocation2 + $0xb78] sm:$0xff]
    %v2538 = vld [vmem:[#allocation2 + $0xb80] sm:$0xff]
    %v2539 = vld [vmem:[#allocation2 + $0xb88] sm:$0xff]
    %v2540 = vld [vmem:[#allocation2 + $0xb90] sm:$0xff]
    %v2541 = vld [vmem:[#allocation2 + $0xb98] sm:$0xff]
    %v2542 = vld [vmem:[#allocation2 + $0xba0] sm:$0xff]
    %v2543 = vld [vmem:[#allocation2 + $0xba8] sm:$0xff]
    %v2544 = vld [vmem:[#allocation2 + $0xbb0] sm:$0xff]
    %v2545 = vld [vmem:[#allocation2 + $0xbb8] sm:$0xff]
    %v2546 = vld [vmem:[#allocation2 + $0xbc0] sm:$0xff]
    %v2547 = vld [vmem:[#allocation2 + $0xbc8] sm:$0xff]
    %v2548 = vld [vmem:[#allocation2 + $0xbd0] sm:$0xff]
    %v2549 = vld [vmem:[#allocation2 + $0xbd8] sm:$0xff]
    %v2550 = vld [vmem:[#allocation2 + $0xbe0] sm:$0xff]
    %v2551 = vld [vmem:[#allocation2 + $0xbe8] sm:$0xff]
    %v2552 = vld [vmem:[#allocation2 + $0xbf0] sm:$0xff]
    %v2553 = vld [vmem:[#allocation2 + $0xbf8] sm:$0xff]
    %v2554 = vld [vmem:[#allocation2 + $0xc00] sm:$0xff]
    %v2555 = vld [vmem:[#allocation2 + $0xc08] sm:$0xff]
    %v2556 = vld [vmem:[#allocation2 + $0xc10] sm:$0xff]
    %v2557 = vld [vmem:[#allocation2 + $0xc18] sm:$0xff]
    %v2558 = vld [vmem:[#allocation2 + $0xc20] sm:$0xff]
    %v2559 = vld [vmem:[#allocation2 + $0xc28] sm:$0xff]
    %v2560 = vld [vmem:[#allocation2 + $0xc30] sm:$0xff]
    %v2561 = vld [vmem:[#allocation2 + $0xc38] sm:$0xff]
    %v2660 = vunpack.c.l.b16 %v2464
    %v2661 = vunpack.c.h.b16 %v2464
    %v2662 = vunpack.c.l.b16 %v2465
    %v2663 = vunpack.c.h.b16 %v2465
    %v2664 = vunpack.c.l.b16 %v2466
    %v2665 = vunpack.c.h.b16 %v2466
    %v2666 = vunpack.c.l.b16 %v2467
    %v2667 = vunpack.c.h.b16 %v2467
    %v2668 = vunpack.c.l.b16 %v2468
    %v2669 = vunpack.c.h.b16 %v2468
    %v2670 = vunpack.c.l.b16 %v2469
    %v2671 = vunpack.c.h.b16 %v2469
    %v2672 = vunpack.c.l.b16 %v2470
    %v2673 = vunpack.c.h.b16 %v2470
    %v2674 = vunpack.c.l.b16 %v2471
    %v2675 = vunpack.c.h.b16 %v2471
    %v2676 = vunpack.c.l.b16 %v2472
    %v2677 = vunpack.c.h.b16 %v2472
    %v2678 = vunpack.c.l.b16 %v2473
    %v2679 = vunpack.c.h.b16 %v2473
    %v2680 = vunpack.c.l.b16 %v2474
    %v2681 = vunpack.c.h.b16 %v2474
    %v2682 = vunpack.c.l.b16 %v2475
    %v2683 = vunpack.c.h.b16 %v2475
    %v2684 = vunpack.c.l.b16 %v2476
    %v2685 = vunpack.c.h.b16 %v2476
    %v2686 = vunpack.c.l.b16 %v2477
    %v2687 = vunpack.c.h.b16 %v2477
    %v2688 = vunpack.c.l.b16 %v2478
    %v2689 = vunpack.c.h.b16 %v2478
    %v2690 = vunpack.c.l.b16 %v2479
    %v2691 = vunpack.c.h.b16 %v2479
    %v2692 = vunpack.c.l.b16 %v2480
    %v2693 = vunpack.c.h.b16 %v2480
    %v2694 = vunpack.c.l.b16 %v2481
    %v2695 = vunpack.c.h.b16 %v2481
    %v2696 = vunpack.c.l.b16 %v2482
    %v2697 = vunpack.c.h.b16 %v2482
    %v2698 = vunpack.c.l.b16 %v2483
    %v2699 = vunpack.c.h.b16 %v2483
    %v2700 = vunpack.c.l.b16 %v2484
    %v2701 = vunpack.c.h.b16 %v2484
    %v2702 = vunpack.c.l.b16 %v2485
    %v2703 = vunpack.c.h.b16 %v2485
    %v2704 = vunpack.c.l.b16 %v2486
    %v2705 = vunpack.c.h.b16 %v2486
    %v2706 = vunpack.c.l.b16 %v2487
    %v2707 = vunpack.c.h.b16 %v2487
    %v2708 = vunpack.c.l.b16 %v2488
    %v2709 = vunpack.c.h.b16 %v2488
    %v2710 = vunpack.c.l.b16 %v2489
    %v2711 = vunpack.c.h.b16 %v2489
    %v2712 = vunpack.c.l.b16 %v2490
    %v2713 = vunpack.c.h.b16 %v2490
    %v2714 = vunpack.c.l.b16 %v2491
    %v2715 = vunpack.c.h.b16 %v2491
    %v2716 = vunpack.c.l.b16 %v2492
    %v2717 = vunpack.c.h.b16 %v2492
    %v2718 = vunpack.c.l.b16 %v2493
    %v2719 = vunpack.c.h.b16 %v2493
    %v2720 = vunpack.c.l.b16 %v2494
    %v2721 = vunpack.c.h.b16 %v2494
    %v2722 = vunpack.c.l.b16 %v2495
    %v2723 = vunpack.c.h.b16 %v2495
    %v2724 = vunpack.c.l.b16 %v2496
    %v2725 = vunpack.c.h.b16 %v2496
    %v2726 = vunpack.c.l.b16 %v2497
    %v2727 = vunpack.c.h.b16 %v2497
    %v2728 = vunpack.c.l.b16 %v2498
    %v2729 = vunpack.c.h.b16 %v2498
    %v2730 = vunpack.c.l.b16 %v2499
    %v2731 = vunpack.c.h.b16 %v2499
    %v2732 = vunpack.c.l.b16 %v2500
    %v2733 = vunpack.c.h.b16 %v2500
    %v2734 = vunpack.c.l.b16 %v2501
    %v2735 = vunpack.c.h.b16 %v2501
    %v2736 = vunpack.c.l.b16 %v2502
    %v2737 = vunpack.c.h.b16 %v2502
    %v2738 = vunpack.c.l.b16 %v2503
    %v2739 = vunpack.c.h.b16 %v2503
    %v2740 = vunpack.c.l.b16 %v2504
    %v2741 = vunpack.c.h.b16 %v2504
    %v2742 = vunpack.c.l.b16 %v2505
    %v2743 = vunpack.c.h.b16 %v2505
    %v2744 = vunpack.c.l.b16 %v2506
    %v2745 = vunpack.c.h.b16 %v2506
    %v2746 = vunpack.c.l.b16 %v2507
    %v2747 = vunpack.c.h.b16 %v2507
    %v2748 = vunpack.c.l.b16 %v2508
    %v2749 = vunpack.c.h.b16 %v2508
    %v2750 = vunpack.c.l.b16 %v2509
    %v2751 = vunpack.c.h.b16 %v2509
    %v2752 = vunpack.c.l.b16 %v2510
    %v2753 = vunpack.c.h.b16 %v2510
    %v2754 = vunpack.c.l.b16 %v2511
    %v2755 = vunpack.c.h.b16 %v2511
    %v2756 = vunpack.c.l.b16 %v2512
    %v2757 = vunpack.c.h.b16 %v2512
    %v2758 = vunpack.c.l.b16 %v2513
    %v2759 = vunpack.c.h.b16 %v2513
    %v2760 = vunpack.c.l.b16 %v2514
    %v2761 = vunpack.c.h.b16 %v2514
    %v2762 = vunpack.c.l.b16 %v2515
    %v2763 = vunpack.c.h.b16 %v2515
    %v2764 = vunpack.c.l.b16 %v2516
    %v2765 = vunpack.c.h.b16 %v2516
    %v2766 = vunpack.c.l.b16 %v2517
    %v2767 = vunpack.c.h.b16 %v2517
    %v2768 = vunpack.c.l.b16 %v2518
    %v2769 = vunpack.c.h.b16 %v2518
    %v2770 = vunpack.c.l.b16 %v2519
    %v2771 = vunpack.c.h.b16 %v2519
    %v2772 = vunpack.c.l.b16 %v2520
    %v2773 = vunpack.c.h.b16 %v2520
    %v2774 = vunpack.c.l.b16 %v2521
    %v2775 = vunpack.c.h.b16 %v2521
    %v2776 = vunpack.c.l.b16 %v2522
    %v2777 = vunpack.c.h.b16 %v2522
    %v2778 = vunpack.c.l.b16 %v2523
    %v2779 = vunpack.c.h.b16 %v2523
    %v2780 = vunpack.c.l.b16 %v2524
    %v2781 = vunpack.c.h.b16 %v2524
    %v2782 = vunpack.c.l.b16 %v2525
    %v2783 = vunpack.c.h.b16 %v2525
    %v2784 = vunpack.c.l.b16 %v2526
    %v2785 = vunpack.c.h.b16 %v2526
    %v2786 = vunpack.c.l.b16 %v2527
    %v2787 = vunpack.c.h.b16 %v2527
    %v2788 = vunpack.c.l.b16 %v2528
    %v2789 = vunpack.c.h.b16 %v2528
    %v2790 = vunpack.c.l.b16 %v2529
    %v2791 = vunpack.c.h.b16 %v2529
    %v2792 = vunpack.c.l.b16 %v2530
    %v2793 = vunpack.c.h.b16 %v2530
    %v2794 = vunpack.c.l.b16 %v2531
    %v2795 = vunpack.c.h.b16 %v2531
    %v2796 = vunpack.c.l.b16 %v2532
    %v2797 = vunpack.c.h.b16 %v2532
    %v2798 = vunpack.c.l.b16 %v2533
    %v2799 = vunpack.c.h.b16 %v2533
    %v2800 = vunpack.c.l.b16 %v2534
    %v2801 = vunpack.c.h.b16 %v2534
    %v2802 = vunpack.c.l.b16 %v2535
    %v2803 = vunpack.c.h.b16 %v2535
    %v2804 = vunpack.c.l.b16 %v2536
    %v2805 = vunpack.c.h.b16 %v2536
    %v2806 = vunpack.c.l.b16 %v2537
    %v2807 = vunpack.c.h.b16 %v2537
    %v2808 = vunpack.c.l.b16 %v2538
    %v2809 = vunpack.c.h.b16 %v2538
    %v2810 = vunpack.c.l.b16 %v2539
    %v2811 = vunpack.c.h.b16 %v2539
    %v2812 = vunpack.c.l.b16 %v2540
    %v2813 = vunpack.c.h.b16 %v2540
    %v2814 = vunpack.c.l.b16 %v2541
    %v2815 = vunpack.c.h.b16 %v2541
    %v2816 = vunpack.c.l.b16 %v2542
    %v2817 = vunpack.c.h.b16 %v2542
    %v2818 = vunpack.c.l.b16 %v2543
    %v2819 = vunpack.c.h.b16 %v2543
    %v2820 = vunpack.c.l.b16 %v2544
    %v2821 = vunpack.c.h.b16 %v2544
    %v2822 = vunpack.c.l.b16 %v2545
    %v2823 = vunpack.c.h.b16 %v2545
    %v2824 = vunpack.c.l.b16 %v2546
    %v2825 = vunpack.c.h.b16 %v2546
    %v2826 = vunpack.c.l.b16 %v2547
    %v2827 = vunpack.c.h.b16 %v2547
    %v2828 = vunpack.c.l.b16 %v2548
    %v2829 = vunpack.c.h.b16 %v2548
    %v2830 = vunpack.c.l.b16 %v2549
    %v2831 = vunpack.c.h.b16 %v2549
    %v2832 = vunpack.c.l.b16 %v2550
    %v2833 = vunpack.c.h.b16 %v2550
    %v2834 = vunpack.c.l.b16 %v2551
    %v2835 = vunpack.c.h.b16 %v2551
    %v2836 = vunpack.c.l.b16 %v2552
    %v2837 = vunpack.c.h.b16 %v2552
    %v2838 = vunpack.c.l.b16 %v2553
    %v2839 = vunpack.c.h.b16 %v2553
    %v2840 = vunpack.c.l.b16 %v2554
    %v2841 = vunpack.c.h.b16 %v2554
    %v2842 = vunpack.c.l.b16 %v2555
    %v2843 = vunpack.c.h.b16 %v2555
    %v2844 = vunpack.c.l.b16 %v2556
    %v2845 = vunpack.c.h.b16 %v2556
    %v2846 = vunpack.c.l.b16 %v2557
    %v2847 = vunpack.c.h.b16 %v2557
    %v2848 = vunpack.c.l.b16 %v2558
    %v2849 = vunpack.c.h.b16 %v2558
    %v2850 = vunpack.c.l.b16 %v2559
    %v2851 = vunpack.c.h.b16 %v2559
    %v2852 = vunpack.c.l.b16 %v2560
    %v2853 = vunpack.c.h.b16 %v2560
    %v2854 = vunpack.c.l.b16 %v2561
    %v2855 = vunpack.c.h.b16 %v2561
    %v2856 = vpack.c.b16 %v2662, %v2660
    %v2857 = vpack.c.b16 %v2663, %v2661
    %v2858 = vpack.c.b16 %v2666, %v2664
    %v2859 = vpack.c.b16 %v2667, %v2665
    %v2860 = vpack.c.b16 %v2670, %v2668
    %v2861 = vpack.c.b16 %v2671, %v2669
    %v2862 = vpack.c.b16 %v2674, %v2672
    %v2863 = vpack.c.b16 %v2675, %v2673
    %v2864 = vpack.c.b16 %v2678, %v2676
    %v2865 = vpack.c.b16 %v2679, %v2677
    %v2866 = vpack.c.b16 %v2682, %v2680
    %v2867 = vpack.c.b16 %v2683, %v2681
    %v2868 = vpack.c.b16 %v2686, %v2684
    %v2869 = vpack.c.b16 %v2687, %v2685
    %v2870 = vpack.c.b16 %v2690, %v2688
    %v2871 = vpack.c.b16 %v2691, %v2689
    %v2872 = vpack.c.b16 %v2694, %v2692
    %v2873 = vpack.c.b16 %v2695, %v2693
    %v2874 = vpack.c.b16 %v2698, %v2696
    %v2875 = vpack.c.b16 %v2699, %v2697
    %v2876 = vpack.c.b16 %v2702, %v2700
    %v2877 = vpack.c.b16 %v2703, %v2701
    %v2878 = vpack.c.b16 %v2706, %v2704
    %v2879 = vpack.c.b16 %v2707, %v2705
    %v2880 = vpack.c.b16 %v2710, %v2708
    %v2881 = vpack.c.b16 %v2711, %v2709
    %v2882 = vpack.c.b16 %v2714, %v2712
    %v2883 = vpack.c.b16 %v2715, %v2713
    %v2884 = vpack.c.b16 %v2718, %v2716
    %v2885 = vpack.c.b16 %v2719, %v2717
    %v2886 = vpack.c.b16 %v2722, %v2720
    %v2887 = vpack.c.b16 %v2723, %v2721
    %v2888 = vpack.c.b16 %v2726, %v2724
    %v2889 = vpack.c.b16 %v2727, %v2725
    %v2890 = vpack.c.b16 %v2730, %v2728
    %v2891 = vpack.c.b16 %v2731, %v2729
    %v2892 = vpack.c.b16 %v2734, %v2732
    %v2893 = vpack.c.b16 %v2735, %v2733
    %v2894 = vpack.c.b16 %v2738, %v2736
    %v2895 = vpack.c.b16 %v2739, %v2737
    %v2896 = vpack.c.b16 %v2742, %v2740
    %v2897 = vpack.c.b16 %v2743, %v2741
    %v2898 = vpack.c.b16 %v2746, %v2744
    %v2899 = vpack.c.b16 %v2747, %v2745
    %v2900 = vpack.c.b16 %v2750, %v2748
    %v2901 = vpack.c.b16 %v2751, %v2749
    %v2902 = vpack.c.b16 %v2754, %v2752
    %v2903 = vpack.c.b16 %v2755, %v2753
    %v2904 = vpack.c.b16 %v2758, %v2756
    %v2905 = vpack.c.b16 %v2759, %v2757
    %v2906 = vpack.c.b16 %v2762, %v2760
    %v2907 = vpack.c.b16 %v2763, %v2761
    %v2908 = vpack.c.b16 %v2766, %v2764
    %v2909 = vpack.c.b16 %v2767, %v2765
    %v2910 = vpack.c.b16 %v2770, %v2768
    %v2911 = vpack.c.b16 %v2771, %v2769
    %v2912 = vpack.c.b16 %v2774, %v2772
    %v2913 = vpack.c.b16 %v2775, %v2773
    %v2914 = vpack.c.b16 %v2778, %v2776
    %v2915 = vpack.c.b16 %v2779, %v2777
    %v2916 = vpack.c.b16 %v2782, %v2780
    %v2917 = vpack.c.b16 %v2783, %v2781
    %v2918 = vpack.c.b16 %v2786, %v2784
    %v2919 = vpack.c.b16 %v2787, %v2785
    %v2920 = vpack.c.b16 %v2790, %v2788
    %v2921 = vpack.c.b16 %v2791, %v2789
    %v2922 = vpack.c.b16 %v2794, %v2792
    %v2923 = vpack.c.b16 %v2795, %v2793
    %v2924 = vpack.c.b16 %v2798, %v2796
    %v2925 = vpack.c.b16 %v2799, %v2797
    %v2926 = vpack.c.b16 %v2802, %v2800
    %v2927 = vpack.c.b16 %v2803, %v2801
    %v2928 = vpack.c.b16 %v2806, %v2804
    %v2929 = vpack.c.b16 %v2807, %v2805
    %v2930 = vpack.c.b16 %v2810, %v2808
    %v2931 = vpack.c.b16 %v2811, %v2809
    %v2932 = vpack.c.b16 %v2814, %v2812
    %v2933 = vpack.c.b16 %v2815, %v2813
    %v2934 = vpack.c.b16 %v2818, %v2816
    %v2935 = vpack.c.b16 %v2819, %v2817
    %v2936 = vpack.c.b16 %v2822, %v2820
    %v2937 = vpack.c.b16 %v2823, %v2821
    %v2938 = vpack.c.b16 %v2826, %v2824
    %v2939 = vpack.c.b16 %v2827, %v2825
    %v2940 = vpack.c.b16 %v2830, %v2828
    %v2941 = vpack.c.b16 %v2831, %v2829
    %v2942 = vpack.c.b16 %v2834, %v2832
    %v2943 = vpack.c.b16 %v2835, %v2833
    %v2944 = vpack.c.b16 %v2838, %v2836
    %v2945 = vpack.c.b16 %v2839, %v2837
    %v2946 = vpack.c.b16 %v2842, %v2840
    %v2947 = vpack.c.b16 %v2843, %v2841
    %v2948 = vpack.c.b16 %v2846, %v2844
    %v2949 = vpack.c.b16 %v2847, %v2845
    %v2950 = vpack.c.b16 %v2850, %v2848
    %v2951 = vpack.c.b16 %v2851, %v2849
    %v2952 = vpack.c.b16 %v2854, %v2852
    %v2953 = vpack.c.b16 %v2855, %v2853
    %v3053 = vsel %vm812, %v2463, 0
    %3055 = vmatprep.subr.bf16.mxu0 %v2857
    %3056 = vmatpush1.bf16.msra.mxu0 %v2856
    %3057 = vmatprep.subr.bf16.mxu0 %v2859
    %3058 = vmatpush1.bf16.msra.mxu0 %v2858
    %3059 = vmatprep.subr.bf16.mxu0 %v2861
    %3060 = vmatpush1.bf16.msra.mxu0 %v2860
    %3061 = vmatprep.subr.bf16.mxu0 %v2863
    %3062 = vmatpush1.bf16.msra.mxu0 %v2862
    %3063 = vmatprep.subr.bf16.mxu0 %v2865
    %3064 = vmatpush1.bf16.msra.mxu0 %v2864
    %3065 = vmatprep.subr.bf16.mxu0 %v2867
    %3066 = vmatpush1.bf16.msra.mxu0 %v2866
    %3067 = vmatprep.subr.bf16.mxu0 %v2869
    %3068 = vmatpush1.bf16.msra.mxu0 %v2868
    %3069 = vmatprep.subr.bf16.mxu0 %v2871
    %3070 = vmatpush1.bf16.msra.mxu0 %v2870
    %3071 = vmatprep.subr.bf16.mxu0 %v2873
    %3072 = vmatpush1.bf16.msra.mxu0 %v2872
    %3073 = vmatprep.subr.bf16.mxu0 %v2875
    %3074 = vmatpush1.bf16.msra.mxu0 %v2874
    %3075 = vmatprep.subr.bf16.mxu0 %v2877
    %3076 = vmatpush1.bf16.msra.mxu0 %v2876
    %3077 = vmatprep.subr.bf16.mxu0 %v2879
    %3078 = vmatpush1.bf16.msra.mxu0 %v2878
    %3079 = vmatprep.subr.bf16.mxu0 %v2881
    %3080 = vmatpush1.bf16.msra.mxu0 %v2880
    %3081 = vmatprep.subr.bf16.mxu0 %v2883
    %3082 = vmatpush1.bf16.msra.mxu0 %v2882
    %3083 = vmatprep.subr.bf16.mxu0 %v2885
    %3084 = vmatpush1.bf16.msra.mxu0 %v2884
    %3085 = vmatprep.subr.bf16.mxu0 %v2887
    %3086 = vmatpush1.bf16.msra.mxu0 %v2886
    %3087 = vmatprep.mubr.bf16.mxu0 %v2458
    %3088 = vmatmul.mubr.bf16.gmra.mrb[0].mxu0 %v2457
    %v3089 = vpop.f32.mrb[0].mxu0
    %v3090 = vadd.f32 0.0, %v3089
    %v3091 = vpop.f32.mrb[0].mxu0
    %v3092 = vadd.f32 0.0, %v3091
    %v3093 = vpop.f32.mrb[0].mxu0
    %v3094 = vpop.f32.mrb[0].mxu0
    %3095 = vdwg.mxu0
    %3096 = vmatprep.subr.bf16.mxu0 %v2889
    %3097 = vmatpush1.bf16.msra.mxu0 %v2888
    %3098 = vmatprep.subr.bf16.mxu0 %v2891
    %3099 = vmatpush1.bf16.msra.mxu0 %v2890
    %3100 = vmatprep.subr.bf16.mxu0 %v2893
    %3101 = vmatpush1.bf16.msra.mxu0 %v2892
    %3102 = vmatprep.subr.bf16.mxu0 %v2895
    %3103 = vmatpush1.bf16.msra.mxu0 %v2894
    %3104 = vmatprep.subr.bf16.mxu0 %v2897
    %3105 = vmatpush1.bf16.msra.mxu0 %v2896
    %3106 = vmatprep.subr.bf16.mxu0 %v2899
    %3107 = vmatpush1.bf16.msra.mxu0 %v2898
    %3108 = vmatprep.subr.bf16.mxu0 %v2901
    %3109 = vmatpush1.bf16.msra.mxu0 %v2900
    %3110 = vmatprep.subr.bf16.mxu0 %v2903
    %3111 = vmatpush1.bf16.msra.mxu0 %v2902
    %3112 = vmatprep.subr.bf16.mxu0 %v2905
    %3113 = vmatpush1.bf16.msra.mxu0 %v2904
    %3114 = vmatprep.subr.bf16.mxu0 %v2907
    %3115 = vmatpush1.bf16.msra.mxu0 %v2906
    %3116 = vmatprep.subr.bf16.mxu0 %v2909
    %3117 = vmatpush1.bf16.msra.mxu0 %v2908
    %3118 = vmatprep.subr.bf16.mxu0 %v2911
    %3119 = vmatpush1.bf16.msra.mxu0 %v2910
    %3120 = vmatprep.subr.bf16.mxu0 %v2913
    %3121 = vmatpush1.bf16.msra.mxu0 %v2912
    %3122 = vmatprep.subr.bf16.mxu0 %v2915
    %3123 = vmatpush1.bf16.msra.mxu0 %v2914
    %3124 = vmatprep.subr.bf16.mxu0 %v2917
    %3125 = vmatpush1.bf16.msra.mxu0 %v2916
    %3126 = vmatprep.subr.bf16.mxu0 %v2919
    %3127 = vmatpush1.bf16.msra.mxu0 %v2918
    %3128 = vmatprep.mubr.bf16.mxu0 %v2460
    %3129 = vmatmul.mubr.bf16.gmra.mrb[0].mxu0 %v2459
    %v3130 = vpop.f32.mrb[0].mxu0
    %v3131 = vadd.f32 %v3090, %v3130
    %v3132 = vpop.f32.mrb[0].mxu0
    %v3133 = vadd.f32 %v3092, %v3132
    %v3134 = vpop.f32.mrb[0].mxu0
    %v3135 = vpop.f32.mrb[0].mxu0
    %3136 = vdwg.mxu0
    %3137 = vmatprep.subr.bf16.mxu0 %v2921
    %3138 = vmatpush1.bf16.msra.mxu0 %v2920
    %3139 = vmatprep.subr.bf16.mxu0 %v2923
    %3140 = vmatpush1.bf16.msra.mxu0 %v2922
    %3141 = vmatprep.subr.bf16.mxu0 %v2925
    %3142 = vmatpush1.bf16.msra.mxu0 %v2924
    %3143 = vmatprep.subr.bf16.mxu0 %v2927
    %3144 = vmatpush1.bf16.msra.mxu0 %v2926
    %3145 = vmatprep.subr.bf16.mxu0 %v2929
    %3146 = vmatpush1.bf16.msra.mxu0 %v2928
    %3147 = vmatprep.subr.bf16.mxu0 %v2931
    %3148 = vmatpush1.bf16.msra.mxu0 %v2930
    %3149 = vmatprep.subr.bf16.mxu0 %v2933
    %3150 = vmatpush1.bf16.msra.mxu0 %v2932
    %3151 = vmatprep.subr.bf16.mxu0 %v2935
    %3152 = vmatpush1.bf16.msra.mxu0 %v2934
    %3153 = vmatprep.subr.bf16.mxu0 %v2937
    %3154 = vmatpush1.bf16.msra.mxu0 %v2936
    %3155 = vmatprep.subr.bf16.mxu0 %v2939
    %3156 = vmatpush1.bf16.msra.mxu0 %v2938
    %3157 = vmatprep.subr.bf16.mxu0 %v2941
    %3158 = vmatpush1.bf16.msra.mxu0 %v2940
    %3159 = vmatprep.subr.bf16.mxu0 %v2943
    %3160 = vmatpush1.bf16.msra.mxu0 %v2942
    %3161 = vmatprep.subr.bf16.mxu0 %v2945
    %3162 = vmatpush1.bf16.msra.mxu0 %v2944
    %3163 = vmatprep.subr.bf16.mxu0 %v2947
    %3164 = vmatpush1.bf16.msra.mxu0 %v2946
    %3165 = vmatprep.subr.bf16.mxu0 %v2949
    %3166 = vmatpush1.bf16.msra.mxu0 %v2948
    %3167 = vmatprep.subr.bf16.mxu0 %v2951
    %3168 = vmatpush1.bf16.msra.mxu0 %v2950
    %3169 = vmatprep.mubr.bf16.mxu0 %v2462
    %3170 = vmatmul.mubr.bf16.gmra.mrb[0].mxu0 %v2461
    %v3171 = vpop.f32.mrb[0].mxu0
    %v3172 = vadd.f32 %v3131, %v3171
    %v3173 = vpop.f32.mrb[0].mxu0
    %v3174 = vadd.f32 %v3133, %v3173
    %v3175 = vpop.f32.mrb[0].mxu0
    %v3176 = vpop.f32.mrb[0].mxu0
    %3177 = vdwg.mxu0
    %3178 = vmatprep.subr.bf16.mxu0 %v2953
    %3179 = vmatpush1.bf16.msra.mxu0 %v2952
    %3180 = vmatprep.subr.bf16.mxu0 0
    %3181 = vmatpush1.bf16.msra.mxu0 0
    %3182 = vmatprep.subr.bf16.mxu0 0
    %3183 = vmatpush1.bf16.msra.mxu0 0
    %3184 = vmatprep.subr.bf16.mxu0 0
    %3185 = vmatpush1.bf16.msra.mxu0 0
    %3186 = vmatprep.subr.bf16.mxu0 0
    %3187 = vmatpush1.bf16.msra.mxu0 0
    %3188 = vmatprep.subr.bf16.mxu0 0
    %3189 = vmatpush1.bf16.msra.mxu0 0
    %3190 = vmatprep.subr.bf16.mxu0 0
    %3191 = vmatpush1.bf16.msra.mxu0 0
    %3192 = vmatprep.subr.bf16.mxu0 0
    %3193 = vmatpush1.bf16.msra.mxu0 0
    %3194 = vmatprep.subr.bf16.mxu0 0
    %3195 = vmatpush1.bf16.msra.mxu0 0
    %3196 = vmatprep.subr.bf16.mxu0 0
    %3197 = vmatpush1.bf16.msra.mxu0 0
    %3198 = vmatprep.subr.bf16.mxu0 0
    %3199 = vmatpush1.bf16.msra.mxu0 0
    %3200 = vmatprep.subr.bf16.mxu0 0
    %3201 = vmatpush1.bf16.msra.mxu0 0
    %3202 = vmatprep.subr.bf16.mxu0 0
    %3203 = vmatpush1.bf16.msra.mxu0 0
    %3204 = vmatprep.subr.bf16.mxu0 0
    %3205 = vmatpush1.bf16.msra.mxu0 0
    %3206 = vmatprep.subr.bf16.mxu0 0
    %3207 = vmatpush1.bf16.msra.mxu0 0
    %3208 = vmatprep.subr.bf16.mxu0 0
    %3209 = vmatpush1.bf16.msra.mxu0 0
    %3210 = vmatprep.mubr.bf16.mxu0 0
    %3211 = vmatmul.mubr.bf16.gmra.mrb[0].mxu0 %v3053
    %v3212 = vpop.f32.mrb[0].mxu0
    %v3213 = vadd.f32 %v3172, %v3212
    %v3214 = vpop.f32.mrb[0].mxu0
    %v3215 = vadd.f32 %v3174, %v3214
    %v3216 = vpop.f32.mrb[0].mxu0
    %v3217 = vpop.f32.mrb[0].mxu0
    %3218 = vdwg.mxu0
    %v3219 = vadd.f32 %v2427, %v3213
    %v3220 = vadd.f32 %v2428, %v3215
    %v3222 = vlaneseq
    %v3223 = vshrl.u32 %v3222, 7
    %v3224 = vsub.s32 0, %v3223
    %v3225 = vrot.slane %v90, %v3224
    %v3226 = vlaneseq
    %v3227 = vshrl.u32 %v3226, 7
    %v3228 = vsub.s32 1, %v3227
    %v3229 = vrot.slane %v90, %v3228
    %v3232 = vadd.f32 %v3219, %v3225
    %v3233 = vadd.f32 %v3220, %v3229
    %v3234 = vtanh.pop %v3232
    %v3235 = vtanh.pop %v3233
    %v3236 = vld [vmem:[#allocation7] sm:$0x1]
    %v3237 = vpack.c.bf16 %v3234, %v3234
    %v3238 = vpack.c.bf16 %v3235, %v3235
    %v3239 = vld [vmem:[#allocation6] sm:$0xf]
    %v3240 = vld [vmem:[#allocation6 + $0x4] sm:$0xf]
    %v3241 = vld [vmem:[#allocation6 + $0x8] sm:$0xf]
    %v3242 = vld [vmem:[#allocation6 + $0xc] sm:$0xf]
    %v3243 = vld [vmem:[#allocation6 + $0x10] sm:$0xf]
    %v3244 = vld [vmem:[#allocation6 + $0x14] sm:$0xf]
    %v3245 = vld [vmem:[#allocation6 + $0x18] sm:$0xf]
    %v3246 = vld [vmem:[#allocation6 + $0x1c] sm:$0xf]
    %v3247 = vld [vmem:[#allocation6 + $0x20] sm:$0xf]
    %v3248 = vld [vmem:[#allocation6 + $0x24] sm:$0xf]
    %v3249 = vld [vmem:[#allocation6 + $0x28] sm:$0xf]
    %v3250 = vld [vmem:[#allocation6 + $0x2c] sm:$0xf]
    %v3251 = vld [vmem:[#allocation6 + $0x30] sm:$0xf]
    %v3252 = vld [vmem:[#allocation6 + $0x34] sm:$0xf]
    %v3253 = vld [vmem:[#allocation6 + $0x38] sm:$0xf]
    %v3254 = vld [vmem:[#allocation6 + $0x3c] sm:$0xf]
    %v3255 = vld [vmem:[#allocation6 + $0x40] sm:$0xf]
    %v3256 = vld [vmem:[#allocation6 + $0x44] sm:$0xf]
    %v3257 = vld [vmem:[#allocation6 + $0x48] sm:$0xf]
    %v3258 = vld [vmem:[#allocation6 + $0x4c] sm:$0xf]
    %v3259 = vld [vmem:[#allocation6 + $0x50] sm:$0xf]
    %v3260 = vld [vmem:[#allocation6 + $0x54] sm:$0xf]
    %v3261 = vld [vmem:[#allocation6 + $0x58] sm:$0xf]
    %v3262 = vld [vmem:[#allocation6 + $0x5c] sm:$0xf]
    %v3263 = vld [vmem:[#allocation6 + $0x60] sm:$0xf]
    %v3264 = vld [vmem:[#allocation6 + $0x64] sm:$0xf]
    %v3265 = vld [vmem:[#allocation6 + $0x68] sm:$0xf]
    %v3266 = vld [vmem:[#allocation6 + $0x6c] sm:$0xf]
    %v3267 = vld [vmem:[#allocation6 + $0x70] sm:$0xf]
    %v3268 = vld [vmem:[#allocation6 + $0x74] sm:$0xf]
    %v3269 = vld [vmem:[#allocation6 + $0x78] sm:$0xf]
    %v3270 = vld [vmem:[#allocation6 + $0x7c] sm:$0xf]
    %v3271 = vmul.f32 %v3234, 1.5
    %v3272 = vmul.f32 %v3235, 1.5
    %v3273 = vmul.f32 %v3271, %v3234
    %v3274 = vmul.f32 %v3272, %v3235
    %v3275 = vsub.f32 %v3273, 0.5
    %v3276 = vsub.f32 %v3274, 0.5
    %v3277 = vpack.c.bf16 %v3275, %v3275
    %v3278 = vpack.c.bf16 %v3276, %v3276
    %v3279 = vld [vmem:[#allocation6 + $0x80] sm:$0xf]
    %v3280 = vld [vmem:[#allocation6 + $0x84] sm:$0xf]
    %v3281 = vld [vmem:[#allocation6 + $0x88] sm:$0xf]
    %v3282 = vld [vmem:[#allocation6 + $0x8c] sm:$0xf]
    %v3283 = vld [vmem:[#allocation6 + $0x90] sm:$0xf]
    %v3284 = vld [vmem:[#allocation6 + $0x94] sm:$0xf]
    %v3285 = vld [vmem:[#allocation6 + $0x98] sm:$0xf]
    %v3286 = vld [vmem:[#allocation6 + $0x9c] sm:$0xf]
    %v3287 = vld [vmem:[#allocation6 + $0xa0] sm:$0xf]
    %v3288 = vld [vmem:[#allocation6 + $0xa4] sm:$0xf]
    %v3289 = vld [vmem:[#allocation6 + $0xa8] sm:$0xf]
    %v3290 = vld [vmem:[#allocation6 + $0xac] sm:$0xf]
    %v3291 = vld [vmem:[#allocation6 + $0xb0] sm:$0xf]
    %v3292 = vld [vmem:[#allocation6 + $0xb4] sm:$0xf]
    %v3293 = vld [vmem:[#allocation6 + $0xb8] sm:$0xf]
    %v3294 = vld [vmem:[#allocation6 + $0xbc] sm:$0xf]
    %v3295 = vld [vmem:[#allocation6 + $0xc0] sm:$0xf]
    %v3296 = vld [vmem:[#allocation6 + $0xc4] sm:$0xf]
    %v3297 = vld [vmem:[#allocation6 + $0xc8] sm:$0xf]
    %v3298 = vld [vmem:[#allocation6 + $0xcc] sm:$0xf]
    %v3299 = vld [vmem:[#allocation6 + $0xd0] sm:$0xf]
    %v3300 = vld [vmem:[#allocation6 + $0xd4] sm:$0xf]
    %v3301 = vld [vmem:[#allocation6 + $0xd8] sm:$0xf]
    %v3302 = vld [vmem:[#allocation6 + $0xdc] sm:$0xf]
    %v3303 = vld [vmem:[#allocation6 + $0xe0] sm:$0xf]
    %v3304 = vld [vmem:[#allocation6 + $0xe4] sm:$0xf]
    %v3305 = vld [vmem:[#allocation6 + $0xe8] sm:$0xf]
    %v3306 = vld [vmem:[#allocation6 + $0xec] sm:$0xf]
    %v3307 = vld [vmem:[#allocation6 + $0xf0] sm:$0xf]
    %v3308 = vld [vmem:[#allocation6 + $0xf4] sm:$0xf]
    %v3309 = vld [vmem:[#allocation6 + $0xf8] sm:$0xf]
    %v3310 = vld [vmem:[#allocation6 + $0xfc] sm:$0xf]
    %v3343 = vunpack.c.l.b16 %v3279
    %v3344 = vunpack.c.l.b16 %v3280
    %v3345 = vunpack.c.l.b16 %v3281
    %v3346 = vunpack.c.l.b16 %v3282
    %v3347 = vunpack.c.l.b16 %v3283
    %v3348 = vunpack.c.l.b16 %v3284
    %v3349 = vunpack.c.l.b16 %v3285
    %v3350 = vunpack.c.l.b16 %v3286
    %v3351 = vunpack.c.l.b16 %v3287
    %v3352 = vunpack.c.l.b16 %v3288
    %v3353 = vunpack.c.l.b16 %v3289
    %v3354 = vunpack.c.l.b16 %v3290
    %v3355 = vunpack.c.l.b16 %v3291
    %v3356 = vunpack.c.l.b16 %v3292
    %v3357 = vunpack.c.l.b16 %v3293
    %v3358 = vunpack.c.l.b16 %v3294
    %v3359 = vunpack.c.l.b16 %v3295
    %v3360 = vunpack.c.l.b16 %v3296
    %v3361 = vunpack.c.l.b16 %v3297
    %v3362 = vunpack.c.l.b16 %v3298
    %v3363 = vunpack.c.l.b16 %v3299
    %v3364 = vunpack.c.l.b16 %v3300
    %v3365 = vunpack.c.l.b16 %v3301
    %v3366 = vunpack.c.l.b16 %v3302
    %v3367 = vunpack.c.l.b16 %v3303
    %v3368 = vunpack.c.l.b16 %v3304
    %v3369 = vunpack.c.l.b16 %v3305
    %v3370 = vunpack.c.l.b16 %v3306
    %v3371 = vunpack.c.l.b16 %v3307
    %v3372 = vunpack.c.l.b16 %v3308
    %v3373 = vunpack.c.l.b16 %v3309
    %v3374 = vunpack.c.l.b16 %v3310
    %v3375 = vpack.c.b16 %v3344, %v3343
    %v3376 = vpack.c.b16 %v3346, %v3345
    %v3377 = vpack.c.b16 %v3348, %v3347
    %v3378 = vpack.c.b16 %v3350, %v3349
    %v3379 = vpack.c.b16 %v3352, %v3351
    %v3380 = vpack.c.b16 %v3354, %v3353
    %v3381 = vpack.c.b16 %v3356, %v3355
    %v3382 = vpack.c.b16 %v3358, %v3357
    %v3383 = vpack.c.b16 %v3360, %v3359
    %v3384 = vpack.c.b16 %v3362, %v3361
    %v3385 = vpack.c.b16 %v3364, %v3363
    %v3386 = vpack.c.b16 %v3366, %v3365
    %v3387 = vpack.c.b16 %v3368, %v3367
    %v3388 = vpack.c.b16 %v3370, %v3369
    %v3389 = vpack.c.b16 %v3372, %v3371
    %v3390 = vpack.c.b16 %v3374, %v3373
    %3407 = vmatprep.subr.bf16.mxu0 0
    %3408 = vmatpush1.bf16.msra.mxu0 %v3375
    %3409 = vmatprep.subr.bf16.mxu0 0
    %3410 = vmatpush1.bf16.msra.mxu0 %v3376
    %3411 = vmatprep.subr.bf16.mxu0 0
    %3412 = vmatpush1.bf16.msra.mxu0 %v3377
    %3413 = vmatprep.subr.bf16.mxu0 0
    %3414 = vmatpush1.bf16.msra.mxu0 %v3378
    %3415 = vmatprep.subr.bf16.mxu0 0
    %3416 = vmatpush1.bf16.msra.mxu0 %v3379
    %3417 = vmatprep.subr.bf16.mxu0 0
    %3418 = vmatpush1.bf16.msra.mxu0 %v3380
    %3419 = vmatprep.subr.bf16.mxu0 0
    %3420 = vmatpush1.bf16.msra.mxu0 %v3381
    %3421 = vmatprep.subr.bf16.mxu0 0
    %3422 = vmatpush1.bf16.msra.mxu0 %v3382
    %3423 = vmatprep.subr.bf16.mxu0 0
    %3424 = vmatpush1.bf16.msra.mxu0 %v3383
    %3425 = vmatprep.subr.bf16.mxu0 0
    %3426 = vmatpush1.bf16.msra.mxu0 %v3384
    %3427 = vmatprep.subr.bf16.mxu0 0
    %3428 = vmatpush1.bf16.msra.mxu0 %v3385
    %3429 = vmatprep.subr.bf16.mxu0 0
    %3430 = vmatpush1.bf16.msra.mxu0 %v3386
    %3431 = vmatprep.subr.bf16.mxu0 0
    %3432 = vmatpush1.bf16.msra.mxu0 %v3387
    %3433 = vmatprep.subr.bf16.mxu0 0
    %3434 = vmatpush1.bf16.msra.mxu0 %v3388
    %3435 = vmatprep.subr.bf16.mxu0 0
    %3436 = vmatpush1.bf16.msra.mxu0 %v3389
    %3437 = vmatprep.subr.bf16.mxu0 0
    %3438 = vmatpush1.bf16.msra.mxu0 %v3390
    %3439 = vmatprep.mubr.bf16.mxu0 %v3278
    %3440 = vmatmul.mubr.bf16.gmra.mrb[0].mxu0 %v3277
    %v3441 = vpop.f32.mrb[0].mxu0
    %v3442 = vadd.f32 0.0, %v3441
    %v3443 = vpop.f32.mrb[0].mxu0
    %v3444 = vpop.f32.mrb[0].mxu0
    %v3445 = vpop.f32.mrb[0].mxu0
    %3446 = vdwg.mxu0
    %v3479 = vunpack.c.l.b16 %v3239
    %v3480 = vunpack.c.l.b16 %v3240
    %v3481 = vunpack.c.l.b16 %v3241
    %v3482 = vunpack.c.l.b16 %v3242
    %v3483 = vunpack.c.l.b16 %v3243
    %v3484 = vunpack.c.l.b16 %v3244
    %v3485 = vunpack.c.l.b16 %v3245
    %v3486 = vunpack.c.l.b16 %v3246
    %v3487 = vunpack.c.l.b16 %v3247
    %v3488 = vunpack.c.l.b16 %v3248
    %v3489 = vunpack.c.l.b16 %v3249
    %v3490 = vunpack.c.l.b16 %v3250
    %v3491 = vunpack.c.l.b16 %v3251
    %v3492 = vunpack.c.l.b16 %v3252
    %v3493 = vunpack.c.l.b16 %v3253
    %v3494 = vunpack.c.l.b16 %v3254
    %v3495 = vunpack.c.l.b16 %v3255
    %v3496 = vunpack.c.l.b16 %v3256
    %v3497 = vunpack.c.l.b16 %v3257
    %v3498 = vunpack.c.l.b16 %v3258
    %v3499 = vunpack.c.l.b16 %v3259
    %v3500 = vunpack.c.l.b16 %v3260
    %v3501 = vunpack.c.l.b16 %v3261
    %v3502 = vunpack.c.l.b16 %v3262
    %v3503 = vunpack.c.l.b16 %v3263
    %v3504 = vunpack.c.l.b16 %v3264
    %v3505 = vunpack.c.l.b16 %v3265
    %v3506 = vunpack.c.l.b16 %v3266
    %v3507 = vunpack.c.l.b16 %v3267
    %v3508 = vunpack.c.l.b16 %v3268
    %v3509 = vunpack.c.l.b16 %v3269
    %v3510 = vunpack.c.l.b16 %v3270
    %v3511 = vpack.c.b16 %v3480, %v3479
    %v3512 = vpack.c.b16 %v3482, %v3481
    %v3513 = vpack.c.b16 %v3484, %v3483
    %v3514 = vpack.c.b16 %v3486, %v3485
    %v3515 = vpack.c.b16 %v3488, %v3487
    %v3516 = vpack.c.b16 %v3490, %v3489
    %v3517 = vpack.c.b16 %v3492, %v3491
    %v3518 = vpack.c.b16 %v3494, %v3493
    %v3519 = vpack.c.b16 %v3496, %v3495
    %v3520 = vpack.c.b16 %v3498, %v3497
    %v3521 = vpack.c.b16 %v3500, %v3499
    %v3522 = vpack.c.b16 %v3502, %v3501
    %v3523 = vpack.c.b16 %v3504, %v3503
    %v3524 = vpack.c.b16 %v3506, %v3505
    %v3525 = vpack.c.b16 %v3508, %v3507
    %v3526 = vpack.c.b16 %v3510, %v3509
    %3543 = vmatprep.subr.bf16.mxu0 0
    %3544 = vmatpush1.bf16.msra.mxu0 %v3511
    %3545 = vmatprep.subr.bf16.mxu0 0
    %3546 = vmatpush1.bf16.msra.mxu0 %v3512
    %3547 = vmatprep.subr.bf16.mxu0 0
    %3548 = vmatpush1.bf16.msra.mxu0 %v3513
    %3549 = vmatprep.subr.bf16.mxu0 0
    %3550 = vmatpush1.bf16.msra.mxu0 %v3514
    %3551 = vmatprep.subr.bf16.mxu0 0
    %3552 = vmatpush1.bf16.msra.mxu0 %v3515
    %3553 = vmatprep.subr.bf16.mxu0 0
    %3554 = vmatpush1.bf16.msra.mxu0 %v3516
    %3555 = vmatprep.subr.bf16.mxu0 0
    %3556 = vmatpush1.bf16.msra.mxu0 %v3517
    %3557 = vmatprep.subr.bf16.mxu0 0
    %3558 = vmatpush1.bf16.msra.mxu0 %v3518
    %3559 = vmatprep.subr.bf16.mxu0 0
    %3560 = vmatpush1.bf16.msra.mxu0 %v3519
    %3561 = vmatprep.subr.bf16.mxu0 0
    %3562 = vmatpush1.bf16.msra.mxu0 %v3520
    %3563 = vmatprep.subr.bf16.mxu0 0
    %3564 = vmatpush1.bf16.msra.mxu0 %v3521
    %3565 = vmatprep.subr.bf16.mxu0 0
    %3566 = vmatpush1.bf16.msra.mxu0 %v3522
    %3567 = vmatprep.subr.bf16.mxu0 0
    %3568 = vmatpush1.bf16.msra.mxu0 %v3523
    %3569 = vmatprep.subr.bf16.mxu0 0
    %3570 = vmatpush1.bf16.msra.mxu0 %v3524
    %3571 = vmatprep.subr.bf16.mxu0 0
    %3572 = vmatpush1.bf16.msra.mxu0 %v3525
    %3573 = vmatprep.subr.bf16.mxu0 0
    %3574 = vmatpush1.bf16.msra.mxu0 %v3526
    %3575 = vmatprep.mubr.bf16.mxu0 %v3238
    %3576 = vmatmul.mubr.bf16.gmra.mrb[0].mxu0 %v3237
    %v3577 = vpop.f32.mrb[0].mxu0
    %v3578 = vadd.f32 %v3442, %v3577
    %v3579 = vpop.f32.mrb[0].mxu0
    %v3580 = vpop.f32.mrb[0].mxu0
    %v3581 = vpop.f32.mrb[0].mxu0
    %3582 = vdwg.mxu0
    %v3583 = vmul.f32 %v3234, 1.6666666
    %v3584 = vmul.f32 %v3235, 1.6666666
    %v3585 = vmul.f32 %v3583, %v3275
    %v3586 = vmul.f32 %v3584, %v3276
    %v3587 = vmul.f32 %v3234, 0.6666667
    %v3588 = vmul.f32 %v3235, 0.6666667
    %v3589 = vsub.f32 %v3585, %v3587
    %v3590 = vsub.f32 %v3586, %v3588
    %v3591 = vpack.c.bf16 %v3589, %v3589
    %v3592 = vpack.c.bf16 %v3590, %v3590
    %v3593 = vld [vmem:[#allocation6 + $0x100] sm:$0xf]
    %v3594 = vld [vmem:[#allocation6 + $0x104] sm:$0xf]
    %v3595 = vld [vmem:[#allocation6 + $0x108] sm:$0xf]
    %v3596 = vld [vmem:[#allocation6 + $0x10c] sm:$0xf]
    %v3597 = vld [vmem:[#allocation6 + $0x110] sm:$0xf]
    %v3598 = vld [vmem:[#allocation6 + $0x114] sm:$0xf]
    %v3599 = vld [vmem:[#allocation6 + $0x118] sm:$0xf]
    %v3600 = vld [vmem:[#allocation6 + $0x11c] sm:$0xf]
    %v3601 = vld [vmem:[#allocation6 + $0x120] sm:$0xf]
    %v3602 = vld [vmem:[#allocation6 + $0x124] sm:$0xf]
    %v3603 = vld [vmem:[#allocation6 + $0x128] sm:$0xf]
    %v3604 = vld [vmem:[#allocation6 + $0x12c] sm:$0xf]
    %v3605 = vld [vmem:[#allocation6 + $0x130] sm:$0xf]
    %v3606 = vld [vmem:[#allocation6 + $0x134] sm:$0xf]
    %v3607 = vld [vmem:[#allocation6 + $0x138] sm:$0xf]
    %v3608 = vld [vmem:[#allocation6 + $0x13c] sm:$0xf]
    %v3609 = vld [vmem:[#allocation6 + $0x140] sm:$0xf]
    %v3610 = vld [vmem:[#allocation6 + $0x144] sm:$0xf]
    %v3611 = vld [vmem:[#allocation6 + $0x148] sm:$0xf]
    %v3612 = vld [vmem:[#allocation6 + $0x14c] sm:$0xf]
    %v3613 = vld [vmem:[#allocation6 + $0x150] sm:$0xf]
    %v3614 = vld [vmem:[#allocation6 + $0x154] sm:$0xf]
    %v3615 = vld [vmem:[#allocation6 + $0x158] sm:$0xf]
    %v3616 = vld [vmem:[#allocation6 + $0x15c] sm:$0xf]
    %v3617 = vld [vmem:[#allocation6 + $0x160] sm:$0xf]
    %v3618 = vld [vmem:[#allocation6 + $0x164] sm:$0xf]
    %v3619 = vld [vmem:[#allocation6 + $0x168] sm:$0xf]
    %v3620 = vld [vmem:[#allocation6 + $0x16c] sm:$0xf]
    %v3621 = vld [vmem:[#allocation6 + $0x170] sm:$0xf]
    %v3622 = vld [vmem:[#allocation6 + $0x174] sm:$0xf]
    %v3623 = vld [vmem:[#allocation6 + $0x178] sm:$0xf]
    %v3624 = vld [vmem:[#allocation6 + $0x17c] sm:$0xf]
    %v3657 = vunpack.c.l.b16 %v3593
    %v3658 = vunpack.c.l.b16 %v3594
    %v3659 = vunpack.c.l.b16 %v3595
    %v3660 = vunpack.c.l.b16 %v3596
    %v3661 = vunpack.c.l.b16 %v3597
    %v3662 = vunpack.c.l.b16 %v3598
    %v3663 = vunpack.c.l.b16 %v3599
    %v3664 = vunpack.c.l.b16 %v3600
    %v3665 = vunpack.c.l.b16 %v3601
    %v3666 = vunpack.c.l.b16 %v3602
    %v3667 = vunpack.c.l.b16 %v3603
    %v3668 = vunpack.c.l.b16 %v3604
    %v3669 = vunpack.c.l.b16 %v3605
    %v3670 = vunpack.c.l.b16 %v3606
    %v3671 = vunpack.c.l.b16 %v3607
    %v3672 = vunpack.c.l.b16 %v3608
    %v3673 = vunpack.c.l.b16 %v3609
    %v3674 = vunpack.c.l.b16 %v3610
    %v3675 = vunpack.c.l.b16 %v3611
    %v3676 = vunpack.c.l.b16 %v3612
    %v3677 = vunpack.c.l.b16 %v3613
    %v3678 = vunpack.c.l.b16 %v3614
    %v3679 = vunpack.c.l.b16 %v3615
    %v3680 = vunpack.c.l.b16 %v3616
    %v3681 = vunpack.c.l.b16 %v3617
    %v3682 = vunpack.c.l.b16 %v3618
    %v3683 = vunpack.c.l.b16 %v3619
    %v3684 = vunpack.c.l.b16 %v3620
    %v3685 = vunpack.c.l.b16 %v3621
    %v3686 = vunpack.c.l.b16 %v3622
    %v3687 = vunpack.c.l.b16 %v3623
    %v3688 = vunpack.c.l.b16 %v3624
    %v3689 = vpack.c.b16 %v3658, %v3657
    %v3690 = vpack.c.b16 %v3660, %v3659
    %v3691 = vpack.c.b16 %v3662, %v3661
    %v3692 = vpack.c.b16 %v3664, %v3663
    %v3693 = vpack.c.b16 %v3666, %v3665
    %v3694 = vpack.c.b16 %v3668, %v3667
    %v3695 = vpack.c.b16 %v3670, %v3669
    %v3696 = vpack.c.b16 %v3672, %v3671
    %v3697 = vpack.c.b16 %v3674, %v3673
    %v3698 = vpack.c.b16 %v3676, %v3675
    %v3699 = vpack.c.b16 %v3678, %v3677
    %v3700 = vpack.c.b16 %v3680, %v3679
    %v3701 = vpack.c.b16 %v3682, %v3681
    %v3702 = vpack.c.b16 %v3684, %v3683
    %v3703 = vpack.c.b16 %v3686, %v3685
    %v3704 = vpack.c.b16 %v3688, %v3687
    %3721 = vmatprep.subr.bf16.mxu0 0
    %3722 = vmatpush1.bf16.msra.mxu0 %v3689
    %3723 = vmatprep.subr.bf16.mxu0 0
    %3724 = vmatpush1.bf16.msra.mxu0 %v3690
    %3725 = vmatprep.subr.bf16.mxu0 0
    %3726 = vmatpush1.bf16.msra.mxu0 %v3691
    %3727 = vmatprep.subr.bf16.mxu0 0
    %3728 = vmatpush1.bf16.msra.mxu0 %v3692
    %3729 = vmatprep.subr.bf16.mxu0 0
    %3730 = vmatpush1.bf16.msra.mxu0 %v3693
    %3731 = vmatprep.subr.bf16.mxu0 0
    %3732 = vmatpush1.bf16.msra.mxu0 %v3694
    %3733 = vmatprep.subr.bf16.mxu0 0
    %3734 = vmatpush1.bf16.msra.mxu0 %v3695
    %3735 = vmatprep.subr.bf16.mxu0 0
    %3736 = vmatpush1.bf16.msra.mxu0 %v3696
    %3737 = vmatprep.subr.bf16.mxu0 0
    %3738 = vmatpush1.bf16.msra.mxu0 %v3697
    %3739 = vmatprep.subr.bf16.mxu0 0
    %3740 = vmatpush1.bf16.msra.mxu0 %v3698
    %3741 = vmatprep.subr.bf16.mxu0 0
    %3742 = vmatpush1.bf16.msra.mxu0 %v3699
    %3743 = vmatprep.subr.bf16.mxu0 0
    %3744 = vmatpush1.bf16.msra.mxu0 %v3700
    %3745 = vmatprep.subr.bf16.mxu0 0
    %3746 = vmatpush1.bf16.msra.mxu0 %v3701
    %3747 = vmatprep.subr.bf16.mxu0 0
    %3748 = vmatpush1.bf16.msra.mxu0 %v3702
    %3749 = vmatprep.subr.bf16.mxu0 0
    %3750 = vmatpush1.bf16.msra.mxu0 %v3703
    %3751 = vmatprep.subr.bf16.mxu0 0
    %3752 = vmatpush1.bf16.msra.mxu0 %v3704
    %3753 = vmatprep.mubr.bf16.mxu0 %v3592
    %3754 = vmatmul.mubr.bf16.gmra.mrb[0].mxu0 %v3591
    %v3755 = vpop.f32.mrb[0].mxu0
    %v3756 = vadd.f32 0.0, %v3755
    %v3757 = vpop.f32.mrb[0].mxu0
    %v3758 = vpop.f32.mrb[0].mxu0
    %v3759 = vpop.f32.mrb[0].mxu0
    %3760 = vdwg.mxu0
    %v3761 = vadd.f32 %v3578, %v3756
    %v3762 = vmul.f32 %v3234, 1.75
    %v3763 = vmul.f32 %v3235, 1.75
    %v3764 = vmul.f32 %v3762, %v3589
    %v3765 = vmul.f32 %v3763, %v3590
    %v3766 = vmul.f32 %v3275, 0.75
    %v3767 = vmul.f32 %v3276, 0.75
    %v3768 = vsub.f32 %v3764, %v3766
    %v3769 = vsub.f32 %v3765, %v3767
    %v3770 = vpack.c.bf16 %v3768, %v3768
    %v3771 = vpack.c.bf16 %v3769, %v3769
    %v3772 = vld [vmem:[#allocation6 + $0x180] sm:$0xf]
    %v3773 = vld [vmem:[#allocation6 + $0x184] sm:$0xf]
    %v3774 = vld [vmem:[#allocation6 + $0x188] sm:$0xf]
    %v3775 = vld [vmem:[#allocation6 + $0x18c] sm:$0xf]
    %v3776 = vld [vmem:[#allocation6 + $0x190] sm:$0xf]
    %v3777 = vld [vmem:[#allocation6 + $0x194] sm:$0xf]
    %v3778 = vld [vmem:[#allocation6 + $0x198] sm:$0xf]
    %v3779 = vld [vmem:[#allocation6 + $0x19c] sm:$0xf]
    %v3780 = vld [vmem:[#allocation6 + $0x1a0] sm:$0xf]
    %v3781 = vld [vmem:[#allocation6 + $0x1a4] sm:$0xf]
    %v3782 = vld [vmem:[#allocation6 + $0x1a8] sm:$0xf]
    %v3783 = vld [vmem:[#allocation6 + $0x1ac] sm:$0xf]
    %v3784 = vld [vmem:[#allocation6 + $0x1b0] sm:$0xf]
    %v3785 = vld [vmem:[#allocation6 + $0x1b4] sm:$0xf]
    %v3786 = vld [vmem:[#allocation6 + $0x1b8] sm:$0xf]
    %v3787 = vld [vmem:[#allocation6 + $0x1bc] sm:$0xf]
    %v3788 = vld [vmem:[#allocation6 + $0x1c0] sm:$0xf]
    %v3789 = vld [vmem:[#allocation6 + $0x1c4] sm:$0xf]
    %v3790 = vld [vmem:[#allocation6 + $0x1c8] sm:$0xf]
    %v3791 = vld [vmem:[#allocation6 + $0x1cc] sm:$0xf]
    %v3792 = vld [vmem:[#allocation6 + $0x1d0] sm:$0xf]
    %v3793 = vld [vmem:[#allocation6 + $0x1d4] sm:$0xf]
    %v3794 = vld [vmem:[#allocation6 + $0x1d8] sm:$0xf]
    %v3795 = vld [vmem:[#allocation6 + $0x1dc] sm:$0xf]
    %v3796 = vld [vmem:[#allocation6 + $0x1e0] sm:$0xf]
    %v3797 = vld [vmem:[#allocation6 + $0x1e4] sm:$0xf]
    %v3798 = vld [vmem:[#allocation6 + $0x1e8] sm:$0xf]
    %v3799 = vld [vmem:[#allocation6 + $0x1ec] sm:$0xf]
    %v3800 = vld [vmem:[#allocation6 + $0x1f0] sm:$0xf]
    %v3801 = vld [vmem:[#allocation6 + $0x1f4] sm:$0xf]
    %v3802 = vld [vmem:[#allocation6 + $0x1f8] sm:$0xf]
    %v3803 = vld [vmem:[#allocation6 + $0x1fc] sm:$0xf]
    %v3836 = vunpack.c.l.b16 %v3772
    %v3837 = vunpack.c.l.b16 %v3773
    %v3838 = vunpack.c.l.b16 %v3774
    %v3839 = vunpack.c.l.b16 %v3775
    %v3840 = vunpack.c.l.b16 %v3776
    %v3841 = vunpack.c.l.b16 %v3777
    %v3842 = vunpack.c.l.b16 %v3778
    %v3843 = vunpack.c.l.b16 %v3779
    %v3844 = vunpack.c.l.b16 %v3780
    %v3845 = vunpack.c.l.b16 %v3781
    %v3846 = vunpack.c.l.b16 %v3782
    %v3847 = vunpack.c.l.b16 %v3783
    %v3848 = vunpack.c.l.b16 %v3784
    %v3849 = vunpack.c.l.b16 %v3785
    %v3850 = vunpack.c.l.b16 %v3786
    %v3851 = vunpack.c.l.b16 %v3787
    %v3852 = vunpack.c.l.b16 %v3788
    %v3853 = vunpack.c.l.b16 %v3789
    %v3854 = vunpack.c.l.b16 %v3790
    %v3855 = vunpack.c.l.b16 %v3791
    %v3856 = vunpack.c.l.b16 %v3792
    %v3857 = vunpack.c.l.b16 %v3793
    %v3858 = vunpack.c.l.b16 %v3794
    %v3859 = vunpack.c.l.b16 %v3795
    %v3860 = vunpack.c.l.b16 %v3796
    %v3861 = vunpack.c.l.b16 %v3797
    %v3862 = vunpack.c.l.b16 %v3798
    %v3863 = vunpack.c.l.b16 %v3799
    %v3864 = vunpack.c.l.b16 %v3800
    %v3865 = vunpack.c.l.b16 %v3801
    %v3866 = vunpack.c.l.b16 %v3802
    %v3867 = vunpack.c.l.b16 %v3803
    %v3868 = vpack.c.b16 %v3837, %v3836
    %v3869 = vpack.c.b16 %v3839, %v3838
    %v3870 = vpack.c.b16 %v3841, %v3840
    %v3871 = vpack.c.b16 %v3843, %v3842
    %v3872 = vpack.c.b16 %v3845, %v3844
    %v3873 = vpack.c.b16 %v3847, %v3846
    %v3874 = vpack.c.b16 %v3849, %v3848
    %v3875 = vpack.c.b16 %v3851, %v3850
    %v3876 = vpack.c.b16 %v3853, %v3852
    %v3877 = vpack.c.b16 %v3855, %v3854
    %v3878 = vpack.c.b16 %v3857, %v3856
    %v3879 = vpack.c.b16 %v3859, %v3858
    %v3880 = vpack.c.b16 %v3861, %v3860
    %v3881 = vpack.c.b16 %v3863, %v3862
    %v3882 = vpack.c.b16 %v3865, %v3864
    %v3883 = vpack.c.b16 %v3867, %v3866
    %3900 = vmatprep.subr.bf16.mxu0 0
    %3901 = vmatpush1.bf16.msra.mxu0 %v3868
    %3902 = vmatprep.subr.bf16.mxu0 0
    %3903 = vmatpush1.bf16.msra.mxu0 %v3869
    %3904 = vmatprep.subr.bf16.mxu0 0
    %3905 = vmatpush1.bf16.msra.mxu0 %v3870
    %3906 = vmatprep.subr.bf16.mxu0 0
    %3907 = vmatpush1.bf16.msra.mxu0 %v3871
    %3908 = vmatprep.subr.bf16.mxu0 0
    %3909 = vmatpush1.bf16.msra.mxu0 %v3872
    %3910 = vmatprep.subr.bf16.mxu0 0
    %3911 = vmatpush1.bf16.msra.mxu0 %v3873
    %3912 = vmatprep.subr.bf16.mxu0 0
    %3913 = vmatpush1.bf16.msra.mxu0 %v3874
    %3914 = vmatprep.subr.bf16.mxu0 0
    %3915 = vmatpush1.bf16.msra.mxu0 %v3875
    %3916 = vmatprep.subr.bf16.mxu0 0
    %3917 = vmatpush1.bf16.msra.mxu0 %v3876
    %3918 = vmatprep.subr.bf16.mxu0 0
    %3919 = vmatpush1.bf16.msra.mxu0 %v3877
    %3920 = vmatprep.subr.bf16.mxu0 0
    %3921 = vmatpush1.bf16.msra.mxu0 %v3878
    %3922 = vmatprep.subr.bf16.mxu0 0
    %3923 = vmatpush1.bf16.msra.mxu0 %v3879
    %3924 = vmatprep.subr.bf16.mxu0 0
    %3925 = vmatpush1.bf16.msra.mxu0 %v3880
    %3926 = vmatprep.subr.bf16.mxu0 0
    %3927 = vmatpush1.bf16.msra.mxu0 %v3881
    %3928 = vmatprep.subr.bf16.mxu0 0
    %3929 = vmatpush1.bf16.msra.mxu0 %v3882
    %3930 = vmatprep.subr.bf16.mxu0 0
    %3931 = vmatpush1.bf16.msra.mxu0 %v3883
    %3932 = vmatprep.mubr.bf16.mxu0 %v3771
    %3933 = vmatmul.mubr.bf16.gmra.mrb[0].mxu0 %v3770
    %v3934 = vpop.f32.mrb[0].mxu0
    %v3935 = vadd.f32 0.0, %v3934
    %v3936 = vpop.f32.mrb[0].mxu0
    %v3937 = vpop.f32.mrb[0].mxu0
    %v3938 = vpop.f32.mrb[0].mxu0
    %3939 = vdwg.mxu0
    %v3940 = vadd.f32 %v3761, %v3935
    %v3942 = vlaneseq
    %v3943 = vshrl.u32 %v3942, 7
    %v3944 = vsub.s32 0, %v3943
    %v3945 = vrot.slane %v3236, %v3944
    %v3947 = vadd.f32 %v3940, %v3945
    %3948 = vst [vmem:[%s5] sm:$0xff] %v3947
    // Predicated region
    $region38: #{_net_forward_impl.1} parent=1 // pred_check
      _
    $region39: #{_net_forward_impl.1} parent=1 // pred_check_branch
      %3950 = sbr.rel (0) target = $region41
    $region40: #{_net_forward_impl.1} parent=1 // pred_region
      _
    $region41: #{_net_forward_impl.1} parent=1 // pred_fallthru
      _
    // Predicated region
    $region42: #{_net_forward_impl.1} parent=1 // pred_check
      _
    $region43: #{_net_forward_impl.1} parent=1 // pred_check_branch
      %3952 = sbr.rel (0) target = $region45
    $region44: #{_net_forward_impl.1} parent=1 // pred_region
      _
    $region45: #{_net_forward_impl.1} parent=1 // pred_fallthru
      _
    %3953 = vsyncpa [#allocation3], 1
    %3954 = vsyncpa [#allocation5], 1
    %3955 = vsyncpa [#allocation8], 1

</llo_original>
